<compile_context>
chip_gen: v6e
topology: v6e:2x2x1
jax: 0.10.0
libtpu: 0.0.40
codegen_flags: <defaults>
</compile_context>

<pallas_src>
import functools

import jax
import jax.numpy as jnp
from jax.experimental import pallas as pl
from jax.experimental.pallas import tpu as pltpu


# ----------------------------- Pallas kernel --------------------------------

def fused_spline_kernel(x_ref, s_ref, wf_ref, root_ref, b_ref, gamma_ref,
                        beta_ref, o_ref, xw_ref, *, num_kernels, num_nodes,
                        num_channels, leaky_flags):
    """All SplineProcessor blocks fused.  Per layer l:

         xw   = x @ W_flat_l                    [N, K*C]   (one wide MXU matmul)
         agg  = S2 @ regroup(xw)                [N, C]     (one deep MXU matmul,
                                                            contracting K*N)
         conv = agg + x @ root_l + bias_l
         h    = LeakyReLU(conv)                 (layers 0,1 only)
         h    = h + x                           (residual)
         x    = BatchNorm1d(h)                  (batch stats over nodes, eps=1e-5)

    S2 [N, K*N] is the layer-invariant structural operator (scatter(+mean) x
    spline coefficients x gather), k-major along its contraction columns so the
    regrouped xw slab layout is a simple sequence of contiguous row blocks.
    """
    k, n, c = num_kernels, num_nodes, num_channels
    x = x_ref[...]                                    # [N, C]  f32
    s2 = s_ref[...]                                   # [N, K*N] bf16

    for layer, leaky in enumerate(leaky_flags):       # static unroll (3 layers)
        x_b = x.astype(jnp.bfloat16)                  # MXU inputs in bf16

        # (1) Weight application: ONE matmul, contracting C, 864-wide output.
        xw = jnp.dot(x_b, wf_ref[layer],
                     preferred_element_type=jnp.float32)        # [N, K*C] f32

        # (2) Regroup [N, K*C] -> [K*N, C] (k-major rows) via static slice
        #     stores into VMEM scratch.  Explicit slices always lower; a
        #     lane<->sublane jnp.reshape here is not reliably supported.
        for kk in range(k):
            xw_ref[kk * n:(kk + 1) * n, :] = \
                xw[:, kk * c:(kk + 1) * c].astype(jnp.bfloat16)

        # (3) Spatial aggregation: ONE deep matmul, contracting K*N (=432 here).
        agg = jnp.dot(s2, xw_ref[...],
                      preferred_element_type=jnp.float32)       # [N, C] f32

        conv = agg + jnp.dot(x_b, root_ref[layer],
                             preferred_element_type=jnp.float32) + b_ref[layer]

        if leaky:
            h = jnp.where(conv > 0, conv, 0.01 * conv)          # LeakyReLU(0.01)
        else:
            h = conv
        h = h + x                                               # residual

        # BatchNorm1d, training mode (biased batch stats over node axis), f32.
        mean = jnp.mean(h, axis=0, keepdims=True)
        var = jnp.mean(jnp.square(h - mean), axis=0, keepdims=True)
        x = gamma_ref[layer] * (h - mean) * jax.lax.rsqrt(var + 1e-5) \
            + beta_ref[layer]

    o_ref[...] = x


# ------------------------------ JAX glue -------------------------------------

def spline_coefficients(edge_attr, kernel_size, degree):
    """Dense per-edge kernel coefficients coeff[E, kernel_size**3] for an open
    B-spline basis (degree 1)."""
    # TODO(synk): only degree=1 (linear) open B-spline basis implemented;
    # quadratic/cubic bases of torch_spline_conv are not reproduced here.
    assert degree == 1, "only spline degree 1 implemented"
    e_cnt, dim = edge_attr.shape
    assert dim == 3
    m = kernel_size
    v = edge_attr * (m - 1)                                        # [E, 3]
    lo = jnp.clip(jnp.floor(v), 0, m - 2).astype(jnp.int32)
    frac = v - lo.astype(jnp.float32)
    oh_lo = jax.nn.one_hot(lo, m, dtype=jnp.float32)               # [E, 3, m]
    oh_hi = jax.nn.one_hot(lo + 1, m, dtype=jnp.float32)
    bd = oh_lo * (1.0 - frac)[..., None] + oh_hi * frac[..., None]  # [E, 3, m]
    # Flat kernel index k = i0 + i1*m + i2*m^2 (dim 0 fastest).
    # TODO(synk): verify this ordering against torch_spline_conv's
    # cumulative-product weight-index convention when porting trained weights.
    coeff = jnp.einsum('ea,eb,ec->ecba', bd[:, 0], bd[:, 1], bd[:, 2])
    return coeff.reshape(e_cnt, m ** 3)


def build_graph_matrices(edge_index, num_nodes, aggr):
    src, dst = edge_index[0], edge_index[1]
    g = jax.nn.one_hot(src, num_nodes, dtype=jnp.float32)          # [E, N] gather
    a = jax.nn.one_hot(dst, num_nodes, dtype=jnp.float32).T        # [N, E] scatter-add
    if aggr == "mean":
        deg = jnp.maximum(a.sum(axis=1, keepdims=True), 1.0)
        a = a / deg
    elif aggr != "add":
        raise ValueError(f"unsupported aggr: {aggr}")
    return g, a


def spline_processor(patch_embs, edge_index, edge_attr, params, *,
                     kernel_size, spline_deg, aggr):
    n, c = patch_embs.shape
    coeff = spline_coefficients(edge_attr, kernel_size, spline_deg)  # [E, K]
    g, a = build_graph_matrices(edge_index, n, aggr)                 # [E,N],[N,E]
    k = coeff.shape[1]

    # Layer-invariant structural operator, k-major contraction columns:
    #   S2[i, k*N + m] = sum_e a[i, e] * coeff[e, k] * g[e, m]
    # Cast to bf16: S2 is the dominant operand and only ever feeds the MXU.
    s2 = jnp.einsum('ne,ek,em->nkm', a, coeff, g).reshape(n, k * n)
    s2 = s2.astype(jnp.bfloat16)

    # Per-layer conv weights folded into a single [C, K*C] matrix so the weight
    # application is ONE matmul:  W_flat[c, k*C + d] = W[k, c, d].
    w_flat_all = jnp.stack(
        [jnp.transpose(p[0], (1, 0, 2)).reshape(c, k * c) for p in params]
    ).astype(jnp.bfloat16)                           # [L, C, K*C]
    root_all = jnp.stack([p[1] for p in params]).astype(jnp.bfloat16)  # [L, C, C]
    b_all = jnp.stack([p[2] for p in params])        # [L, 1, C] f32 (VPU operand)
    gamma_all = jnp.stack([p[3] for p in params])    # [L, 1, C] f32
    beta_all = jnp.stack([p[4] for p in params])     # [L, 1, C] f32
    num_layers = w_flat_all.shape[0]
    leaky_flags = tuple([True] * (num_layers - 1) + [False])  # conv3: no LeakyReLU

    operands = (patch_embs, s2, w_flat_all, root_all, b_all, gamma_all, beta_all)
    op_bytes = sum(int(op.size) * op.dtype.itemsize for op in operands)
    out_bytes = n * c * 4
    scratch_bytes = k * n * c * 2                    # bf16 regroup scratch
    # Explicit VMEM budget (v7x has only 64 MiB physical; default scoped limit
    # is even lower).  2x for compiler double-buffering + headroom, capped.
    vmem_limit = int(min(2 * (op_bytes + out_bytes + scratch_bytes) + (8 << 20),
                         96 * 1024 * 1024))

    # One wide + one deep matmul per layer, plus the root transform.
    matmul_flops = num_layers * 2 * (n * c * (k * c)    # x @ W_flat
                                     + n * (k * n) * c  # S2 @ regroup(xw)
                                     + n * c * c)       # x @ root
    # S2 is VMEM-resident for the whole call (single block), so counted once.
    bytes_accessed = op_bytes + out_bytes

    kernel = functools.partial(fused_spline_kernel, num_kernels=k, num_nodes=n,
                               num_channels=c, leaky_flags=leaky_flags)
    return pl.pallas_call(
        kernel,
        out_shape=jax.ShapeDtypeStruct((n, c), jnp.float32),
        in_specs=[pl.BlockSpec(memory_space=pltpu.MemorySpace.VMEM)] * len(operands),
        out_specs=pl.BlockSpec(memory_space=pltpu.MemorySpace.VMEM),
        scratch_shapes=[pltpu.VMEM((k * n, c), jnp.bfloat16)],
        compiler_params=pltpu.CompilerParams(vmem_limit_bytes=vmem_limit),
        cost_estimate=pl.CostEstimate(
            flops=matmul_flops,
            transcendentals=num_layers * c,
            bytes_accessed=bytes_accessed),
    )(*operands)


# ------------------------------- driver --------------------------------------

if __name__ == "__main__":
    key = jax.random.PRNGKey(0)
    N, C, E, DIM = 16, 32, 48, 3
    kernel_size, spline_deg, aggr = 3, 1, "mean"
    K = kernel_size ** DIM

    keys = jax.random.split(key, 16)
    patch_embs = jax.random.normal(keys[0], (N, C), jnp.float32)
    src = jax.random.randint(keys[1], (E,), 0, N)
    dst = jax.random.randint(keys[2], (E,), 0, N)
    edge_index = jnp.stack([src, dst])                              # [2, E]
    edge_attr = jax.random.uniform(keys[3], (E, DIM), jnp.float32)  # pseudo-coords

    # Deterministic parameter init (shapes from SplineConv(32,32,dim=3,ks,deg)
    # and BatchNorm1d(32)); BN uses PyTorch defaults gamma=1, beta=0.
    params = []
    for i in range(3):
        w = jax.random.normal(keys[4 + 3 * i], (K, C, C), jnp.float32) \
            * (1.0 / (K * C)) ** 0.5
        root = jax.random.normal(keys[5 + 3 * i], (C, C), jnp.float32) \
            * (1.0 / C) ** 0.5
        bias = jnp.zeros((1, C), jnp.float32)
        gamma = jnp.ones((1, C), jnp.float32)
        beta = jnp.zeros((1, C), jnp.float32)
        params.append((w, root, bias, gamma, beta))

    out = spline_processor(patch_embs, edge_index, edge_attr, params,
                           kernel_size=kernel_size, spline_deg=spline_deg,
                           aggr=aggr)
    jax.block_until_ready(out)
    assert out.shape == (N, C) and jnp.all(jnp.isfinite(out))
    print("KERNEL_OK")
</pallas_src>

<mosaic_0001>
module attributes {stable_mosaic.version = 11 : i64} {
  func.func @fused_spline_kernel(%arg0: memref<16x32xf32, #tpu.memory_space<vmem>>, %arg1: memref<16x432xbf16, #tpu.memory_space<vmem>>, %arg2: memref<3x32x864xbf16, #tpu.memory_space<vmem>>, %arg3: memref<3x32x32xbf16, #tpu.memory_space<vmem>>, %arg4: memref<3x1x32xf32, #tpu.memory_space<vmem>>, %arg5: memref<3x1x32xf32, #tpu.memory_space<vmem>>, %arg6: memref<3x1x32xf32, #tpu.memory_space<vmem>>, %arg7: memref<16x32xf32, #tpu.memory_space<vmem>>, %arg8: memref<432x32xbf16, #tpu.memory_space<vmem>>) attributes {dimension_semantics = [], scalar_prefetch = 0 : i64, scratch_operands = 1 : i64, tpu.core_type = #tpu.core_type<tc>} {
    %c0 = arith.constant 0 : index
    %c0_0 = arith.constant 0 : index
    %0 = vector.load %arg0[%c0, %c0_0] : memref<16x32xf32, #tpu.memory_space<vmem>>, vector<16x32xf32>
    %c0_1 = arith.constant 0 : index
    %c0_2 = arith.constant 0 : index
    %1 = vector.load %arg1[%c0_1, %c0_2] : memref<16x432xbf16, #tpu.memory_space<vmem>>, vector<16x432xbf16>
    %2 = arith.truncf %0 : vector<16x32xf32> to vector<16x32xbf16>
    %c0_3 = arith.constant 0 : index
    %c0_4 = arith.constant 0 : index
    %c0_5 = arith.constant 0 : index
    %3 = vector.load %arg2[%c0_3, %c0_4, %c0_5] : memref<3x32x864xbf16, #tpu.memory_space<vmem>>, vector<1x32x864xbf16>
    %4 = vector.shape_cast %3 : vector<1x32x864xbf16> to vector<32x864xbf16>
    %cst = arith.constant dense<0.000000e+00> : vector<16x864xf32>
    %5 = tpu.matmul %2, %4, %cst {dimension_numbers = #tpu.dot_dimension_numbers<[1], [0], [0], [1], [0, 0, 1, 1], [], []>} : vector<16x32xbf16>, vector<32x864xbf16>, vector<16x864xf32> -> vector<16x864xf32>
    %6 = vector.extract_strided_slice %5 {offsets = [0, 0], sizes = [16, 32], strides = [1, 1]} : vector<16x864xf32> to vector<16x32xf32>
    %7 = arith.truncf %6 : vector<16x32xf32> to vector<16x32xbf16>
    %c0_6 = arith.constant 0 : index
    %c0_7 = arith.constant 0 : index
    %8 = vector.load %arg8[%c0_6, %c0_7] : memref<432x32xbf16, #tpu.memory_space<vmem>>, vector<16x32xbf16>
    tpu.vector_store %arg8[%c0_6, %c0_7], %7 {strides = array<i32>} : memref<432x32xbf16, #tpu.memory_space<vmem>>, vector<16x32xbf16>,
    %9 = vector.extract_strided_slice %5 {offsets = [0, 32], sizes = [16, 32], strides = [1, 1]} : vector<16x864xf32> to vector<16x32xf32>
    %10 = arith.truncf %9 : vector<16x32xf32> to vector<16x32xbf16>
    %c16 = arith.constant 16 : index
    %c0_8 = arith.constant 0 : index
    %11 = vector.load %arg8[%c16, %c0_8] : memref<432x32xbf16, #tpu.memory_space<vmem>>, vector<16x32xbf16>
    tpu.vector_store %arg8[%c16, %c0_8], %10 {strides = array<i32>} : memref<432x32xbf16, #tpu.memory_space<vmem>>, vector<16x32xbf16>,
    %12 = vector.extract_strided_slice %5 {offsets = [0, 64], sizes = [16, 32], strides = [1, 1]} : vector<16x864xf32> to vector<16x32xf32>
    %13 = arith.truncf %12 : vector<16x32xf32> to vector<16x32xbf16>
    %c32 = arith.constant 32 : index
    %c0_9 = arith.constant 0 : index
    %14 = vector.load %arg8[%c32, %c0_9] : memref<432x32xbf16, #tpu.memory_space<vmem>>, vector<16x32xbf16>
    tpu.vector_store %arg8[%c32, %c0_9], %13 {strides = array<i32>} : memref<432x32xbf16, #tpu.memory_space<vmem>>, vector<16x32xbf16>,
    %15 = vector.extract_strided_slice %5 {offsets = [0, 96], sizes = [16, 32], strides = [1, 1]} : vector<16x864xf32> to vector<16x32xf32>
    %16 = arith.truncf %15 : vector<16x32xf32> to vector<16x32xbf16>
    %c48 = arith.constant 48 : index
    %c0_10 = arith.constant 0 : index
    %17 = vector.load %arg8[%c48, %c0_10] : memref<432x32xbf16, #tpu.memory_space<vmem>>, vector<16x32xbf16>
    tpu.vector_store %arg8[%c48, %c0_10], %16 {strides = array<i32>} : memref<432x32xbf16, #tpu.memory_space<vmem>>, vector<16x32xbf16>,
    %18 = vector.extract_strided_slice %5 {offsets = [0, 128], sizes = [16, 32], strides = [1, 1]} : vector<16x864xf32> to vector<16x32xf32>
    %19 = arith.truncf %18 : vector<16x32xf32> to vector<16x32xbf16>
    %c64 = arith.constant 64 : index
    %c0_11 = arith.constant 0 : index
    %20 = vector.load %arg8[%c64, %c0_11] : memref<432x32xbf16, #tpu.memory_space<vmem>>, vector<16x32xbf16>
    tpu.vector_store %arg8[%c64, %c0_11], %19 {strides = array<i32>} : memref<432x32xbf16, #tpu.memory_space<vmem>>, vector<16x32xbf16>,
    %21 = vector.extract_strided_slice %5 {offsets = [0, 160], sizes = [16, 32], strides = [1, 1]} : vector<16x864xf32> to vector<16x32xf32>
    %22 = arith.truncf %21 : vector<16x32xf32> to vector<16x32xbf16>
    %c80 = arith.constant 80 : index
    %c0_12 = arith.constant 0 : index
    %23 = vector.load %arg8[%c80, %c0_12] : memref<432x32xbf16, #tpu.memory_space<vmem>>, vector<16x32xbf16>
    tpu.vector_store %arg8[%c80, %c0_12], %22 {strides = array<i32>} : memref<432x32xbf16, #tpu.memory_space<vmem>>, vector<16x32xbf16>,
    %24 = vector.extract_strided_slice %5 {offsets = [0, 192], sizes = [16, 32], strides = [1, 1]} : vector<16x864xf32> to vector<16x32xf32>
    %25 = arith.truncf %24 : vector<16x32xf32> to vector<16x32xbf16>
    %c96 = arith.constant 96 : index
    %c0_13 = arith.constant 0 : index
    %26 = vector.load %arg8[%c96, %c0_13] : memref<432x32xbf16, #tpu.memory_space<vmem>>, vector<16x32xbf16>
    tpu.vector_store %arg8[%c96, %c0_13], %25 {strides = array<i32>} : memref<432x32xbf16, #tpu.memory_space<vmem>>, vector<16x32xbf16>,
    %27 = vector.extract_strided_slice %5 {offsets = [0, 224], sizes = [16, 32], strides = [1, 1]} : vector<16x864xf32> to vector<16x32xf32>
    %28 = arith.truncf %27 : vector<16x32xf32> to vector<16x32xbf16>
    %c112 = arith.constant 112 : index
    %c0_14 = arith.constant 0 : index
    %29 = vector.load %arg8[%c112, %c0_14] : memref<432x32xbf16, #tpu.memory_space<vmem>>, vector<16x32xbf16>
    tpu.vector_store %arg8[%c112, %c0_14], %28 {strides = array<i32>} : memref<432x32xbf16, #tpu.memory_space<vmem>>, vector<16x32xbf16>,
    %30 = vector.extract_strided_slice %5 {offsets = [0, 256], sizes = [16, 32], strides = [1, 1]} : vector<16x864xf32> to vector<16x32xf32>
    %31 = arith.truncf %30 : vector<16x32xf32> to vector<16x32xbf16>
    %c128 = arith.constant 128 : index
    %c0_15 = arith.constant 0 : index
    %32 = vector.load %arg8[%c128, %c0_15] : memref<432x32xbf16, #tpu.memory_space<vmem>>, vector<16x32xbf16>
    tpu.vector_store %arg8[%c128, %c0_15], %31 {strides = array<i32>} : memref<432x32xbf16, #tpu.memory_space<vmem>>, vector<16x32xbf16>,
    %33 = vector.extract_strided_slice %5 {offsets = [0, 288], sizes = [16, 32], strides = [1, 1]} : vector<16x864xf32> to vector<16x32xf32>
    %34 = arith.truncf %33 : vector<16x32xf32> to vector<16x32xbf16>
    %c144 = arith.constant 144 : index
    %c0_16 = arith.constant 0 : index
    %35 = vector.load %arg8[%c144, %c0_16] : memref<432x32xbf16, #tpu.memory_space<vmem>>, vector<16x32xbf16>
    tpu.vector_store %arg8[%c144, %c0_16], %34 {strides = array<i32>} : memref<432x32xbf16, #tpu.memory_space<vmem>>, vector<16x32xbf16>,
    %36 = vector.extract_strided_slice %5 {offsets = [0, 320], sizes = [16, 32], strides = [1, 1]} : vector<16x864xf32> to vector<16x32xf32>
    %37 = arith.truncf %36 : vector<16x32xf32> to vector<16x32xbf16>
    %c160 = arith.constant 160 : index
    %c0_17 = arith.constant 0 : index
    %38 = vector.load %arg8[%c160, %c0_17] : memref<432x32xbf16, #tpu.memory_space<vmem>>, vector<16x32xbf16>
    tpu.vector_store %arg8[%c160, %c0_17], %37 {strides = array<i32>} : memref<432x32xbf16, #tpu.memory_space<vmem>>, vector<16x32xbf16>,
    %39 = vector.extract_strided_slice %5 {offsets = [0, 352], sizes = [16, 32], strides = [1, 1]} : vector<16x864xf32> to vector<16x32xf32>
    %40 = arith.truncf %39 : vector<16x32xf32> to vector<16x32xbf16>
    %c176 = arith.constant 176 : index
    %c0_18 = arith.constant 0 : index
    %41 = vector.load %arg8[%c176, %c0_18] : memref<432x32xbf16, #tpu.memory_space<vmem>>, vector<16x32xbf16>
    tpu.vector_store %arg8[%c176, %c0_18], %40 {strides = array<i32>} : memref<432x32xbf16, #tpu.memory_space<vmem>>, vector<16x32xbf16>,
    %42 = vector.extract_strided_slice %5 {offsets = [0, 384], sizes = [16, 32], strides = [1, 1]} : vector<16x864xf32> to vector<16x32xf32>
    %43 = arith.truncf %42 : vector<16x32xf32> to vector<16x32xbf16>
    %c192 = arith.constant 192 : index
    %c0_19 = arith.constant 0 : index
    %44 = vector.load %arg8[%c192, %c0_19] : memref<432x32xbf16, #tpu.memory_space<vmem>>, vector<16x32xbf16>
    tpu.vector_store %arg8[%c192, %c0_19], %43 {strides = array<i32>} : memref<432x32xbf16, #tpu.memory_space<vmem>>, vector<16x32xbf16>,
    %45 = vector.extract_strided_slice %5 {offsets = [0, 416], sizes = [16, 32], strides = [1, 1]} : vector<16x864xf32> to vector<16x32xf32>
    %46 = arith.truncf %45 : vector<16x32xf32> to vector<16x32xbf16>
    %c208 = arith.constant 208 : index
    %c0_20 = arith.constant 0 : index
    %47 = vector.load %arg8[%c208, %c0_20] : memref<432x32xbf16, #tpu.memory_space<vmem>>, vector<16x32xbf16>
    tpu.vector_store %arg8[%c208, %c0_20], %46 {strides = array<i32>} : memref<432x32xbf16, #tpu.memory_space<vmem>>, vector<16x32xbf16>,
    %48 = vector.extract_strided_slice %5 {offsets = [0, 448], sizes = [16, 32], strides = [1, 1]} : vector<16x864xf32> to vector<16x32xf32>
    %49 = arith.truncf %48 : vector<16x32xf32> to vector<16x32xbf16>
    %c224 = arith.constant 224 : index
    %c0_21 = arith.constant 0 : index
    %50 = vector.load %arg8[%c224, %c0_21] : memref<432x32xbf16, #tpu.memory_space<vmem>>, vector<16x32xbf16>
    tpu.vector_store %arg8[%c224, %c0_21], %49 {strides = array<i32>} : memref<432x32xbf16, #tpu.memory_space<vmem>>, vector<16x32xbf16>,
    %51 = vector.extract_strided_slice %5 {offsets = [0, 480], sizes = [16, 32], strides = [1, 1]} : vector<16x864xf32> to vector<16x32xf32>
    %52 = arith.truncf %51 : vector<16x32xf32> to vector<16x32xbf16>
    %c240 = arith.constant 240 : index
    %c0_22 = arith.constant 0 : index
    %53 = vector.load %arg8[%c240, %c0_22] : memref<432x32xbf16, #tpu.memory_space<vmem>>, vector<16x32xbf16>
    tpu.vector_store %arg8[%c240, %c0_22], %52 {strides = array<i32>} : memref<432x32xbf16, #tpu.memory_space<vmem>>, vector<16x32xbf16>,
    %54 = vector.extract_strided_slice %5 {offsets = [0, 512], sizes = [16, 32], strides = [1, 1]} : vector<16x864xf32> to vector<16x32xf32>
    %55 = arith.truncf %54 : vector<16x32xf32> to vector<16x32xbf16>
    %c256 = arith.constant 256 : index
    %c0_23 = arith.constant 0 : index
    %56 = vector.load %arg8[%c256, %c0_23] : memref<432x32xbf16, #tpu.memory_space<vmem>>, vector<16x32xbf16>
    tpu.vector_store %arg8[%c256, %c0_23], %55 {strides = array<i32>} : memref<432x32xbf16, #tpu.memory_space<vmem>>, vector<16x32xbf16>,
    %57 = vector.extract_strided_slice %5 {offsets = [0, 544], sizes = [16, 32], strides = [1, 1]} : vector<16x864xf32> to vector<16x32xf32>
    %58 = arith.truncf %57 : vector<16x32xf32> to vector<16x32xbf16>
    %c272 = arith.constant 272 : index
    %c0_24 = arith.constant 0 : index
    %59 = vector.load %arg8[%c272, %c0_24] : memref<432x32xbf16, #tpu.memory_space<vmem>>, vector<16x32xbf16>
    tpu.vector_store %arg8[%c272, %c0_24], %58 {strides = array<i32>} : memref<432x32xbf16, #tpu.memory_space<vmem>>, vector<16x32xbf16>,
    %60 = vector.extract_strided_slice %5 {offsets = [0, 576], sizes = [16, 32], strides = [1, 1]} : vector<16x864xf32> to vector<16x32xf32>
    %61 = arith.truncf %60 : vector<16x32xf32> to vector<16x32xbf16>
    %c288 = arith.constant 288 : index
    %c0_25 = arith.constant 0 : index
    %62 = vector.load %arg8[%c288, %c0_25] : memref<432x32xbf16, #tpu.memory_space<vmem>>, vector<16x32xbf16>
    tpu.vector_store %arg8[%c288, %c0_25], %61 {strides = array<i32>} : memref<432x32xbf16, #tpu.memory_space<vmem>>, vector<16x32xbf16>,
    %63 = vector.extract_strided_slice %5 {offsets = [0, 608], sizes = [16, 32], strides = [1, 1]} : vector<16x864xf32> to vector<16x32xf32>
    %64 = arith.truncf %63 : vector<16x32xf32> to vector<16x32xbf16>
    %c304 = arith.constant 304 : index
    %c0_26 = arith.constant 0 : index
    %65 = vector.load %arg8[%c304, %c0_26] : memref<432x32xbf16, #tpu.memory_space<vmem>>, vector<16x32xbf16>
    tpu.vector_store %arg8[%c304, %c0_26], %64 {strides = array<i32>} : memref<432x32xbf16, #tpu.memory_space<vmem>>, vector<16x32xbf16>,
    %66 = vector.extract_strided_slice %5 {offsets = [0, 640], sizes = [16, 32], strides = [1, 1]} : vector<16x864xf32> to vector<16x32xf32>
    %67 = arith.truncf %66 : vector<16x32xf32> to vector<16x32xbf16>
    %c320 = arith.constant 320 : index
    %c0_27 = arith.constant 0 : index
    %68 = vector.load %arg8[%c320, %c0_27] : memref<432x32xbf16, #tpu.memory_space<vmem>>, vector<16x32xbf16>
    tpu.vector_store %arg8[%c320, %c0_27], %67 {strides = array<i32>} : memref<432x32xbf16, #tpu.memory_space<vmem>>, vector<16x32xbf16>,
    %69 = vector.extract_strided_slice %5 {offsets = [0, 672], sizes = [16, 32], strides = [1, 1]} : vector<16x864xf32> to vector<16x32xf32>
    %70 = arith.truncf %69 : vector<16x32xf32> to vector<16x32xbf16>
    %c336 = arith.constant 336 : index
    %c0_28 = arith.constant 0 : index
    %71 = vector.load %arg8[%c336, %c0_28] : memref<432x32xbf16, #tpu.memory_space<vmem>>, vector<16x32xbf16>
    tpu.vector_store %arg8[%c336, %c0_28], %70 {strides = array<i32>} : memref<432x32xbf16, #tpu.memory_space<vmem>>, vector<16x32xbf16>,
    %72 = vector.extract_strided_slice %5 {offsets = [0, 704], sizes = [16, 32], strides = [1, 1]} : vector<16x864xf32> to vector<16x32xf32>
    %73 = arith.truncf %72 : vector<16x32xf32> to vector<16x32xbf16>
    %c352 = arith.constant 352 : index
    %c0_29 = arith.constant 0 : index
    %74 = vector.load %arg8[%c352, %c0_29] : memref<432x32xbf16, #tpu.memory_space<vmem>>, vector<16x32xbf16>
    tpu.vector_store %arg8[%c352, %c0_29], %73 {strides = array<i32>} : memref<432x32xbf16, #tpu.memory_space<vmem>>, vector<16x32xbf16>,
    %75 = vector.extract_strided_slice %5 {offsets = [0, 736], sizes = [16, 32], strides = [1, 1]} : vector<16x864xf32> to vector<16x32xf32>
    %76 = arith.truncf %75 : vector<16x32xf32> to vector<16x32xbf16>
    %c368 = arith.constant 368 : index
    %c0_30 = arith.constant 0 : index
    %77 = vector.load %arg8[%c368, %c0_30] : memref<432x32xbf16, #tpu.memory_space<vmem>>, vector<16x32xbf16>
    tpu.vector_store %arg8[%c368, %c0_30], %76 {strides = array<i32>} : memref<432x32xbf16, #tpu.memory_space<vmem>>, vector<16x32xbf16>,
    %78 = vector.extract_strided_slice %5 {offsets = [0, 768], sizes = [16, 32], strides = [1, 1]} : vector<16x864xf32> to vector<16x32xf32>
    %79 = arith.truncf %78 : vector<16x32xf32> to vector<16x32xbf16>
    %c384 = arith.constant 384 : index
    %c0_31 = arith.constant 0 : index
    %80 = vector.load %arg8[%c384, %c0_31] : memref<432x32xbf16, #tpu.memory_space<vmem>>, vector<16x32xbf16>
    tpu.vector_store %arg8[%c384, %c0_31], %79 {strides = array<i32>} : memref<432x32xbf16, #tpu.memory_space<vmem>>, vector<16x32xbf16>,
    %81 = vector.extract_strided_slice %5 {offsets = [0, 800], sizes = [16, 32], strides = [1, 1]} : vector<16x864xf32> to vector<16x32xf32>
    %82 = arith.truncf %81 : vector<16x32xf32> to vector<16x32xbf16>
    %c400 = arith.constant 400 : index
    %c0_32 = arith.constant 0 : index
    %83 = vector.load %arg8[%c400, %c0_32] : memref<432x32xbf16, #tpu.memory_space<vmem>>, vector<16x32xbf16>
    tpu.vector_store %arg8[%c400, %c0_32], %82 {strides = array<i32>} : memref<432x32xbf16, #tpu.memory_space<vmem>>, vector<16x32xbf16>,
    %84 = vector.extract_strided_slice %5 {offsets = [0, 832], sizes = [16, 32], strides = [1, 1]} : vector<16x864xf32> to vector<16x32xf32>
    %85 = arith.truncf %84 : vector<16x32xf32> to vector<16x32xbf16>
    %c416 = arith.constant 416 : index
    %c0_33 = arith.constant 0 : index
    %86 = vector.load %arg8[%c416, %c0_33] : memref<432x32xbf16, #tpu.memory_space<vmem>>, vector<16x32xbf16>
    tpu.vector_store %arg8[%c416, %c0_33], %85 {strides = array<i32>} : memref<432x32xbf16, #tpu.memory_space<vmem>>, vector<16x32xbf16>,
    %c0_34 = arith.constant 0 : index
    %c0_35 = arith.constant 0 : index
    %87 = vector.load %arg8[%c0_34, %c0_35] : memref<432x32xbf16, #tpu.memory_space<vmem>>, vector<432x32xbf16>
    %cst_36 = arith.constant dense<0.000000e+00> : vector<16x32xf32>
    %88 = tpu.matmul %1, %87, %cst_36 {dimension_numbers = #tpu.dot_dimension_numbers<[1], [0], [0], [1], [0, 0, 1, 1], [], []>} : vector<16x432xbf16>, vector<432x32xbf16>, vector<16x32xf32> -> vector<16x32xf32>
    %c0_37 = arith.constant 0 : index
    %c0_38 = arith.constant 0 : index
    %c0_39 = arith.constant 0 : index
    %89 = vector.load %arg3[%c0_37, %c0_38, %c0_39] : memref<3x32x32xbf16, #tpu.memory_space<vmem>>, vector<1x32x32xbf16>
    %90 = vector.shape_cast %89 : vector<1x32x32xbf16> to vector<32x32xbf16>
    %cst_40 = arith.constant dense<0.000000e+00> : vector<16x32xf32>
    %91 = tpu.matmul %2, %90, %cst_40 {dimension_numbers = #tpu.dot_dimension_numbers<[1], [0], [0], [1], [0, 0, 1, 1], [], []>} : vector<16x32xbf16>, vector<32x32xbf16>, vector<16x32xf32> -> vector<16x32xf32>
    %92 = arith.addf %88, %91 : vector<16x32xf32>
    %c0_41 = arith.constant 0 : index
    %c0_42 = arith.constant 0 : index
    %c0_43 = arith.constant 0 : index
    %93 = vector.load %arg4[%c0_41, %c0_42, %c0_43] : memref<3x1x32xf32, #tpu.memory_space<vmem>>, vector<1x1x32xf32>
    %94 = vector.shape_cast %93 : vector<1x1x32xf32> to vector<1x32xf32>
    %95 = vector.broadcast %94 : vector<1x32xf32> to vector<16x32xf32>
    %96 = arith.addf %92, %95 : vector<16x32xf32>
    %cst_44 = arith.constant 0.000000e+00 : f32
    %97 = vector.broadcast %cst_44 : f32 to vector<16x32xf32>
    %98 = arith.cmpf ogt, %96, %97 : vector<16x32xf32>
    %cst_45 = arith.constant 0.00999999977 : f32
    %99 = vector.broadcast %cst_45 : f32 to vector<16x32xf32>
    %100 = arith.mulf %99, %96 : vector<16x32xf32>
    %101 = arith.select %98, %96, %100 : vector<16x32xi1>, vector<16x32xf32>
    %102 = arith.addf %101, %0 : vector<16x32xf32>
    %cst_46 = arith.constant dense<0.000000e+00> : vector<32xf32>
    %103 = vector.multi_reduction <add>, %102, %cst_46 [0] : vector<16x32xf32> to vector<32xf32>
    %104 = vector.shape_cast %103 : vector<32xf32> to vector<1x32xf32>
    %cst_47 = arith.constant 1.600000e+01 : f32
    %105 = vector.broadcast %cst_47 : f32 to vector<1x32xf32>
    %106 = arith.divf %104, %105 : vector<1x32xf32>
    %107 = vector.broadcast %106 : vector<1x32xf32> to vector<16x32xf32>
    %108 = arith.subf %102, %107 : vector<16x32xf32>
    %109 = arith.mulf %108, %108 : vector<16x32xf32>
    %cst_48 = arith.constant dense<0.000000e+00> : vector<32xf32>
    %110 = vector.multi_reduction <add>, %109, %cst_48 [0] : vector<16x32xf32> to vector<32xf32>
    %111 = vector.shape_cast %110 : vector<32xf32> to vector<1x32xf32>
    %cst_49 = arith.constant 1.600000e+01 : f32
    %112 = vector.broadcast %cst_49 : f32 to vector<1x32xf32>
    %113 = arith.divf %111, %112 : vector<1x32xf32>
    %c0_50 = arith.constant 0 : index
    %c0_51 = arith.constant 0 : index
    %c0_52 = arith.constant 0 : index
    %114 = vector.load %arg5[%c0_50, %c0_51, %c0_52] : memref<3x1x32xf32, #tpu.memory_space<vmem>>, vector<1x1x32xf32>
    %115 = vector.shape_cast %114 : vector<1x1x32xf32> to vector<1x32xf32>
    %116 = vector.broadcast %106 : vector<1x32xf32> to vector<16x32xf32>
    %117 = arith.subf %102, %116 : vector<16x32xf32>
    %118 = vector.broadcast %115 : vector<1x32xf32> to vector<16x32xf32>
    %119 = arith.mulf %118, %117 : vector<16x32xf32>
    %cst_53 = arith.constant 9.99999974E-6 : f32
    %120 = vector.broadcast %cst_53 : f32 to vector<1x32xf32>
    %121 = arith.addf %113, %120 : vector<1x32xf32>
    %122 = math.rsqrt %121 : vector<1x32xf32>
    %123 = vector.broadcast %122 : vector<1x32xf32> to vector<16x32xf32>
    %124 = arith.mulf %119, %123 : vector<16x32xf32>
    %c0_54 = arith.constant 0 : index
    %c0_55 = arith.constant 0 : index
    %c0_56 = arith.constant 0 : index
    %125 = vector.load %arg6[%c0_54, %c0_55, %c0_56] : memref<3x1x32xf32, #tpu.memory_space<vmem>>, vector<1x1x32xf32>
    %126 = vector.shape_cast %125 : vector<1x1x32xf32> to vector<1x32xf32>
    %127 = vector.broadcast %126 : vector<1x32xf32> to vector<16x32xf32>
    %128 = arith.addf %124, %127 : vector<16x32xf32>
    %129 = arith.truncf %128 : vector<16x32xf32> to vector<16x32xbf16>
    %c1 = arith.constant 1 : index
    %c0_57 = arith.constant 0 : index
    %c0_58 = arith.constant 0 : index
    %130 = vector.load %arg2[%c1, %c0_57, %c0_58] : memref<3x32x864xbf16, #tpu.memory_space<vmem>>, vector<1x32x864xbf16>
    %131 = vector.shape_cast %130 : vector<1x32x864xbf16> to vector<32x864xbf16>
    %cst_59 = arith.constant dense<0.000000e+00> : vector<16x864xf32>
    %132 = tpu.matmul %129, %131, %cst_59 {dimension_numbers = #tpu.dot_dimension_numbers<[1], [0], [0], [1], [0, 0, 1, 1], [], []>} : vector<16x32xbf16>, vector<32x864xbf16>, vector<16x864xf32> -> vector<16x864xf32>
    %133 = vector.extract_strided_slice %132 {offsets = [0, 0], sizes = [16, 32], strides = [1, 1]} : vector<16x864xf32> to vector<16x32xf32>
    %134 = arith.truncf %133 : vector<16x32xf32> to vector<16x32xbf16>
    %c0_60 = arith.constant 0 : index
    %c0_61 = arith.constant 0 : index
    %135 = vector.load %arg8[%c0_60, %c0_61] : memref<432x32xbf16, #tpu.memory_space<vmem>>, vector<16x32xbf16>
    tpu.vector_store %arg8[%c0_60, %c0_61], %134 {strides = array<i32>} : memref<432x32xbf16, #tpu.memory_space<vmem>>, vector<16x32xbf16>,
    %136 = vector.extract_strided_slice %132 {offsets = [0, 32], sizes = [16, 32], strides = [1, 1]} : vector<16x864xf32> to vector<16x32xf32>
    %137 = arith.truncf %136 : vector<16x32xf32> to vector<16x32xbf16>
    %c16_62 = arith.constant 16 : index
    %c0_63 = arith.constant 0 : index
    %138 = vector.load %arg8[%c16_62, %c0_63] : memref<432x32xbf16, #tpu.memory_space<vmem>>, vector<16x32xbf16>
    tpu.vector_store %arg8[%c16_62, %c0_63], %137 {strides = array<i32>} : memref<432x32xbf16, #tpu.memory_space<vmem>>, vector<16x32xbf16>,
    %139 = vector.extract_strided_slice %132 {offsets = [0, 64], sizes = [16, 32], strides = [1, 1]} : vector<16x864xf32> to vector<16x32xf32>
    %140 = arith.truncf %139 : vector<16x32xf32> to vector<16x32xbf16>
    %c32_64 = arith.constant 32 : index
    %c0_65 = arith.constant 0 : index
    %141 = vector.load %arg8[%c32_64, %c0_65] : memref<432x32xbf16, #tpu.memory_space<vmem>>, vector<16x32xbf16>
    tpu.vector_store %arg8[%c32_64, %c0_65], %140 {strides = array<i32>} : memref<432x32xbf16, #tpu.memory_space<vmem>>, vector<16x32xbf16>,
    %142 = vector.extract_strided_slice %132 {offsets = [0, 96], sizes = [16, 32], strides = [1, 1]} : vector<16x864xf32> to vector<16x32xf32>
    %143 = arith.truncf %142 : vector<16x32xf32> to vector<16x32xbf16>
    %c48_66 = arith.constant 48 : index
    %c0_67 = arith.constant 0 : index
    %144 = vector.load %arg8[%c48_66, %c0_67] : memref<432x32xbf16, #tpu.memory_space<vmem>>, vector<16x32xbf16>
    tpu.vector_store %arg8[%c48_66, %c0_67], %143 {strides = array<i32>} : memref<432x32xbf16, #tpu.memory_space<vmem>>, vector<16x32xbf16>,
    %145 = vector.extract_strided_slice %132 {offsets = [0, 128], sizes = [16, 32], strides = [1, 1]} : vector<16x864xf32> to vector<16x32xf32>
    %146 = arith.truncf %145 : vector<16x32xf32> to vector<16x32xbf16>
    %c64_68 = arith.constant 64 : index
    %c0_69 = arith.constant 0 : index
    %147 = vector.load %arg8[%c64_68, %c0_69] : memref<432x32xbf16, #tpu.memory_space<vmem>>, vector<16x32xbf16>
    tpu.vector_store %arg8[%c64_68, %c0_69], %146 {strides = array<i32>} : memref<432x32xbf16, #tpu.memory_space<vmem>>, vector<16x32xbf16>,
    %148 = vector.extract_strided_slice %132 {offsets = [0, 160], sizes = [16, 32], strides = [1, 1]} : vector<16x864xf32> to vector<16x32xf32>
    %149 = arith.truncf %148 : vector<16x32xf32> to vector<16x32xbf16>
    %c80_70 = arith.constant 80 : index
    %c0_71 = arith.constant 0 : index
    %150 = vector.load %arg8[%c80_70, %c0_71] : memref<432x32xbf16, #tpu.memory_space<vmem>>, vector<16x32xbf16>
    tpu.vector_store %arg8[%c80_70, %c0_71], %149 {strides = array<i32>} : memref<432x32xbf16, #tpu.memory_space<vmem>>, vector<16x32xbf16>,
    %151 = vector.extract_strided_slice %132 {offsets = [0, 192], sizes = [16, 32], strides = [1, 1]} : vector<16x864xf32> to vector<16x32xf32>
    %152 = arith.truncf %151 : vector<16x32xf32> to vector<16x32xbf16>
    %c96_72 = arith.constant 96 : index
    %c0_73 = arith.constant 0 : index
    %153 = vector.load %arg8[%c96_72, %c0_73] : memref<432x32xbf16, #tpu.memory_space<vmem>>, vector<16x32xbf16>
    tpu.vector_store %arg8[%c96_72, %c0_73], %152 {strides = array<i32>} : memref<432x32xbf16, #tpu.memory_space<vmem>>, vector<16x32xbf16>,
    %154 = vector.extract_strided_slice %132 {offsets = [0, 224], sizes = [16, 32], strides = [1, 1]} : vector<16x864xf32> to vector<16x32xf32>
    %155 = arith.truncf %154 : vector<16x32xf32> to vector<16x32xbf16>
    %c112_74 = arith.constant 112 : index
    %c0_75 = arith.constant 0 : index
    %156 = vector.load %arg8[%c112_74, %c0_75] : memref<432x32xbf16, #tpu.memory_space<vmem>>, vector<16x32xbf16>
    tpu.vector_store %arg8[%c112_74, %c0_75], %155 {strides = array<i32>} : memref<432x32xbf16, #tpu.memory_space<vmem>>, vector<16x32xbf16>,
    %157 = vector.extract_strided_slice %132 {offsets = [0, 256], sizes = [16, 32], strides = [1, 1]} : vector<16x864xf32> to vector<16x32xf32>
    %158 = arith.truncf %157 : vector<16x32xf32> to vector<16x32xbf16>
    %c128_76 = arith.constant 128 : index
    %c0_77 = arith.constant 0 : index
    %159 = vector.load %arg8[%c128_76, %c0_77] : memref<432x32xbf16, #tpu.memory_space<vmem>>, vector<16x32xbf16>
    tpu.vector_store %arg8[%c128_76, %c0_77], %158 {strides = array<i32>} : memref<432x32xbf16, #tpu.memory_space<vmem>>, vector<16x32xbf16>,
    %160 = vector.extract_strided_slice %132 {offsets = [0, 288], sizes = [16, 32], strides = [1, 1]} : vector<16x864xf32> to vector<16x32xf32>
    %161 = arith.truncf %160 : vector<16x32xf32> to vector<16x32xbf16>
    %c144_78 = arith.constant 144 : index
    %c0_79 = arith.constant 0 : index
    %162 = vector.load %arg8[%c144_78, %c0_79] : memref<432x32xbf16, #tpu.memory_space<vmem>>, vector<16x32xbf16>
    tpu.vector_store %arg8[%c144_78, %c0_79], %161 {strides = array<i32>} : memref<432x32xbf16, #tpu.memory_space<vmem>>, vector<16x32xbf16>,
    %163 = vector.extract_strided_slice %132 {offsets = [0, 320], sizes = [16, 32], strides = [1, 1]} : vector<16x864xf32> to vector<16x32xf32>
    %164 = arith.truncf %163 : vector<16x32xf32> to vector<16x32xbf16>
    %c160_80 = arith.constant 160 : index
    %c0_81 = arith.constant 0 : index
    %165 = vector.load %arg8[%c160_80, %c0_81] : memref<432x32xbf16, #tpu.memory_space<vmem>>, vector<16x32xbf16>
    tpu.vector_store %arg8[%c160_80, %c0_81], %164 {strides = array<i32>} : memref<432x32xbf16, #tpu.memory_space<vmem>>, vector<16x32xbf16>,
    %166 = vector.extract_strided_slice %132 {offsets = [0, 352], sizes = [16, 32], strides = [1, 1]} : vector<16x864xf32> to vector<16x32xf32>
    %167 = arith.truncf %166 : vector<16x32xf32> to vector<16x32xbf16>
    %c176_82 = arith.constant 176 : index
    %c0_83 = arith.constant 0 : index
    %168 = vector.load %arg8[%c176_82, %c0_83] : memref<432x32xbf16, #tpu.memory_space<vmem>>, vector<16x32xbf16>
    tpu.vector_store %arg8[%c176_82, %c0_83], %167 {strides = array<i32>} : memref<432x32xbf16, #tpu.memory_space<vmem>>, vector<16x32xbf16>,
    %169 = vector.extract_strided_slice %132 {offsets = [0, 384], sizes = [16, 32], strides = [1, 1]} : vector<16x864xf32> to vector<16x32xf32>
    %170 = arith.truncf %169 : vector<16x32xf32> to vector<16x32xbf16>
    %c192_84 = arith.constant 192 : index
    %c0_85 = arith.constant 0 : index
    %171 = vector.load %arg8[%c192_84, %c0_85] : memref<432x32xbf16, #tpu.memory_space<vmem>>, vector<16x32xbf16>
    tpu.vector_store %arg8[%c192_84, %c0_85], %170 {strides = array<i32>} : memref<432x32xbf16, #tpu.memory_space<vmem>>, vector<16x32xbf16>,
    %172 = vector.extract_strided_slice %132 {offsets = [0, 416], sizes = [16, 32], strides = [1, 1]} : vector<16x864xf32> to vector<16x32xf32>
    %173 = arith.truncf %172 : vector<16x32xf32> to vector<16x32xbf16>
    %c208_86 = arith.constant 208 : index
    %c0_87 = arith.constant 0 : index
    %174 = vector.load %arg8[%c208_86, %c0_87] : memref<432x32xbf16, #tpu.memory_space<vmem>>, vector<16x32xbf16>
    tpu.vector_store %arg8[%c208_86, %c0_87], %173 {strides = array<i32>} : memref<432x32xbf16, #tpu.memory_space<vmem>>, vector<16x32xbf16>,
    %175 = vector.extract_strided_slice %132 {offsets = [0, 448], sizes = [16, 32], strides = [1, 1]} : vector<16x864xf32> to vector<16x32xf32>
    %176 = arith.truncf %175 : vector<16x32xf32> to vector<16x32xbf16>
    %c224_88 = arith.constant 224 : index
    %c0_89 = arith.constant 0 : index
    %177 = vector.load %arg8[%c224_88, %c0_89] : memref<432x32xbf16, #tpu.memory_space<vmem>>, vector<16x32xbf16>
    tpu.vector_store %arg8[%c224_88, %c0_89], %176 {strides = array<i32>} : memref<432x32xbf16, #tpu.memory_space<vmem>>, vector<16x32xbf16>,
    %178 = vector.extract_strided_slice %132 {offsets = [0, 480], sizes = [16, 32], strides = [1, 1]} : vector<16x864xf32> to vector<16x32xf32>
    %179 = arith.truncf %178 : vector<16x32xf32> to vector<16x32xbf16>
    %c240_90 = arith.constant 240 : index
    %c0_91 = arith.constant 0 : index
    %180 = vector.load %arg8[%c240_90, %c0_91] : memref<432x32xbf16, #tpu.memory_space<vmem>>, vector<16x32xbf16>
    tpu.vector_store %arg8[%c240_90, %c0_91], %179 {strides = array<i32>} : memref<432x32xbf16, #tpu.memory_space<vmem>>, vector<16x32xbf16>,
    %181 = vector.extract_strided_slice %132 {offsets = [0, 512], sizes = [16, 32], strides = [1, 1]} : vector<16x864xf32> to vector<16x32xf32>
    %182 = arith.truncf %181 : vector<16x32xf32> to vector<16x32xbf16>
    %c256_92 = arith.constant 256 : index
    %c0_93 = arith.constant 0 : index
    %183 = vector.load %arg8[%c256_92, %c0_93] : memref<432x32xbf16, #tpu.memory_space<vmem>>, vector<16x32xbf16>
    tpu.vector_store %arg8[%c256_92, %c0_93], %182 {strides = array<i32>} : memref<432x32xbf16, #tpu.memory_space<vmem>>, vector<16x32xbf16>,
    %184 = vector.extract_strided_slice %132 {offsets = [0, 544], sizes = [16, 32], strides = [1, 1]} : vector<16x864xf32> to vector<16x32xf32>
    %185 = arith.truncf %184 : vector<16x32xf32> to vector<16x32xbf16>
    %c272_94 = arith.constant 272 : index
    %c0_95 = arith.constant 0 : index
    %186 = vector.load %arg8[%c272_94, %c0_95] : memref<432x32xbf16, #tpu.memory_space<vmem>>, vector<16x32xbf16>
    tpu.vector_store %arg8[%c272_94, %c0_95], %185 {strides = array<i32>} : memref<432x32xbf16, #tpu.memory_space<vmem>>, vector<16x32xbf16>,
    %187 = vector.extract_strided_slice %132 {offsets = [0, 576], sizes = [16, 32], strides = [1, 1]} : vector<16x864xf32> to vector<16x32xf32>
    %188 = arith.truncf %187 : vector<16x32xf32> to vector<16x32xbf16>
    %c288_96 = arith.constant 288 : index
    %c0_97 = arith.constant 0 : index
    %189 = vector.load %arg8[%c288_96, %c0_97] : memref<432x32xbf16, #tpu.memory_space<vmem>>, vector<16x32xbf16>
    tpu.vector_store %arg8[%c288_96, %c0_97], %188 {strides = array<i32>} : memref<432x32xbf16, #tpu.memory_space<vmem>>, vector<16x32xbf16>,
    %190 = vector.extract_strided_slice %132 {offsets = [0, 608], sizes = [16, 32], strides = [1, 1]} : vector<16x864xf32> to vector<16x32xf32>
    %191 = arith.truncf %190 : vector<16x32xf32> to vector<16x32xbf16>
    %c304_98 = arith.constant 304 : index
    %c0_99 = arith.constant 0 : index
    %192 = vector.load %arg8[%c304_98, %c0_99] : memref<432x32xbf16, #tpu.memory_space<vmem>>, vector<16x32xbf16>
    tpu.vector_store %arg8[%c304_98, %c0_99], %191 {strides = array<i32>} : memref<432x32xbf16, #tpu.memory_space<vmem>>, vector<16x32xbf16>,
    %193 = vector.extract_strided_slice %132 {offsets = [0, 640], sizes = [16, 32], strides = [1, 1]} : vector<16x864xf32> to vector<16x32xf32>
    %194 = arith.truncf %193 : vector<16x32xf32> to vector<16x32xbf16>
    %c320_100 = arith.constant 320 : index
    %c0_101 = arith.constant 0 : index
    %195 = vector.load %arg8[%c320_100, %c0_101] : memref<432x32xbf16, #tpu.memory_space<vmem>>, vector<16x32xbf16>
    tpu.vector_store %arg8[%c320_100, %c0_101], %194 {strides = array<i32>} : memref<432x32xbf16, #tpu.memory_space<vmem>>, vector<16x32xbf16>,
    %196 = vector.extract_strided_slice %132 {offsets = [0, 672], sizes = [16, 32], strides = [1, 1]} : vector<16x864xf32> to vector<16x32xf32>
    %197 = arith.truncf %196 : vector<16x32xf32> to vector<16x32xbf16>
    %c336_102 = arith.constant 336 : index
    %c0_103 = arith.constant 0 : index
    %198 = vector.load %arg8[%c336_102, %c0_103] : memref<432x32xbf16, #tpu.memory_space<vmem>>, vector<16x32xbf16>
    tpu.vector_store %arg8[%c336_102, %c0_103], %197 {strides = array<i32>} : memref<432x32xbf16, #tpu.memory_space<vmem>>, vector<16x32xbf16>,
    %199 = vector.extract_strided_slice %132 {offsets = [0, 704], sizes = [16, 32], strides = [1, 1]} : vector<16x864xf32> to vector<16x32xf32>
    %200 = arith.truncf %199 : vector<16x32xf32> to vector<16x32xbf16>
    %c352_104 = arith.constant 352 : index
    %c0_105 = arith.constant 0 : index
    %201 = vector.load %arg8[%c352_104, %c0_105] : memref<432x32xbf16, #tpu.memory_space<vmem>>, vector<16x32xbf16>
    tpu.vector_store %arg8[%c352_104, %c0_105], %200 {strides = array<i32>} : memref<432x32xbf16, #tpu.memory_space<vmem>>, vector<16x32xbf16>,
    %202 = vector.extract_strided_slice %132 {offsets = [0, 736], sizes = [16, 32], strides = [1, 1]} : vector<16x864xf32> to vector<16x32xf32>
    %203 = arith.truncf %202 : vector<16x32xf32> to vector<16x32xbf16>
    %c368_106 = arith.constant 368 : index
    %c0_107 = arith.constant 0 : index
    %204 = vector.load %arg8[%c368_106, %c0_107] : memref<432x32xbf16, #tpu.memory_space<vmem>>, vector<16x32xbf16>
    tpu.vector_store %arg8[%c368_106, %c0_107], %203 {strides = array<i32>} : memref<432x32xbf16, #tpu.memory_space<vmem>>, vector<16x32xbf16>,
    %205 = vector.extract_strided_slice %132 {offsets = [0, 768], sizes = [16, 32], strides = [1, 1]} : vector<16x864xf32> to vector<16x32xf32>
    %206 = arith.truncf %205 : vector<16x32xf32> to vector<16x32xbf16>
    %c384_108 = arith.constant 384 : index
    %c0_109 = arith.constant 0 : index
    %207 = vector.load %arg8[%c384_108, %c0_109] : memref<432x32xbf16, #tpu.memory_space<vmem>>, vector<16x32xbf16>
    tpu.vector_store %arg8[%c384_108, %c0_109], %206 {strides = array<i32>} : memref<432x32xbf16, #tpu.memory_space<vmem>>, vector<16x32xbf16>,
    %208 = vector.extract_strided_slice %132 {offsets = [0, 800], sizes = [16, 32], strides = [1, 1]} : vector<16x864xf32> to vector<16x32xf32>
    %209 = arith.truncf %208 : vector<16x32xf32> to vector<16x32xbf16>
    %c400_110 = arith.constant 400 : index
    %c0_111 = arith.constant 0 : index
    %210 = vector.load %arg8[%c400_110, %c0_111] : memref<432x32xbf16, #tpu.memory_space<vmem>>, vector<16x32xbf16>
    tpu.vector_store %arg8[%c400_110, %c0_111], %209 {strides = array<i32>} : memref<432x32xbf16, #tpu.memory_space<vmem>>, vector<16x32xbf16>,
    %211 = vector.extract_strided_slice %132 {offsets = [0, 832], sizes = [16, 32], strides = [1, 1]} : vector<16x864xf32> to vector<16x32xf32>
    %212 = arith.truncf %211 : vector<16x32xf32> to vector<16x32xbf16>
    %c416_112 = arith.constant 416 : index
    %c0_113 = arith.constant 0 : index
    %213 = vector.load %arg8[%c416_112, %c0_113] : memref<432x32xbf16, #tpu.memory_space<vmem>>, vector<16x32xbf16>
    tpu.vector_store %arg8[%c416_112, %c0_113], %212 {strides = array<i32>} : memref<432x32xbf16, #tpu.memory_space<vmem>>, vector<16x32xbf16>,
    %c0_114 = arith.constant 0 : index
    %c0_115 = arith.constant 0 : index
    %214 = vector.load %arg8[%c0_114, %c0_115] : memref<432x32xbf16, #tpu.memory_space<vmem>>, vector<432x32xbf16>
    %cst_116 = arith.constant dense<0.000000e+00> : vector<16x32xf32>
    %215 = tpu.matmul %1, %214, %cst_116 {dimension_numbers = #tpu.dot_dimension_numbers<[1], [0], [0], [1], [0, 0, 1, 1], [], []>} : vector<16x432xbf16>, vector<432x32xbf16>, vector<16x32xf32> -> vector<16x32xf32>
    %c1_117 = arith.constant 1 : index
    %c0_118 = arith.constant 0 : index
    %c0_119 = arith.constant 0 : index
    %216 = vector.load %arg3[%c1_117, %c0_118, %c0_119] : memref<3x32x32xbf16, #tpu.memory_space<vmem>>, vector<1x32x32xbf16>
    %217 = vector.shape_cast %216 : vector<1x32x32xbf16> to vector<32x32xbf16>
    %cst_120 = arith.constant dense<0.000000e+00> : vector<16x32xf32>
    %218 = tpu.matmul %129, %217, %cst_120 {dimension_numbers = #tpu.dot_dimension_numbers<[1], [0], [0], [1], [0, 0, 1, 1], [], []>} : vector<16x32xbf16>, vector<32x32xbf16>, vector<16x32xf32> -> vector<16x32xf32>
    %219 = arith.addf %215, %218 : vector<16x32xf32>
    %c1_121 = arith.constant 1 : index
    %c0_122 = arith.constant 0 : index
    %c0_123 = arith.constant 0 : index
    %220 = vector.load %arg4[%c1_121, %c0_122, %c0_123] : memref<3x1x32xf32, #tpu.memory_space<vmem>>, vector<1x1x32xf32>
    %221 = vector.shape_cast %220 : vector<1x1x32xf32> to vector<1x32xf32>
    %222 = vector.broadcast %221 : vector<1x32xf32> to vector<16x32xf32>
    %223 = arith.addf %219, %222 : vector<16x32xf32>
    %cst_124 = arith.constant 0.000000e+00 : f32
    %224 = vector.broadcast %cst_124 : f32 to vector<16x32xf32>
    %225 = arith.cmpf ogt, %223, %224 : vector<16x32xf32>
    %cst_125 = arith.constant 0.00999999977 : f32
    %226 = vector.broadcast %cst_125 : f32 to vector<16x32xf32>
    %227 = arith.mulf %226, %223 : vector<16x32xf32>
    %228 = arith.select %225, %223, %227 : vector<16x32xi1>, vector<16x32xf32>
    %229 = arith.addf %228, %128 : vector<16x32xf32>
    %cst_126 = arith.constant dense<0.000000e+00> : vector<32xf32>
    %230 = vector.multi_reduction <add>, %229, %cst_126 [0] : vector<16x32xf32> to vector<32xf32>
    %231 = vector.shape_cast %230 : vector<32xf32> to vector<1x32xf32>
    %cst_127 = arith.constant 1.600000e+01 : f32
    %232 = vector.broadcast %cst_127 : f32 to vector<1x32xf32>
    %233 = arith.divf %231, %232 : vector<1x32xf32>
    %234 = vector.broadcast %233 : vector<1x32xf32> to vector<16x32xf32>
    %235 = arith.subf %229, %234 : vector<16x32xf32>
    %236 = arith.mulf %235, %235 : vector<16x32xf32>
    %cst_128 = arith.constant dense<0.000000e+00> : vector<32xf32>
    %237 = vector.multi_reduction <add>, %236, %cst_128 [0] : vector<16x32xf32> to vector<32xf32>
    %238 = vector.shape_cast %237 : vector<32xf32> to vector<1x32xf32>
    %cst_129 = arith.constant 1.600000e+01 : f32
    %239 = vector.broadcast %cst_129 : f32 to vector<1x32xf32>
    %240 = arith.divf %238, %239 : vector<1x32xf32>
    %c1_130 = arith.constant 1 : index
    %c0_131 = arith.constant 0 : index
    %c0_132 = arith.constant 0 : index
    %241 = vector.load %arg5[%c1_130, %c0_131, %c0_132] : memref<3x1x32xf32, #tpu.memory_space<vmem>>, vector<1x1x32xf32>
    %242 = vector.shape_cast %241 : vector<1x1x32xf32> to vector<1x32xf32>
    %243 = vector.broadcast %233 : vector<1x32xf32> to vector<16x32xf32>
    %244 = arith.subf %229, %243 : vector<16x32xf32>
    %245 = vector.broadcast %242 : vector<1x32xf32> to vector<16x32xf32>
    %246 = arith.mulf %245, %244 : vector<16x32xf32>
    %cst_133 = arith.constant 9.99999974E-6 : f32
    %247 = vector.broadcast %cst_133 : f32 to vector<1x32xf32>
    %248 = arith.addf %240, %247 : vector<1x32xf32>
    %249 = math.rsqrt %248 : vector<1x32xf32>
    %250 = vector.broadcast %249 : vector<1x32xf32> to vector<16x32xf32>
    %251 = arith.mulf %246, %250 : vector<16x32xf32>
    %c1_134 = arith.constant 1 : index
    %c0_135 = arith.constant 0 : index
    %c0_136 = arith.constant 0 : index
    %252 = vector.load %arg6[%c1_134, %c0_135, %c0_136] : memref<3x1x32xf32, #tpu.memory_space<vmem>>, vector<1x1x32xf32>
    %253 = vector.shape_cast %252 : vector<1x1x32xf32> to vector<1x32xf32>
    %254 = vector.broadcast %253 : vector<1x32xf32> to vector<16x32xf32>
    %255 = arith.addf %251, %254 : vector<16x32xf32>
    %256 = arith.truncf %255 : vector<16x32xf32> to vector<16x32xbf16>
    %c2 = arith.constant 2 : index
    %c0_137 = arith.constant 0 : index
    %c0_138 = arith.constant 0 : index
    %257 = vector.load %arg2[%c2, %c0_137, %c0_138] : memref<3x32x864xbf16, #tpu.memory_space<vmem>>, vector<1x32x864xbf16>
    %258 = vector.shape_cast %257 : vector<1x32x864xbf16> to vector<32x864xbf16>
    %cst_139 = arith.constant dense<0.000000e+00> : vector<16x864xf32>
    %259 = tpu.matmul %256, %258, %cst_139 {dimension_numbers = #tpu.dot_dimension_numbers<[1], [0], [0], [1], [0, 0, 1, 1], [], []>} : vector<16x32xbf16>, vector<32x864xbf16>, vector<16x864xf32> -> vector<16x864xf32>
    %260 = vector.extract_strided_slice %259 {offsets = [0, 0], sizes = [16, 32], strides = [1, 1]} : vector<16x864xf32> to vector<16x32xf32>
    %261 = arith.truncf %260 : vector<16x32xf32> to vector<16x32xbf16>
    %c0_140 = arith.constant 0 : index
    %c0_141 = arith.constant 0 : index
    %262 = vector.load %arg8[%c0_140, %c0_141] : memref<432x32xbf16, #tpu.memory_space<vmem>>, vector<16x32xbf16>
    tpu.vector_store %arg8[%c0_140, %c0_141], %261 {strides = array<i32>} : memref<432x32xbf16, #tpu.memory_space<vmem>>, vector<16x32xbf16>,
    %263 = vector.extract_strided_slice %259 {offsets = [0, 32], sizes = [16, 32], strides = [1, 1]} : vector<16x864xf32> to vector<16x32xf32>
    %264 = arith.truncf %263 : vector<16x32xf32> to vector<16x32xbf16>
    %c16_142 = arith.constant 16 : index
    %c0_143 = arith.constant 0 : index
    %265 = vector.load %arg8[%c16_142, %c0_143] : memref<432x32xbf16, #tpu.memory_space<vmem>>, vector<16x32xbf16>
    tpu.vector_store %arg8[%c16_142, %c0_143], %264 {strides = array<i32>} : memref<432x32xbf16, #tpu.memory_space<vmem>>, vector<16x32xbf16>,
    %266 = vector.extract_strided_slice %259 {offsets = [0, 64], sizes = [16, 32], strides = [1, 1]} : vector<16x864xf32> to vector<16x32xf32>
    %267 = arith.truncf %266 : vector<16x32xf32> to vector<16x32xbf16>
    %c32_144 = arith.constant 32 : index
    %c0_145 = arith.constant 0 : index
    %268 = vector.load %arg8[%c32_144, %c0_145] : memref<432x32xbf16, #tpu.memory_space<vmem>>, vector<16x32xbf16>
    tpu.vector_store %arg8[%c32_144, %c0_145], %267 {strides = array<i32>} : memref<432x32xbf16, #tpu.memory_space<vmem>>, vector<16x32xbf16>,
    %269 = vector.extract_strided_slice %259 {offsets = [0, 96], sizes = [16, 32], strides = [1, 1]} : vector<16x864xf32> to vector<16x32xf32>
    %270 = arith.truncf %269 : vector<16x32xf32> to vector<16x32xbf16>
    %c48_146 = arith.constant 48 : index
    %c0_147 = arith.constant 0 : index
    %271 = vector.load %arg8[%c48_146, %c0_147] : memref<432x32xbf16, #tpu.memory_space<vmem>>, vector<16x32xbf16>
    tpu.vector_store %arg8[%c48_146, %c0_147], %270 {strides = array<i32>} : memref<432x32xbf16, #tpu.memory_space<vmem>>, vector<16x32xbf16>,
    %272 = vector.extract_strided_slice %259 {offsets = [0, 128], sizes = [16, 32], strides = [1, 1]} : vector<16x864xf32> to vector<16x32xf32>
    %273 = arith.truncf %272 : vector<16x32xf32> to vector<16x32xbf16>
    %c64_148 = arith.constant 64 : index
    %c0_149 = arith.constant 0 : index
    %274 = vector.load %arg8[%c64_148, %c0_149] : memref<432x32xbf16, #tpu.memory_space<vmem>>, vector<16x32xbf16>
    tpu.vector_store %arg8[%c64_148, %c0_149], %273 {strides = array<i32>} : memref<432x32xbf16, #tpu.memory_space<vmem>>, vector<16x32xbf16>,
    %275 = vector.extract_strided_slice %259 {offsets = [0, 160], sizes = [16, 32], strides = [1, 1]} : vector<16x864xf32> to vector<16x32xf32>
    %276 = arith.truncf %275 : vector<16x32xf32> to vector<16x32xbf16>
    %c80_150 = arith.constant 80 : index
    %c0_151 = arith.constant 0 : index
    %277 = vector.load %arg8[%c80_150, %c0_151] : memref<432x32xbf16, #tpu.memory_space<vmem>>, vector<16x32xbf16>
    tpu.vector_store %arg8[%c80_150, %c0_151], %276 {strides = array<i32>} : memref<432x32xbf16, #tpu.memory_space<vmem>>, vector<16x32xbf16>,
    %278 = vector.extract_strided_slice %259 {offsets = [0, 192], sizes = [16, 32], strides = [1, 1]} : vector<16x864xf32> to vector<16x32xf32>
    %279 = arith.truncf %278 : vector<16x32xf32> to vector<16x32xbf16>
    %c96_152 = arith.constant 96 : index
    %c0_153 = arith.constant 0 : index
    %280 = vector.load %arg8[%c96_152, %c0_153] : memref<432x32xbf16, #tpu.memory_space<vmem>>, vector<16x32xbf16>
    tpu.vector_store %arg8[%c96_152, %c0_153], %279 {strides = array<i32>} : memref<432x32xbf16, #tpu.memory_space<vmem>>, vector<16x32xbf16>,
    %281 = vector.extract_strided_slice %259 {offsets = [0, 224], sizes = [16, 32], strides = [1, 1]} : vector<16x864xf32> to vector<16x32xf32>
    %282 = arith.truncf %281 : vector<16x32xf32> to vector<16x32xbf16>
    %c112_154 = arith.constant 112 : index
    %c0_155 = arith.constant 0 : index
    %283 = vector.load %arg8[%c112_154, %c0_155] : memref<432x32xbf16, #tpu.memory_space<vmem>>, vector<16x32xbf16>
    tpu.vector_store %arg8[%c112_154, %c0_155], %282 {strides = array<i32>} : memref<432x32xbf16, #tpu.memory_space<vmem>>, vector<16x32xbf16>,
    %284 = vector.extract_strided_slice %259 {offsets = [0, 256], sizes = [16, 32], strides = [1, 1]} : vector<16x864xf32> to vector<16x32xf32>
    %285 = arith.truncf %284 : vector<16x32xf32> to vector<16x32xbf16>
    %c128_156 = arith.constant 128 : index
    %c0_157 = arith.constant 0 : index
    %286 = vector.load %arg8[%c128_156, %c0_157] : memref<432x32xbf16, #tpu.memory_space<vmem>>, vector<16x32xbf16>
    tpu.vector_store %arg8[%c128_156, %c0_157], %285 {strides = array<i32>} : memref<432x32xbf16, #tpu.memory_space<vmem>>, vector<16x32xbf16>,
    %287 = vector.extract_strided_slice %259 {offsets = [0, 288], sizes = [16, 32], strides = [1, 1]} : vector<16x864xf32> to vector<16x32xf32>
    %288 = arith.truncf %287 : vector<16x32xf32> to vector<16x32xbf16>
    %c144_158 = arith.constant 144 : index
    %c0_159 = arith.constant 0 : index
    %289 = vector.load %arg8[%c144_158, %c0_159] : memref<432x32xbf16, #tpu.memory_space<vmem>>, vector<16x32xbf16>
    tpu.vector_store %arg8[%c144_158, %c0_159], %288 {strides = array<i32>} : memref<432x32xbf16, #tpu.memory_space<vmem>>, vector<16x32xbf16>,
    %290 = vector.extract_strided_slice %259 {offsets = [0, 320], sizes = [16, 32], strides = [1, 1]} : vector<16x864xf32> to vector<16x32xf32>
    %291 = arith.truncf %290 : vector<16x32xf32> to vector<16x32xbf16>
    %c160_160 = arith.constant 160 : index
    %c0_161 = arith.constant 0 : index
    %292 = vector.load %arg8[%c160_160, %c0_161] : memref<432x32xbf16, #tpu.memory_space<vmem>>, vector<16x32xbf16>
    tpu.vector_store %arg8[%c160_160, %c0_161], %291 {strides = array<i32>} : memref<432x32xbf16, #tpu.memory_space<vmem>>, vector<16x32xbf16>,
    %293 = vector.extract_strided_slice %259 {offsets = [0, 352], sizes = [16, 32], strides = [1, 1]} : vector<16x864xf32> to vector<16x32xf32>
    %294 = arith.truncf %293 : vector<16x32xf32> to vector<16x32xbf16>
    %c176_162 = arith.constant 176 : index
    %c0_163 = arith.constant 0 : index
    %295 = vector.load %arg8[%c176_162, %c0_163] : memref<432x32xbf16, #tpu.memory_space<vmem>>, vector<16x32xbf16>
    tpu.vector_store %arg8[%c176_162, %c0_163], %294 {strides = array<i32>} : memref<432x32xbf16, #tpu.memory_space<vmem>>, vector<16x32xbf16>,
    %296 = vector.extract_strided_slice %259 {offsets = [0, 384], sizes = [16, 32], strides = [1, 1]} : vector<16x864xf32> to vector<16x32xf32>
    %297 = arith.truncf %296 : vector<16x32xf32> to vector<16x32xbf16>
    %c192_164 = arith.constant 192 : index
    %c0_165 = arith.constant 0 : index
    %298 = vector.load %arg8[%c192_164, %c0_165] : memref<432x32xbf16, #tpu.memory_space<vmem>>, vector<16x32xbf16>
    tpu.vector_store %arg8[%c192_164, %c0_165], %297 {strides = array<i32>} : memref<432x32xbf16, #tpu.memory_space<vmem>>, vector<16x32xbf16>,
    %299 = vector.extract_strided_slice %259 {offsets = [0, 416], sizes = [16, 32], strides = [1, 1]} : vector<16x864xf32> to vector<16x32xf32>
    %300 = arith.truncf %299 : vector<16x32xf32> to vector<16x32xbf16>
    %c208_166 = arith.constant 208 : index
    %c0_167 = arith.constant 0 : index
    %301 = vector.load %arg8[%c208_166, %c0_167] : memref<432x32xbf16, #tpu.memory_space<vmem>>, vector<16x32xbf16>
    tpu.vector_store %arg8[%c208_166, %c0_167], %300 {strides = array<i32>} : memref<432x32xbf16, #tpu.memory_space<vmem>>, vector<16x32xbf16>,
    %302 = vector.extract_strided_slice %259 {offsets = [0, 448], sizes = [16, 32], strides = [1, 1]} : vector<16x864xf32> to vector<16x32xf32>
    %303 = arith.truncf %302 : vector<16x32xf32> to vector<16x32xbf16>
    %c224_168 = arith.constant 224 : index
    %c0_169 = arith.constant 0 : index
    %304 = vector.load %arg8[%c224_168, %c0_169] : memref<432x32xbf16, #tpu.memory_space<vmem>>, vector<16x32xbf16>
    tpu.vector_store %arg8[%c224_168, %c0_169], %303 {strides = array<i32>} : memref<432x32xbf16, #tpu.memory_space<vmem>>, vector<16x32xbf16>,
    %305 = vector.extract_strided_slice %259 {offsets = [0, 480], sizes = [16, 32], strides = [1, 1]} : vector<16x864xf32> to vector<16x32xf32>
    %306 = arith.truncf %305 : vector<16x32xf32> to vector<16x32xbf16>
    %c240_170 = arith.constant 240 : index
    %c0_171 = arith.constant 0 : index
    %307 = vector.load %arg8[%c240_170, %c0_171] : memref<432x32xbf16, #tpu.memory_space<vmem>>, vector<16x32xbf16>
    tpu.vector_store %arg8[%c240_170, %c0_171], %306 {strides = array<i32>} : memref<432x32xbf16, #tpu.memory_space<vmem>>, vector<16x32xbf16>,
    %308 = vector.extract_strided_slice %259 {offsets = [0, 512], sizes = [16, 32], strides = [1, 1]} : vector<16x864xf32> to vector<16x32xf32>
    %309 = arith.truncf %308 : vector<16x32xf32> to vector<16x32xbf16>
    %c256_172 = arith.constant 256 : index
    %c0_173 = arith.constant 0 : index
    %310 = vector.load %arg8[%c256_172, %c0_173] : memref<432x32xbf16, #tpu.memory_space<vmem>>, vector<16x32xbf16>
    tpu.vector_store %arg8[%c256_172, %c0_173], %309 {strides = array<i32>} : memref<432x32xbf16, #tpu.memory_space<vmem>>, vector<16x32xbf16>,
    %311 = vector.extract_strided_slice %259 {offsets = [0, 544], sizes = [16, 32], strides = [1, 1]} : vector<16x864xf32> to vector<16x32xf32>
    %312 = arith.truncf %311 : vector<16x32xf32> to vector<16x32xbf16>
    %c272_174 = arith.constant 272 : index
    %c0_175 = arith.constant 0 : index
    %313 = vector.load %arg8[%c272_174, %c0_175] : memref<432x32xbf16, #tpu.memory_space<vmem>>, vector<16x32xbf16>
    tpu.vector_store %arg8[%c272_174, %c0_175], %312 {strides = array<i32>} : memref<432x32xbf16, #tpu.memory_space<vmem>>, vector<16x32xbf16>,
    %314 = vector.extract_strided_slice %259 {offsets = [0, 576], sizes = [16, 32], strides = [1, 1]} : vector<16x864xf32> to vector<16x32xf32>
    %315 = arith.truncf %314 : vector<16x32xf32> to vector<16x32xbf16>
    %c288_176 = arith.constant 288 : index
    %c0_177 = arith.constant 0 : index
    %316 = vector.load %arg8[%c288_176, %c0_177] : memref<432x32xbf16, #tpu.memory_space<vmem>>, vector<16x32xbf16>
    tpu.vector_store %arg8[%c288_176, %c0_177], %315 {strides = array<i32>} : memref<432x32xbf16, #tpu.memory_space<vmem>>, vector<16x32xbf16>,
    %317 = vector.extract_strided_slice %259 {offsets = [0, 608], sizes = [16, 32], strides = [1, 1]} : vector<16x864xf32> to vector<16x32xf32>
    %318 = arith.truncf %317 : vector<16x32xf32> to vector<16x32xbf16>
    %c304_178 = arith.constant 304 : index
    %c0_179 = arith.constant 0 : index
    %319 = vector.load %arg8[%c304_178, %c0_179] : memref<432x32xbf16, #tpu.memory_space<vmem>>, vector<16x32xbf16>
    tpu.vector_store %arg8[%c304_178, %c0_179], %318 {strides = array<i32>} : memref<432x32xbf16, #tpu.memory_space<vmem>>, vector<16x32xbf16>,
    %320 = vector.extract_strided_slice %259 {offsets = [0, 640], sizes = [16, 32], strides = [1, 1]} : vector<16x864xf32> to vector<16x32xf32>
    %321 = arith.truncf %320 : vector<16x32xf32> to vector<16x32xbf16>
    %c320_180 = arith.constant 320 : index
    %c0_181 = arith.constant 0 : index
    %322 = vector.load %arg8[%c320_180, %c0_181] : memref<432x32xbf16, #tpu.memory_space<vmem>>, vector<16x32xbf16>
    tpu.vector_store %arg8[%c320_180, %c0_181], %321 {strides = array<i32>} : memref<432x32xbf16, #tpu.memory_space<vmem>>, vector<16x32xbf16>,
    %323 = vector.extract_strided_slice %259 {offsets = [0, 672], sizes = [16, 32], strides = [1, 1]} : vector<16x864xf32> to vector<16x32xf32>
    %324 = arith.truncf %323 : vector<16x32xf32> to vector<16x32xbf16>
    %c336_182 = arith.constant 336 : index
    %c0_183 = arith.constant 0 : index
    %325 = vector.load %arg8[%c336_182, %c0_183] : memref<432x32xbf16, #tpu.memory_space<vmem>>, vector<16x32xbf16>
    tpu.vector_store %arg8[%c336_182, %c0_183], %324 {strides = array<i32>} : memref<432x32xbf16, #tpu.memory_space<vmem>>, vector<16x32xbf16>,
    %326 = vector.extract_strided_slice %259 {offsets = [0, 704], sizes = [16, 32], strides = [1, 1]} : vector<16x864xf32> to vector<16x32xf32>
    %327 = arith.truncf %326 : vector<16x32xf32> to vector<16x32xbf16>
    %c352_184 = arith.constant 352 : index
    %c0_185 = arith.constant 0 : index
    %328 = vector.load %arg8[%c352_184, %c0_185] : memref<432x32xbf16, #tpu.memory_space<vmem>>, vector<16x32xbf16>
    tpu.vector_store %arg8[%c352_184, %c0_185], %327 {strides = array<i32>} : memref<432x32xbf16, #tpu.memory_space<vmem>>, vector<16x32xbf16>,
    %329 = vector.extract_strided_slice %259 {offsets = [0, 736], sizes = [16, 32], strides = [1, 1]} : vector<16x864xf32> to vector<16x32xf32>
    %330 = arith.truncf %329 : vector<16x32xf32> to vector<16x32xbf16>
    %c368_186 = arith.constant 368 : index
    %c0_187 = arith.constant 0 : index
    %331 = vector.load %arg8[%c368_186, %c0_187] : memref<432x32xbf16, #tpu.memory_space<vmem>>, vector<16x32xbf16>
    tpu.vector_store %arg8[%c368_186, %c0_187], %330 {strides = array<i32>} : memref<432x32xbf16, #tpu.memory_space<vmem>>, vector<16x32xbf16>,
    %332 = vector.extract_strided_slice %259 {offsets = [0, 768], sizes = [16, 32], strides = [1, 1]} : vector<16x864xf32> to vector<16x32xf32>
    %333 = arith.truncf %332 : vector<16x32xf32> to vector<16x32xbf16>
    %c384_188 = arith.constant 384 : index
    %c0_189 = arith.constant 0 : index
    %334 = vector.load %arg8[%c384_188, %c0_189] : memref<432x32xbf16, #tpu.memory_space<vmem>>, vector<16x32xbf16>
    tpu.vector_store %arg8[%c384_188, %c0_189], %333 {strides = array<i32>} : memref<432x32xbf16, #tpu.memory_space<vmem>>, vector<16x32xbf16>,
    %335 = vector.extract_strided_slice %259 {offsets = [0, 800], sizes = [16, 32], strides = [1, 1]} : vector<16x864xf32> to vector<16x32xf32>
    %336 = arith.truncf %335 : vector<16x32xf32> to vector<16x32xbf16>
    %c400_190 = arith.constant 400 : index
    %c0_191 = arith.constant 0 : index
    %337 = vector.load %arg8[%c400_190, %c0_191] : memref<432x32xbf16, #tpu.memory_space<vmem>>, vector<16x32xbf16>
    tpu.vector_store %arg8[%c400_190, %c0_191], %336 {strides = array<i32>} : memref<432x32xbf16, #tpu.memory_space<vmem>>, vector<16x32xbf16>,
    %338 = vector.extract_strided_slice %259 {offsets = [0, 832], sizes = [16, 32], strides = [1, 1]} : vector<16x864xf32> to vector<16x32xf32>
    %339 = arith.truncf %338 : vector<16x32xf32> to vector<16x32xbf16>
    %c416_192 = arith.constant 416 : index
    %c0_193 = arith.constant 0 : index
    %340 = vector.load %arg8[%c416_192, %c0_193] : memref<432x32xbf16, #tpu.memory_space<vmem>>, vector<16x32xbf16>
    tpu.vector_store %arg8[%c416_192, %c0_193], %339 {strides = array<i32>} : memref<432x32xbf16, #tpu.memory_space<vmem>>, vector<16x32xbf16>,
    %c0_194 = arith.constant 0 : index
    %c0_195 = arith.constant 0 : index
    %341 = vector.load %arg8[%c0_194, %c0_195] : memref<432x32xbf16, #tpu.memory_space<vmem>>, vector<432x32xbf16>
    %cst_196 = arith.constant dense<0.000000e+00> : vector<16x32xf32>
    %342 = tpu.matmul %1, %341, %cst_196 {dimension_numbers = #tpu.dot_dimension_numbers<[1], [0], [0], [1], [0, 0, 1, 1], [], []>} : vector<16x432xbf16>, vector<432x32xbf16>, vector<16x32xf32> -> vector<16x32xf32>
    %c2_197 = arith.constant 2 : index
    %c0_198 = arith.constant 0 : index
    %c0_199 = arith.constant 0 : index
    %343 = vector.load %arg3[%c2_197, %c0_198, %c0_199] : memref<3x32x32xbf16, #tpu.memory_space<vmem>>, vector<1x32x32xbf16>
    %344 = vector.shape_cast %343 : vector<1x32x32xbf16> to vector<32x32xbf16>
    %cst_200 = arith.constant dense<0.000000e+00> : vector<16x32xf32>
    %345 = tpu.matmul %256, %344, %cst_200 {dimension_numbers = #tpu.dot_dimension_numbers<[1], [0], [0], [1], [0, 0, 1, 1], [], []>} : vector<16x32xbf16>, vector<32x32xbf16>, vector<16x32xf32> -> vector<16x32xf32>
    %346 = arith.addf %342, %345 : vector<16x32xf32>
    %c2_201 = arith.constant 2 : index
    %c0_202 = arith.constant 0 : index
    %c0_203 = arith.constant 0 : index
    %347 = vector.load %arg4[%c2_201, %c0_202, %c0_203] : memref<3x1x32xf32, #tpu.memory_space<vmem>>, vector<1x1x32xf32>
    %348 = vector.shape_cast %347 : vector<1x1x32xf32> to vector<1x32xf32>
    %349 = vector.broadcast %348 : vector<1x32xf32> to vector<16x32xf32>
    %350 = arith.addf %346, %349 : vector<16x32xf32>
    %351 = arith.addf %350, %255 : vector<16x32xf32>
    %cst_204 = arith.constant dense<0.000000e+00> : vector<32xf32>
    %352 = vector.multi_reduction <add>, %351, %cst_204 [0] : vector<16x32xf32> to vector<32xf32>
    %353 = vector.shape_cast %352 : vector<32xf32> to vector<1x32xf32>
    %cst_205 = arith.constant 1.600000e+01 : f32
    %354 = vector.broadcast %cst_205 : f32 to vector<1x32xf32>
    %355 = arith.divf %353, %354 : vector<1x32xf32>
    %356 = vector.broadcast %355 : vector<1x32xf32> to vector<16x32xf32>
    %357 = arith.subf %351, %356 : vector<16x32xf32>
    %358 = arith.mulf %357, %357 : vector<16x32xf32>
    %cst_206 = arith.constant dense<0.000000e+00> : vector<32xf32>
    %359 = vector.multi_reduction <add>, %358, %cst_206 [0] : vector<16x32xf32> to vector<32xf32>
    %360 = vector.shape_cast %359 : vector<32xf32> to vector<1x32xf32>
    %cst_207 = arith.constant 1.600000e+01 : f32
    %361 = vector.broadcast %cst_207 : f32 to vector<1x32xf32>
    %362 = arith.divf %360, %361 : vector<1x32xf32>
    %c2_208 = arith.constant 2 : index
    %c0_209 = arith.constant 0 : index
    %c0_210 = arith.constant 0 : index
    %363 = vector.load %arg5[%c2_208, %c0_209, %c0_210] : memref<3x1x32xf32, #tpu.memory_space<vmem>>, vector<1x1x32xf32>
    %364 = vector.shape_cast %363 : vector<1x1x32xf32> to vector<1x32xf32>
    %365 = vector.broadcast %355 : vector<1x32xf32> to vector<16x32xf32>
    %366 = arith.subf %351, %365 : vector<16x32xf32>
    %367 = vector.broadcast %364 : vector<1x32xf32> to vector<16x32xf32>
    %368 = arith.mulf %367, %366 : vector<16x32xf32>
    %cst_211 = arith.constant 9.99999974E-6 : f32
    %369 = vector.broadcast %cst_211 : f32 to vector<1x32xf32>
    %370 = arith.addf %362, %369 : vector<1x32xf32>
    %371 = math.rsqrt %370 : vector<1x32xf32>
    %372 = vector.broadcast %371 : vector<1x32xf32> to vector<16x32xf32>
    %373 = arith.mulf %368, %372 : vector<16x32xf32>
    %c2_212 = arith.constant 2 : index
    %c0_213 = arith.constant 0 : index
    %c0_214 = arith.constant 0 : index
    %374 = vector.load %arg6[%c2_212, %c0_213, %c0_214] : memref<3x1x32xf32, #tpu.memory_space<vmem>>, vector<1x1x32xf32>
    %375 = vector.shape_cast %374 : vector<1x1x32xf32> to vector<1x32xf32>
    %376 = vector.broadcast %375 : vector<1x32xf32> to vector<16x32xf32>
    %377 = arith.addf %373, %376 : vector<16x32xf32>
    %c0_215 = arith.constant 0 : index
    %c0_216 = arith.constant 0 : index
    %378 = vector.load %arg7[%c0_215, %c0_216] : memref<16x32xf32, #tpu.memory_space<vmem>>, vector<16x32xf32>
    tpu.vector_store %arg7[%c0_215, %c0_216], %377 {strides = array<i32>} : memref<16x32xf32, #tpu.memory_space<vmem>>, vector<16x32xf32>,
    return
  }
}

</mosaic_0001>

<llo_original>
// kernel: tpu_custom_call.1
$region0: #{tpu_custom_call.1}
  #allocation0 [shape = 'u32[]', space=smem, size = 0x4, offset = 0x4, fixed_abs, tag = 'smem constant byte address 0x4 - core index']
  #allocation1 [shape = 'u32[144,128]{1,0:T(1,128)}', space=vmem, size = 0x12000, scoped, tag = 'internal scratch']
  #allocation2 [shape = 'bf16[432,32]{1,0:T(8,128)(2,1)}', space=vmem, size = 0x1b000, scoped, tag = 'scratch operand']
  %s0 = inlined_call_operand.hbm [shape: f32[16,32], index: 0, kind: input, shape index: {}]
  %s1 = inlined_call_operand.hbm [shape: bf16[16,432], index: 1, kind: input, shape index: {}]
  %s2 = inlined_call_operand.hbm [shape: bf16[3,32,864], index: 2, kind: input, shape index: {}]
  %s3 = inlined_call_operand.hbm [shape: bf16[3,32,32], index: 3, kind: input, shape index: {}]
  %s4 = inlined_call_operand.vmem [shape: f32[3,1,32], index: 4, kind: input, shape index: {}]
  %s5 = inlined_call_operand.vmem [shape: f32[3,1,32], index: 5, kind: input, shape index: {}]
  %s6 = inlined_call_operand.vmem [shape: f32[3,1,32], index: 6, kind: input, shape index: {}]
  %s7 = inlined_call_operand.hbm [shape: f32[16,32], index: 7, kind: output, shape index: {}]
  %s8 = sld [smem:[#allocation0]]
  $region54: #{tpu_custom_call.1} parent=0
    _
  %s10 = ssub.s32 1, %s8
  %s11 = scalar_select 0, %s10, %s8
  $region1: #{tpu_custom_call.1} parent=0
    #allocation3 [shape = 'u8[8192]{0}', space=vmem, size = 0x2000, scoped, tag = 'input window, operand 0, single buffered']
    #allocation4 [shape = 's32[1]{0}', space=sflag, size = 0x4, scoped, tag = 'scoped memory for tpu_custom_call.1']
    #allocation5 [shape = 's32[1]{0}', space=sflag, size = 0x4, scoped, tag = 'scoped memory for tpu_custom_call.1']
    #allocation6 [shape = 'u8[16384]{0}', space=vmem, size = 0x4000, scoped, tag = 'input window, operand 1, single buffered']
    #allocation7 [shape = 's32[1]{0}', space=sflag, size = 0x4, scoped, tag = 'scoped memory for tpu_custom_call.1']
    #allocation8 [shape = 'u8[172032]{0}', space=vmem, size = 0x2a000, scoped, tag = 'input window, operand 2, single buffered']
    #allocation9 [shape = 'u8[24576]{0}', space=vmem, size = 0x6000, scoped, tag = 'input window, operand 3, single buffered']
    #allocation10 [shape = 's32[1]{0}', space=sflag, size = 0x4, scoped, tag = 'scoped memory for tpu_custom_call.1']
    #allocation11 [shape = 'u8[8192]{0}', space=vmem, size = 0x2000, scoped, tag = 'output window, operand 0, single buffered']
    %12 = vsyncpa [#allocation4], 0
    %13 = vsyncpa [#allocation7], 0
    %14 = vsyncpa [#allocation10], 0
    %15 = vsyncpa [#allocation5], 0
    // Predicated region
    $region2: #{tpu_custom_call.1} parent=1 // pred_check
      _
    $region3: #{tpu_custom_call.1} parent=1 // pred_check_branch
      %17 = sbr.rel (0) target = $region5
    $region4: #{tpu_custom_call.1} parent=1 // pred_region
      %s19 = ssub.s32 256, 256
      %20 = vsyncadd [#allocation4], %s19
      %s21 = sshll.u32 [#allocation3], 4
      %s22 = int_to_ptr.vmem [resolvable:$true] %s21
      %27 = dma.hbm_to_vmem [thread:$0]  %s0, 256, %s22, [#allocation4], 128, 128, 8
    $region5: #{tpu_custom_call.1} parent=1 // pred_fallthru
      _
    // Predicated region
    $region6: #{tpu_custom_call.1} parent=1 // pred_check
      _
    $region7: #{tpu_custom_call.1} parent=1 // pred_check_branch
      %29 = sbr.rel (0) target = $region9
    $region8: #{tpu_custom_call.1} parent=1 // pred_region
      %s31 = ssub.s32 512, 512
      %32 = vsyncadd [#allocation7], %s31
      %s33 = sshll.u32 [#allocation6], 4
      %s34 = int_to_ptr.vmem [resolvable:$true] %s33
      %39 = dma.hbm_to_vmem [thread:$0]  %s1, 512, %s34, [#allocation7], 256, 256, 16
    $region9: #{tpu_custom_call.1} parent=1 // pred_fallthru
      _
    // Predicated region
    $region10: #{tpu_custom_call.1} parent=1 // pred_check
      _
    $region11: #{tpu_custom_call.1} parent=1 // pred_check_branch
      %41 = sbr.rel (0) target = $region13
    $region12: #{tpu_custom_call.1} parent=1 // pred_region
      %s43 = ssub.s32 5376, 5376
      %44 = vsyncadd [#allocation7], %s43
      %s45 = sshll.u32 [#allocation8], 4
      %s46 = int_to_ptr.vmem [resolvable:$true] %s45
      %51 = dma.hbm_to_vmem [thread:$0]  %s2, 5376, %s46, [#allocation7], 448, 448, 28
    $region13: #{tpu_custom_call.1} parent=1 // pred_fallthru
      _
    // Predicated region
    $region14: #{tpu_custom_call.1} parent=1 // pred_check
      _
    $region15: #{tpu_custom_call.1} parent=1 // pred_check_branch
      %53 = sbr.rel (0) target = $region17
    $region16: #{tpu_custom_call.1} parent=1 // pred_region
      %s55 = ssub.s32 768, 768
      %56 = vsyncadd [#allocation10], %s55
      %s57 = sshll.u32 [#allocation9], 4
      %s58 = int_to_ptr.vmem [resolvable:$true] %s57
      %63 = dma.hbm_to_vmem [thread:$0]  %s3, 768, %s58, [#allocation10], 64, 64, 4
    $region17: #{tpu_custom_call.1} parent=1 // pred_fallthru
      _
    // Predicated region
    $region18: #{tpu_custom_call.1} parent=1 // pred_check
      _
    $region19: #{tpu_custom_call.1} parent=1 // pred_check_branch
      %65 = sbr.rel (0) target = $region21
    $region20: #{tpu_custom_call.1} parent=1 // pred_region
      _
    $region21: #{tpu_custom_call.1} parent=1 // pred_fallthru
      _
    // Predicated region
    $region22: #{tpu_custom_call.1} parent=1 // pred_check
      _
    $region23: #{tpu_custom_call.1} parent=1 // pred_check_branch
      %67 = sbr.rel (0) target = $region25
    $region24: #{tpu_custom_call.1} parent=1 // pred_region
      _
    $region25: #{tpu_custom_call.1} parent=1 // pred_fallthru
      _
    // Predicated region
    $region26: #{tpu_custom_call.1} parent=1 // pred_check
      _
    $region27: #{tpu_custom_call.1} parent=1 // pred_check_branch
      %69 = sbr.rel (0) target = $region29
    $region28: #{tpu_custom_call.1} parent=1 // pred_region
      _
    $region29: #{tpu_custom_call.1} parent=1 // pred_fallthru
      _
    // Predicated region
    $region30: #{tpu_custom_call.1} parent=1 // pred_check
      _
    $region31: #{tpu_custom_call.1} parent=1 // pred_check_branch
      %71 = sbr.rel (0) target = $region33
    $region32: #{tpu_custom_call.1} parent=1 // pred_region
      %72 = dma.done [#allocation4], 256
    $region33: #{tpu_custom_call.1} parent=1 // pred_fallthru
      _
    // Predicated region
    $region34: #{tpu_custom_call.1} parent=1 // pred_check
      _
    $region35: #{tpu_custom_call.1} parent=1 // pred_check_branch
      %74 = sbr.rel (0) target = $region37
    $region36: #{tpu_custom_call.1} parent=1 // pred_region
      %75 = dma.done [#allocation7], 512
    $region37: #{tpu_custom_call.1} parent=1 // pred_fallthru
      _
    // Predicated region
    $region38: #{tpu_custom_call.1} parent=1 // pred_check
      _
    $region39: #{tpu_custom_call.1} parent=1 // pred_check_branch
      %77 = sbr.rel (0) target = $region41
    $region40: #{tpu_custom_call.1} parent=1 // pred_region
      %78 = dma.done [#allocation7], 5376
    $region41: #{tpu_custom_call.1} parent=1 // pred_fallthru
      _
    // Predicated region
    $region42: #{tpu_custom_call.1} parent=1 // pred_check
      _
    $region43: #{tpu_custom_call.1} parent=1 // pred_check_branch
      %80 = sbr.rel (0) target = $region45
    $region44: #{tpu_custom_call.1} parent=1 // pred_region
      %81 = dma.done [#allocation10], 768
    $region45: #{tpu_custom_call.1} parent=1 // pred_fallthru
      _
    %v83 = vld [vmem:[#allocation3] sm:$0xff]
    %v84 = vld [vmem:[#allocation3 + $0x8] sm:$0xff]
    %v85 = vld [vmem:[#allocation6] sm:$0xff]
    %v86 = vld [vmem:[#allocation6 + $0x8] sm:$0xff]
    %v87 = vld [vmem:[#allocation6 + $0x10] sm:$0xff]
    %v88 = vld [vmem:[#allocation6 + $0x18] sm:$0xff]
    %v89 = vpack.c.bf16 %v84, %v83
    %v90 = vld [vmem:[#allocation8] sm:$0xff]
    %v91 = vld [vmem:[#allocation8 + $0x8] sm:$0xff]
    %v92 = vld [vmem:[#allocation8 + $0x10] sm:$0xff]
    %v93 = vld [vmem:[#allocation8 + $0x18] sm:$0xf]
    %v94 = vld [vmem:[#allocation8 + $0x1c] sm:$0xff]
    %v95 = vld [vmem:[#allocation8 + $0x24] sm:$0xff]
    %v96 = vld [vmem:[#allocation8 + $0x2c] sm:$0xff]
    %v97 = vld [vmem:[#allocation8 + $0x34] sm:$0xf]
    %v98 = vld [vmem:[#allocation8 + $0x38] sm:$0xff]
    %v99 = vld [vmem:[#allocation8 + $0x40] sm:$0xff]
    %v100 = vld [vmem:[#allocation8 + $0x48] sm:$0xff]
    %v101 = vld [vmem:[#allocation8 + $0x50] sm:$0xf]
    %v102 = vld [vmem:[#allocation8 + $0x54] sm:$0xff]
    %v103 = vld [vmem:[#allocation8 + $0x5c] sm:$0xff]
    %v104 = vld [vmem:[#allocation8 + $0x64] sm:$0xff]
    %v105 = vld [vmem:[#allocation8 + $0x6c] sm:$0xf]
    %v122 = vunpack.c.l.b16 %v90
    %v123 = vunpack.c.h.b16 %v90
    %v124 = vunpack.c.l.b16 %v91
    %v125 = vunpack.c.h.b16 %v91
    %v126 = vunpack.c.l.b16 %v92
    %v127 = vunpack.c.h.b16 %v92
    %v128 = vunpack.c.l.b16 %v93
    %v129 = vunpack.c.l.b16 %v94
    %v130 = vunpack.c.h.b16 %v94
    %v131 = vunpack.c.l.b16 %v95
    %v132 = vunpack.c.h.b16 %v95
    %v133 = vunpack.c.l.b16 %v96
    %v134 = vunpack.c.h.b16 %v96
    %v135 = vunpack.c.l.b16 %v97
    %v136 = vunpack.c.l.b16 %v98
    %v137 = vunpack.c.h.b16 %v98
    %v138 = vunpack.c.l.b16 %v99
    %v139 = vunpack.c.h.b16 %v99
    %v140 = vunpack.c.l.b16 %v100
    %v141 = vunpack.c.h.b16 %v100
    %v142 = vunpack.c.l.b16 %v101
    %v143 = vunpack.c.l.b16 %v102
    %v144 = vunpack.c.h.b16 %v102
    %v145 = vunpack.c.l.b16 %v103
    %v146 = vunpack.c.h.b16 %v103
    %v147 = vunpack.c.l.b16 %v104
    %v148 = vunpack.c.h.b16 %v104
    %v149 = vunpack.c.l.b16 %v105
    %v150 = vpack.c.b16 %v129, %v122
    %v151 = vpack.c.b16 %v130, %v123
    %v152 = vpack.c.b16 %v131, %v124
    %v153 = vpack.c.b16 %v132, %v125
    %v154 = vpack.c.b16 %v133, %v126
    %v155 = vpack.c.b16 %v134, %v127
    %v156 = vpack.c.b16 %v135, %v128
    %v157 = vpack.c.b16 %v143, %v136
    %v158 = vpack.c.b16 %v144, %v137
    %v159 = vpack.c.b16 %v145, %v138
    %v160 = vpack.c.b16 %v146, %v139
    %v161 = vpack.c.b16 %v147, %v140
    %v162 = vpack.c.b16 %v148, %v141
    %v163 = vpack.c.b16 %v149, %v142
    %vm178 = vcmask 261120
    %v180 = vsel %vm178, %v89, 0
    %182 = vmatprep.subr.bf16.mxu0 0
    %183 = vmatpush1.bf16.msra.mxu0 0
    %184 = vmatprep.subr.bf16.mxu0 0
    %185 = vmatpush1.bf16.msra.mxu0 0
    %186 = vmatprep.subr.bf16.mxu0 0
    %187 = vmatpush1.bf16.msra.mxu0 0
    %188 = vmatprep.subr.bf16.mxu0 0
    %189 = vmatpush1.bf16.msra.mxu0 0
    %190 = vmatprep.subr.bf16.mxu0 0
    %191 = vmatpush1.bf16.msra.mxu0 0
    %192 = vmatprep.subr.bf16.mxu0 0
    %193 = vmatpush1.bf16.msra.mxu0 0
    %194 = vmatprep.subr.bf16.mxu0 %v158
    %195 = vmatpush1.bf16.msra.mxu0 %v157
    %196 = vmatprep.subr.bf16.mxu0 %v151
    %197 = vmatpush1.bf16.msra.mxu0 %v150
    %198 = vmatprep.subr.bf16.mxu0 0
    %199 = vmatpush2.bf16.msra.mxu0 0
    %200 = vmatprep.subr.bf16.mxu0 0
    %201 = vmatpush2.bf16.msra.mxu0 0
    %202 = vmatprep.subr.bf16.mxu0 0
    %203 = vmatpush2.bf16.msra.mxu0 0
    %204 = vmatprep.subr.bf16.mxu0 0
    %205 = vmatpush2.bf16.msra.mxu0 0
    %206 = vmatprep.subr.bf16.mxu0 0
    %207 = vmatpush2.bf16.msra.mxu0 0
    %208 = vmatprep.subr.bf16.mxu0 0
    %209 = vmatpush2.bf16.msra.mxu0 0
    %210 = vmatprep.subr.bf16.mxu0 0
    %211 = vmatpush2.bf16.msra.mxu0 0
    %212 = vmatprep.subr.bf16.mxu0 0
    %213 = vmatpush2.bf16.msra.mxu0 0
    %214 = vmatprep.mubr.bf16.mxu0 0
    %215 = vmatmul.mubr.bf16.gmra.mxu0 %v180
    %v216 = vpop.f32.mrf.mxu0
    %v217 = vadd.f32 0.0, %v216
    %v218 = vpop.f32.mrf.mxu0
    %v219 = vadd.f32 0.0, %v218
    %v220 = vpop.f32.mrf.mxu0
    %v221 = vadd.f32 0.0, %v220
    %v222 = vpop.f32.mrf.mxu0
    %v223 = vadd.f32 0.0, %v222
    %224 = vdwg.mxu0
    %225 = vmatprep.subr.bf16.mxu0 0
    %226 = vmatpush1.bf16.msra.mxu0 0
    %227 = vmatprep.subr.bf16.mxu0 0
    %228 = vmatpush1.bf16.msra.mxu0 0
    %229 = vmatprep.subr.bf16.mxu0 0
    %230 = vmatpush1.bf16.msra.mxu0 0
    %231 = vmatprep.subr.bf16.mxu0 0
    %232 = vmatpush1.bf16.msra.mxu0 0
    %233 = vmatprep.subr.bf16.mxu0 0
    %234 = vmatpush1.bf16.msra.mxu0 0
    %235 = vmatprep.subr.bf16.mxu0 0
    %236 = vmatpush1.bf16.msra.mxu0 0
    %237 = vmatprep.subr.bf16.mxu0 %v160
    %238 = vmatpush1.bf16.msra.mxu0 %v159
    %239 = vmatprep.subr.bf16.mxu0 %v153
    %240 = vmatpush1.bf16.msra.mxu0 %v152
    %241 = vmatprep.subr.bf16.mxu0 0
    %242 = vmatpush2.bf16.msra.mxu0 0
    %243 = vmatprep.subr.bf16.mxu0 0
    %244 = vmatpush2.bf16.msra.mxu0 0
    %245 = vmatprep.subr.bf16.mxu0 0
    %246 = vmatpush2.bf16.msra.mxu0 0
    %247 = vmatprep.subr.bf16.mxu0 0
    %248 = vmatpush2.bf16.msra.mxu0 0
    %249 = vmatprep.subr.bf16.mxu0 0
    %250 = vmatpush2.bf16.msra.mxu0 0
    %251 = vmatprep.subr.bf16.mxu0 0
    %252 = vmatpush2.bf16.msra.mxu0 0
    %253 = vmatprep.subr.bf16.mxu0 0
    %254 = vmatpush2.bf16.msra.mxu0 0
    %255 = vmatprep.subr.bf16.mxu0 0
    %256 = vmatpush2.bf16.msra.mxu0 0
    %257 = vmatprep.mubr.bf16.mxu0 0
    %258 = vmatmul.mubr.bf16.gmra.mxu0 %v180
    %v259 = vpop.f32.mrf.mxu0
    %v260 = vadd.f32 0.0, %v259
    %v261 = vpop.f32.mrf.mxu0
    %v262 = vadd.f32 0.0, %v261
    %v263 = vpop.f32.mrf.mxu0
    %v264 = vadd.f32 0.0, %v263
    %v265 = vpop.f32.mrf.mxu0
    %v266 = vadd.f32 0.0, %v265
    %267 = vdwg.mxu0
    %268 = vmatprep.subr.bf16.mxu0 0
    %269 = vmatpush1.bf16.msra.mxu0 0
    %270 = vmatprep.subr.bf16.mxu0 0
    %271 = vmatpush1.bf16.msra.mxu0 0
    %272 = vmatprep.subr.bf16.mxu0 0
    %273 = vmatpush1.bf16.msra.mxu0 0
    %274 = vmatprep.subr.bf16.mxu0 0
    %275 = vmatpush1.bf16.msra.mxu0 0
    %276 = vmatprep.subr.bf16.mxu0 0
    %277 = vmatpush1.bf16.msra.mxu0 0
    %278 = vmatprep.subr.bf16.mxu0 0
    %279 = vmatpush1.bf16.msra.mxu0 0
    %280 = vmatprep.subr.bf16.mxu0 %v162
    %281 = vmatpush1.bf16.msra.mxu0 %v161
    %282 = vmatprep.subr.bf16.mxu0 %v155
    %283 = vmatpush1.bf16.msra.mxu0 %v154
    %284 = vmatprep.subr.bf16.mxu0 0
    %285 = vmatpush2.bf16.msra.mxu0 0
    %286 = vmatprep.subr.bf16.mxu0 0
    %287 = vmatpush2.bf16.msra.mxu0 0
    %288 = vmatprep.subr.bf16.mxu0 0
    %289 = vmatpush2.bf16.msra.mxu0 0
    %290 = vmatprep.subr.bf16.mxu0 0
    %291 = vmatpush2.bf16.msra.mxu0 0
    %292 = vmatprep.subr.bf16.mxu0 0
    %293 = vmatpush2.bf16.msra.mxu0 0
    %294 = vmatprep.subr.bf16.mxu0 0
    %295 = vmatpush2.bf16.msra.mxu0 0
    %296 = vmatprep.subr.bf16.mxu0 0
    %297 = vmatpush2.bf16.msra.mxu0 0
    %298 = vmatprep.subr.bf16.mxu0 0
    %299 = vmatpush2.bf16.msra.mxu0 0
    %300 = vmatprep.mubr.bf16.mxu0 0
    %301 = vmatmul.mubr.bf16.gmra.mxu0 %v180
    %v302 = vpop.f32.mrf.mxu0
    %v303 = vadd.f32 0.0, %v302
    %v304 = vpop.f32.mrf.mxu0
    %v305 = vadd.f32 0.0, %v304
    %v306 = vpop.f32.mrf.mxu0
    %v307 = vadd.f32 0.0, %v306
    %v308 = vpop.f32.mrf.mxu0
    %v309 = vadd.f32 0.0, %v308
    %310 = vdwg.mxu0
    %311 = vmatprep.subr.bf16.mxu0 0
    %312 = vmatpush1.bf16.msra.mxu0 0
    %313 = vmatprep.subr.bf16.mxu0 0
    %314 = vmatpush1.bf16.msra.mxu0 0
    %315 = vmatprep.subr.bf16.mxu0 0
    %316 = vmatpush1.bf16.msra.mxu0 0
    %317 = vmatprep.subr.bf16.mxu0 0
    %318 = vmatpush1.bf16.msra.mxu0 0
    %319 = vmatprep.subr.bf16.mxu0 0
    %320 = vmatpush1.bf16.msra.mxu0 0
    %321 = vmatprep.subr.bf16.mxu0 0
    %322 = vmatpush1.bf16.msra.mxu0 0
    %323 = vmatprep.subr.bf16.mxu0 0
    %324 = vmatpush1.bf16.msra.mxu0 %v163
    %325 = vmatprep.subr.bf16.mxu0 0
    %326 = vmatpush1.bf16.msra.mxu0 %v156
    %327 = vmatprep.subr.bf16.mxu0 0
    %328 = vmatpush2.bf16.msra.mxu0 0
    %329 = vmatprep.subr.bf16.mxu0 0
    %330 = vmatpush2.bf16.msra.mxu0 0
    %331 = vmatprep.subr.bf16.mxu0 0
    %332 = vmatpush2.bf16.msra.mxu0 0
    %333 = vmatprep.subr.bf16.mxu0 0
    %334 = vmatpush2.bf16.msra.mxu0 0
    %335 = vmatprep.subr.bf16.mxu0 0
    %336 = vmatpush2.bf16.msra.mxu0 0
    %337 = vmatprep.subr.bf16.mxu0 0
    %338 = vmatpush2.bf16.msra.mxu0 0
    %339 = vmatprep.subr.bf16.mxu0 0
    %340 = vmatpush2.bf16.msra.mxu0 0
    %341 = vmatprep.subr.bf16.mxu0 0
    %342 = vmatpush2.bf16.msra.mxu0 0
    %343 = vmatprep.mubr.bf16.mxu0 0
    %344 = vmatmul.mubr.bf16.gmra.mxu0 %v180
    %v345 = vpop.f32.mrf.mxu0
    %v346 = vadd.f32 0.0, %v345
    %v347 = vpop.f32.mrf.mxu0
    %v348 = vpop.f32.mrf.mxu0
    %v349 = vadd.f32 0.0, %v348
    %v350 = vpop.f32.mrf.mxu0
    %351 = vdwg.mxu0
    %v352 = vpack.c.bf16 %v221, %v217
    %v354 = vunpack.c.l.b16 %v352
    %v355 = vunpack.c.h.b16 %v352
    %v356 = vpack.c.b16 %v354, %v354
    %v357 = vpack.c.b16 %v355, %v355
    %vm360 = vcmask 257024
    %361 = vst.msk [vmem:[#allocation2] sm:$0xf] %vm360, %v356
    %362 = vst.msk [vmem:[#allocation2 + $0x4] sm:$0xf] %vm360, %v357
    %363 = vrot.lane.b32.xlu0 %v356, 96
    %v364 = vpop.permute.xlu0 %363
    %365 = vrot.lane.b32.xlu0 %v357, 96
    %v366 = vpop.permute.xlu0 %365
    %369 = vst.msk [vmem:[#allocation2 + $0x8] sm:$0xf] %vm360, %v364
    %370 = vst.msk [vmem:[#allocation2 + $0xc] sm:$0xf] %vm360, %v366
    %371 = vrot.lane.b32.xlu0 %v356, 64
    %v372 = vpop.permute.xlu0 %371
    %373 = vrot.lane.b32.xlu0 %v357, 64
    %v374 = vpop.permute.xlu0 %373
    %377 = vst.msk [vmem:[#allocation2 + $0x10] sm:$0xf] %vm360, %v372
    %378 = vst.msk [vmem:[#allocation2 + $0x14] sm:$0xf] %vm360, %v374
    %379 = vrot.lane.b32.xlu0 %v356, 32
    %v380 = vpop.permute.xlu0 %379
    %381 = vrot.lane.b32.xlu0 %v357, 32
    %v382 = vpop.permute.xlu0 %381
    %385 = vst.msk [vmem:[#allocation2 + $0x18] sm:$0xf] %vm360, %v380
    %386 = vst.msk [vmem:[#allocation2 + $0x1c] sm:$0xf] %vm360, %v382
    %v387 = vpack.c.bf16 %v223, %v219
    %v389 = vunpack.c.l.b16 %v387
    %v390 = vunpack.c.h.b16 %v387
    %v391 = vpack.c.b16 %v389, %v389
    %v392 = vpack.c.b16 %v390, %v390
    %395 = vst.msk [vmem:[#allocation2 + $0x20] sm:$0xf] %vm360, %v391
    %396 = vst.msk [vmem:[#allocation2 + $0x24] sm:$0xf] %vm360, %v392
    %397 = vrot.lane.b32.xlu0 %v391, 96
    %v398 = vpop.permute.xlu0 %397
    %399 = vrot.lane.b32.xlu0 %v392, 96
    %v400 = vpop.permute.xlu0 %399
    %403 = vst.msk [vmem:[#allocation2 + $0x28] sm:$0xf] %vm360, %v398
    %404 = vst.msk [vmem:[#allocation2 + $0x2c] sm:$0xf] %vm360, %v400
    %405 = vrot.lane.b32.xlu0 %v391, 64
    %v406 = vpop.permute.xlu0 %405
    %407 = vrot.lane.b32.xlu0 %v392, 64
    %v408 = vpop.permute.xlu0 %407
    %411 = vst.msk [vmem:[#allocation2 + $0x30] sm:$0xf] %vm360, %v406
    %412 = vst.msk [vmem:[#allocation2 + $0x34] sm:$0xf] %vm360, %v408
    %413 = vrot.lane.b32.xlu0 %v391, 32
    %v414 = vpop.permute.xlu0 %413
    %415 = vrot.lane.b32.xlu0 %v392, 32
    %v416 = vpop.permute.xlu0 %415
    %419 = vst.msk [vmem:[#allocation2 + $0x38] sm:$0xf] %vm360, %v414
    %420 = vst.msk [vmem:[#allocation2 + $0x3c] sm:$0xf] %vm360, %v416
    %v421 = vpack.c.bf16 %v264, %v260
    %v423 = vunpack.c.l.b16 %v421
    %v424 = vunpack.c.h.b16 %v421
    %v425 = vpack.c.b16 %v423, %v423
    %v426 = vpack.c.b16 %v424, %v424
    %429 = vst.msk [vmem:[#allocation2 + $0x40] sm:$0xf] %vm360, %v425
    %430 = vst.msk [vmem:[#allocation2 + $0x44] sm:$0xf] %vm360, %v426
    %431 = vrot.lane.b32.xlu0 %v425, 96
    %v432 = vpop.permute.xlu0 %431
    %433 = vrot.lane.b32.xlu0 %v426, 96
    %v434 = vpop.permute.xlu0 %433
    %437 = vst.msk [vmem:[#allocation2 + $0x48] sm:$0xf] %vm360, %v432
    %438 = vst.msk [vmem:[#allocation2 + $0x4c] sm:$0xf] %vm360, %v434
    %439 = vrot.lane.b32.xlu0 %v425, 64
    %v440 = vpop.permute.xlu0 %439
    %441 = vrot.lane.b32.xlu0 %v426, 64
    %v442 = vpop.permute.xlu0 %441
    %445 = vst.msk [vmem:[#allocation2 + $0x50] sm:$0xf] %vm360, %v440
    %446 = vst.msk [vmem:[#allocation2 + $0x54] sm:$0xf] %vm360, %v442
    %447 = vrot.lane.b32.xlu0 %v425, 32
    %v448 = vpop.permute.xlu0 %447
    %449 = vrot.lane.b32.xlu0 %v426, 32
    %v450 = vpop.permute.xlu0 %449
    %453 = vst.msk [vmem:[#allocation2 + $0x58] sm:$0xf] %vm360, %v448
    %454 = vst.msk [vmem:[#allocation2 + $0x5c] sm:$0xf] %vm360, %v450
    %v455 = vpack.c.bf16 %v266, %v262
    %v457 = vunpack.c.l.b16 %v455
    %v458 = vunpack.c.h.b16 %v455
    %v459 = vpack.c.b16 %v457, %v457
    %v460 = vpack.c.b16 %v458, %v458
    %463 = vst.msk [vmem:[#allocation2 + $0x60] sm:$0xf] %vm360, %v459
    %464 = vst.msk [vmem:[#allocation2 + $0x64] sm:$0xf] %vm360, %v460
    %465 = vrot.lane.b32.xlu0 %v459, 96
    %v466 = vpop.permute.xlu0 %465
    %467 = vrot.lane.b32.xlu0 %v460, 96
    %v468 = vpop.permute.xlu0 %467
    %471 = vst.msk [vmem:[#allocation2 + $0x68] sm:$0xf] %vm360, %v466
    %472 = vst.msk [vmem:[#allocation2 + $0x6c] sm:$0xf] %vm360, %v468
    %473 = vrot.lane.b32.xlu0 %v459, 64
    %v474 = vpop.permute.xlu0 %473
    %475 = vrot.lane.b32.xlu0 %v460, 64
    %v476 = vpop.permute.xlu0 %475
    %479 = vst.msk [vmem:[#allocation2 + $0x70] sm:$0xf] %vm360, %v474
    %480 = vst.msk [vmem:[#allocation2 + $0x74] sm:$0xf] %vm360, %v476
    %481 = vrot.lane.b32.xlu0 %v459, 32
    %v482 = vpop.permute.xlu0 %481
    %483 = vrot.lane.b32.xlu0 %v460, 32
    %v484 = vpop.permute.xlu0 %483
    %487 = vst.msk [vmem:[#allocation2 + $0x78] sm:$0xf] %vm360, %v482
    %488 = vst.msk [vmem:[#allocation2 + $0x7c] sm:$0xf] %vm360, %v484
    %v489 = vpack.c.bf16 %v307, %v303
    %v491 = vunpack.c.l.b16 %v489
    %v492 = vunpack.c.h.b16 %v489
    %v493 = vpack.c.b16 %v491, %v491
    %v494 = vpack.c.b16 %v492, %v492
    %497 = vst.msk [vmem:[#allocation2 + $0x80] sm:$0xf] %vm360, %v493
    %498 = vst.msk [vmem:[#allocation2 + $0x84] sm:$0xf] %vm360, %v494
    %499 = vrot.lane.b32.xlu0 %v493, 96
    %v500 = vpop.permute.xlu0 %499
    %501 = vrot.lane.b32.xlu0 %v494, 96
    %v502 = vpop.permute.xlu0 %501
    %505 = vst.msk [vmem:[#allocation2 + $0x88] sm:$0xf] %vm360, %v500
    %506 = vst.msk [vmem:[#allocation2 + $0x8c] sm:$0xf] %vm360, %v502
    %507 = vrot.lane.b32.xlu0 %v493, 64
    %v508 = vpop.permute.xlu0 %507
    %509 = vrot.lane.b32.xlu0 %v494, 64
    %v510 = vpop.permute.xlu0 %509
    %513 = vst.msk [vmem:[#allocation2 + $0x90] sm:$0xf] %vm360, %v508
    %514 = vst.msk [vmem:[#allocation2 + $0x94] sm:$0xf] %vm360, %v510
    %515 = vrot.lane.b32.xlu0 %v493, 32
    %v516 = vpop.permute.xlu0 %515
    %517 = vrot.lane.b32.xlu0 %v494, 32
    %v518 = vpop.permute.xlu0 %517
    %521 = vst.msk [vmem:[#allocation2 + $0x98] sm:$0xf] %vm360, %v516
    %522 = vst.msk [vmem:[#allocation2 + $0x9c] sm:$0xf] %vm360, %v518
    %v523 = vpack.c.bf16 %v309, %v305
    %v525 = vunpack.c.l.b16 %v523
    %v526 = vunpack.c.h.b16 %v523
    %v527 = vpack.c.b16 %v525, %v525
    %v528 = vpack.c.b16 %v526, %v526
    %531 = vst.msk [vmem:[#allocation2 + $0xa0] sm:$0xf] %vm360, %v527
    %532 = vst.msk [vmem:[#allocation2 + $0xa4] sm:$0xf] %vm360, %v528
    %533 = vrot.lane.b32.xlu0 %v527, 96
    %v534 = vpop.permute.xlu0 %533
    %535 = vrot.lane.b32.xlu0 %v528, 96
    %v536 = vpop.permute.xlu0 %535
    %539 = vst.msk [vmem:[#allocation2 + $0xa8] sm:$0xf] %vm360, %v534
    %540 = vst.msk [vmem:[#allocation2 + $0xac] sm:$0xf] %vm360, %v536
    %541 = vrot.lane.b32.xlu0 %v527, 64
    %v542 = vpop.permute.xlu0 %541
    %543 = vrot.lane.b32.xlu0 %v528, 64
    %v544 = vpop.permute.xlu0 %543
    %547 = vst.msk [vmem:[#allocation2 + $0xb0] sm:$0xf] %vm360, %v542
    %548 = vst.msk [vmem:[#allocation2 + $0xb4] sm:$0xf] %vm360, %v544
    %549 = vrot.lane.b32.xlu0 %v527, 32
    %v550 = vpop.permute.xlu0 %549
    %551 = vrot.lane.b32.xlu0 %v528, 32
    %v552 = vpop.permute.xlu0 %551
    %555 = vst.msk [vmem:[#allocation2 + $0xb8] sm:$0xf] %vm360, %v550
    %556 = vst.msk [vmem:[#allocation2 + $0xbc] sm:$0xf] %vm360, %v552
    %v557 = vpack.c.bf16 %v349, %v346
    %v559 = vunpack.c.l.b16 %v557
    %v560 = vunpack.c.h.b16 %v557
    %v561 = vpack.c.b16 %v559, %v559
    %v562 = vpack.c.b16 %v560, %v560
    %565 = vst.msk [vmem:[#allocation2 + $0xc0] sm:$0xf] %vm360, %v561
    %566 = vst.msk [vmem:[#allocation2 + $0xc4] sm:$0xf] %vm360, %v562
    %567 = vrot.lane.b32.xlu0 %v561, 96
    %v568 = vpop.permute.xlu0 %567
    %569 = vrot.lane.b32.xlu0 %v562, 96
    %v570 = vpop.permute.xlu0 %569
    %573 = vst.msk [vmem:[#allocation2 + $0xc8] sm:$0xf] %vm360, %v568
    %574 = vst.msk [vmem:[#allocation2 + $0xcc] sm:$0xf] %vm360, %v570
    %575 = vrot.lane.b32.xlu0 %v561, 64
    %v576 = vpop.permute.xlu0 %575
    %577 = vrot.lane.b32.xlu0 %v562, 64
    %v578 = vpop.permute.xlu0 %577
    %581 = vst.msk [vmem:[#allocation2 + $0xd0] sm:$0xf] %vm360, %v576
    %582 = vst.msk [vmem:[#allocation2 + $0xd4] sm:$0xf] %vm360, %v578
    %v583 = vld [vmem:[#allocation2] sm:$0xf]
    %v584 = vld [vmem:[#allocation2 + $0x4] sm:$0xf]
    %v585 = vld [vmem:[#allocation2 + $0x8] sm:$0xf]
    %v586 = vld [vmem:[#allocation2 + $0xc] sm:$0xf]
    %v587 = vld [vmem:[#allocation2 + $0x10] sm:$0xf]
    %v588 = vld [vmem:[#allocation2 + $0x14] sm:$0xf]
    %v589 = vld [vmem:[#allocation2 + $0x18] sm:$0xf]
    %v590 = vld [vmem:[#allocation2 + $0x1c] sm:$0xf]
    %v591 = vld [vmem:[#allocation2 + $0x20] sm:$0xf]
    %v592 = vld [vmem:[#allocation2 + $0x24] sm:$0xf]
    %v593 = vld [vmem:[#allocation2 + $0x28] sm:$0xf]
    %v594 = vld [vmem:[#allocation2 + $0x2c] sm:$0xf]
    %v595 = vld [vmem:[#allocation2 + $0x30] sm:$0xf]
    %v596 = vld [vmem:[#allocation2 + $0x34] sm:$0xf]
    %v597 = vld [vmem:[#allocation2 + $0x38] sm:$0xf]
    %v598 = vld [vmem:[#allocation2 + $0x3c] sm:$0xf]
    %v599 = vld [vmem:[#allocation2 + $0x40] sm:$0xf]
    %v600 = vld [vmem:[#allocation2 + $0x44] sm:$0xf]
    %v601 = vld [vmem:[#allocation2 + $0x48] sm:$0xf]
    %v602 = vld [vmem:[#allocation2 + $0x4c] sm:$0xf]
    %v603 = vld [vmem:[#allocation2 + $0x50] sm:$0xf]
    %v604 = vld [vmem:[#allocation2 + $0x54] sm:$0xf]
    %v605 = vld [vmem:[#allocation2 + $0x58] sm:$0xf]
    %v606 = vld [vmem:[#allocation2 + $0x5c] sm:$0xf]
    %v607 = vld [vmem:[#allocation2 + $0x60] sm:$0xf]
    %v608 = vld [vmem:[#allocation2 + $0x64] sm:$0xf]
    %v609 = vld [vmem:[#allocation2 + $0x68] sm:$0xf]
    %v610 = vld [vmem:[#allocation2 + $0x6c] sm:$0xf]
    %v611 = vld [vmem:[#allocation2 + $0x70] sm:$0xf]
    %v612 = vld [vmem:[#allocation2 + $0x74] sm:$0xf]
    %v613 = vld [vmem:[#allocation2 + $0x78] sm:$0xf]
    %v614 = vld [vmem:[#allocation2 + $0x7c] sm:$0xf]
    %v615 = vld [vmem:[#allocation2 + $0x80] sm:$0xf]
    %v616 = vld [vmem:[#allocation2 + $0x84] sm:$0xf]
    %v617 = vld [vmem:[#allocation2 + $0x88] sm:$0xf]
    %v618 = vld [vmem:[#allocation2 + $0x8c] sm:$0xf]
    %v619 = vld [vmem:[#allocation2 + $0x90] sm:$0xf]
    %v620 = vld [vmem:[#allocation2 + $0x94] sm:$0xf]
    %v621 = vld [vmem:[#allocation2 + $0x98] sm:$0xf]
    %v622 = vld [vmem:[#allocation2 + $0x9c] sm:$0xf]
    %v623 = vld [vmem:[#allocation2 + $0xa0] sm:$0xf]
    %v624 = vld [vmem:[#allocation2 + $0xa4] sm:$0xf]
    %v625 = vld [vmem:[#allocation2 + $0xa8] sm:$0xf]
    %v626 = vld [vmem:[#allocation2 + $0xac] sm:$0xf]
    %v627 = vld [vmem:[#allocation2 + $0xb0] sm:$0xf]
    %v628 = vld [vmem:[#allocation2 + $0xb4] sm:$0xf]
    %v629 = vld [vmem:[#allocation2 + $0xb8] sm:$0xf]
    %v630 = vld [vmem:[#allocation2 + $0xbc] sm:$0xf]
    %v631 = vld [vmem:[#allocation2 + $0xc0] sm:$0xf]
    %v632 = vld [vmem:[#allocation2 + $0xc4] sm:$0xf]
    %v633 = vld [vmem:[#allocation2 + $0xc8] sm:$0xf]
    %v634 = vld [vmem:[#allocation2 + $0xcc] sm:$0xf]
    %v635 = vld [vmem:[#allocation2 + $0xd0] sm:$0xf]
    %v636 = vld [vmem:[#allocation2 + $0xd4] sm:$0xf]
    %v637 = vld [vmem:[#allocation9] sm:$0xf]
    %v638 = vld [vmem:[#allocation9 + $0x4] sm:$0xf]
    %v639 = vld [vmem:[#allocation9 + $0x8] sm:$0xf]
    %v640 = vld [vmem:[#allocation9 + $0xc] sm:$0xf]
    %v645 = vunpack.c.l.b16 %v637
    %v646 = vunpack.c.l.b16 %v638
    %v647 = vunpack.c.l.b16 %v639
    %v648 = vunpack.c.l.b16 %v640
    %v649 = vpack.c.b16 %v646, %v645
    %v650 = vpack.c.b16 %v648, %v647
    %653 = vmatprep.subr.bf16.mxu0 0
    %654 = vmatpush1.bf16.msra.mxu0 0
    %655 = vmatprep.subr.bf16.mxu0 0
    %656 = vmatpush1.bf16.msra.mxu0 0
    %657 = vmatprep.subr.bf16.mxu0 0
    %658 = vmatpush1.bf16.msra.mxu0 0
    %659 = vmatprep.subr.bf16.mxu0 0
    %660 = vmatpush1.bf16.msra.mxu0 0
    %661 = vmatprep.subr.bf16.mxu0 0
    %662 = vmatpush1.bf16.msra.mxu0 0
    %663 = vmatprep.subr.bf16.mxu0 0
    %664 = vmatpush1.bf16.msra.mxu0 0
    %665 = vmatprep.subr.bf16.mxu0 0
    %666 = vmatpush1.bf16.msra.mxu0 %v650
    %667 = vmatprep.subr.bf16.mxu0 0
    %668 = vmatpush1.bf16.msra.mxu0 %v649
    %669 = vmatprep.subr.bf16.mxu0 0
    %670 = vmatpush2.bf16.msra.mxu0 0
    %671 = vmatprep.subr.bf16.mxu0 0
    %672 = vmatpush2.bf16.msra.mxu0 0
    %673 = vmatprep.subr.bf16.mxu0 0
    %674 = vmatpush2.bf16.msra.mxu0 0
    %675 = vmatprep.subr.bf16.mxu0 0
    %676 = vmatpush2.bf16.msra.mxu0 0
    %677 = vmatprep.subr.bf16.mxu0 0
    %678 = vmatpush2.bf16.msra.mxu0 0
    %679 = vmatprep.subr.bf16.mxu0 0
    %680 = vmatpush2.bf16.msra.mxu0 0
    %681 = vmatprep.subr.bf16.mxu0 0
    %682 = vmatpush2.bf16.msra.mxu0 0
    %683 = vmatprep.subr.bf16.mxu0 0
    %684 = vmatpush2.bf16.msra.mxu0 0
    %685 = vmatprep.mubr.bf16.mxu0 0
    %686 = vmatmul.mubr.bf16.gmra.mxu0 %v180
    %v687 = vpop.f32.mrf.mxu0
    %v688 = vadd.f32 0.0, %v687
    %v689 = vpop.f32.mrf.mxu0
    %v690 = vpop.f32.mrf.mxu0
    %v691 = vadd.f32 0.0, %v690
    %v692 = vpop.f32.mrf.mxu0
    %693 = vdwg.mxu0
    %v698 = vunpack.c.l.b16 %v85
    %v699 = vunpack.c.h.b16 %v85
    %v700 = vunpack.c.l.b16 %v86
    %v701 = vunpack.c.h.b16 %v86
    %v702 = vunpack.c.l.b16 %v87
    %v703 = vunpack.c.h.b16 %v87
    %v704 = vunpack.c.l.b16 %v88
    %v705 = vunpack.c.h.b16 %v88
    %v706 = vpack.c.b16 %v702, %v698
    %v707 = vpack.c.b16 %v703, %v699
    %v708 = vpack.c.b16 %v704, %v700
    %v709 = vpack.c.b16 %v705, %v701
    %v767 = vunpack.c.l.b16 %v583
    %v768 = vunpack.c.l.b16 %v584
    %v769 = vunpack.c.l.b16 %v585
    %v770 = vunpack.c.l.b16 %v586
    %v771 = vunpack.c.l.b16 %v587
    %v772 = vunpack.c.l.b16 %v588
    %v773 = vunpack.c.l.b16 %v589
    %v774 = vunpack.c.l.b16 %v590
    %v775 = vunpack.c.l.b16 %v591
    %v776 = vunpack.c.l.b16 %v592
    %v777 = vunpack.c.l.b16 %v593
    %v778 = vunpack.c.l.b16 %v594
    %v779 = vunpack.c.l.b16 %v595
    %v780 = vunpack.c.l.b16 %v596
    %v781 = vunpack.c.l.b16 %v597
    %v782 = vunpack.c.l.b16 %v598
    %v783 = vunpack.c.l.b16 %v599
    %v784 = vunpack.c.l.b16 %v600
    %v785 = vunpack.c.l.b16 %v601
    %v786 = vunpack.c.l.b16 %v602
    %v787 = vunpack.c.l.b16 %v603
    %v788 = vunpack.c.l.b16 %v604
    %v789 = vunpack.c.l.b16 %v605
    %v790 = vunpack.c.l.b16 %v606
    %v791 = vunpack.c.l.b16 %v607
    %v792 = vunpack.c.l.b16 %v608
    %v793 = vunpack.c.l.b16 %v609
    %v794 = vunpack.c.l.b16 %v610
    %v795 = vunpack.c.l.b16 %v611
    %v796 = vunpack.c.l.b16 %v612
    %v797 = vunpack.c.l.b16 %v613
    %v798 = vunpack.c.l.b16 %v614
    %v799 = vunpack.c.l.b16 %v615
    %v800 = vunpack.c.l.b16 %v616
    %v801 = vunpack.c.l.b16 %v617
    %v802 = vunpack.c.l.b16 %v618
    %v803 = vunpack.c.l.b16 %v619
    %v804 = vunpack.c.l.b16 %v620
    %v805 = vunpack.c.l.b16 %v621
    %v806 = vunpack.c.l.b16 %v622
    %v807 = vunpack.c.l.b16 %v623
    %v808 = vunpack.c.l.b16 %v624
    %v809 = vunpack.c.l.b16 %v625
    %v810 = vunpack.c.l.b16 %v626
    %v811 = vunpack.c.l.b16 %v627
    %v812 = vunpack.c.l.b16 %v628
    %v813 = vunpack.c.l.b16 %v629
    %v814 = vunpack.c.l.b16 %v630
    %v815 = vunpack.c.l.b16 %v631
    %v816 = vunpack.c.l.b16 %v632
    %v817 = vunpack.c.l.b16 %v633
    %v818 = vunpack.c.l.b16 %v634
    %v819 = vunpack.c.l.b16 %v635
    %v820 = vunpack.c.l.b16 %v636
    %v821 = vpack.c.b16 %v768, %v767
    %v822 = vpack.c.b16 %v770, %v769
    %v823 = vpack.c.b16 %v772, %v771
    %v824 = vpack.c.b16 %v774, %v773
    %v825 = vpack.c.b16 %v776, %v775
    %v826 = vpack.c.b16 %v778, %v777
    %v827 = vpack.c.b16 %v780, %v779
    %v828 = vpack.c.b16 %v782, %v781
    %v829 = vpack.c.b16 %v784, %v783
    %v830 = vpack.c.b16 %v786, %v785
    %v831 = vpack.c.b16 %v788, %v787
    %v832 = vpack.c.b16 %v790, %v789
    %v833 = vpack.c.b16 %v792, %v791
    %v834 = vpack.c.b16 %v794, %v793
    %v835 = vpack.c.b16 %v796, %v795
    %v836 = vpack.c.b16 %v798, %v797
    %v837 = vpack.c.b16 %v800, %v799
    %v838 = vpack.c.b16 %v802, %v801
    %v839 = vpack.c.b16 %v804, %v803
    %v840 = vpack.c.b16 %v806, %v805
    %v841 = vpack.c.b16 %v808, %v807
    %v842 = vpack.c.b16 %v810, %v809
    %v843 = vpack.c.b16 %v812, %v811
    %v844 = vpack.c.b16 %v814, %v813
    %v845 = vpack.c.b16 %v816, %v815
    %v846 = vpack.c.b16 %v818, %v817
    %v847 = vpack.c.b16 %v820, %v819
    %vm875 = vcmask 392192
    %v877 = vsel %vm875, %v709, 0
    %879 = vmatprep.subr.bf16.mxu0 0
    %880 = vmatpush1.bf16.msra.mxu0 %v828
    %881 = vmatprep.subr.bf16.mxu0 0
    %882 = vmatpush1.bf16.msra.mxu0 %v827
    %883 = vmatprep.subr.bf16.mxu0 0
    %884 = vmatpush1.bf16.msra.mxu0 %v826
    %885 = vmatprep.subr.bf16.mxu0 0
    %886 = vmatpush1.bf16.msra.mxu0 %v825
    %887 = vmatprep.subr.bf16.mxu0 0
    %888 = vmatpush1.bf16.msra.mxu0 %v824
    %889 = vmatprep.subr.bf16.mxu0 0
    %890 = vmatpush1.bf16.msra.mxu0 %v823
    %891 = vmatprep.subr.bf16.mxu0 0
    %892 = vmatpush1.bf16.msra.mxu0 %v822
    %893 = vmatprep.subr.bf16.mxu0 0
    %894 = vmatpush1.bf16.msra.mxu0 %v821
    %895 = vmatprep.subr.bf16.mxu0 0
    %896 = vmatpush2.bf16.msra.mxu0 %v836
    %897 = vmatprep.subr.bf16.mxu0 0
    %898 = vmatpush2.bf16.msra.mxu0 %v835
    %899 = vmatprep.subr.bf16.mxu0 0
    %900 = vmatpush2.bf16.msra.mxu0 %v834
    %901 = vmatprep.subr.bf16.mxu0 0
    %902 = vmatpush2.bf16.msra.mxu0 %v833
    %903 = vmatprep.subr.bf16.mxu0 0
    %904 = vmatpush2.bf16.msra.mxu0 %v832
    %905 = vmatprep.subr.bf16.mxu0 0
    %906 = vmatpush2.bf16.msra.mxu0 %v831
    %907 = vmatprep.subr.bf16.mxu0 0
    %908 = vmatpush2.bf16.msra.mxu0 %v830
    %909 = vmatprep.subr.bf16.mxu0 0
    %910 = vmatpush2.bf16.msra.mxu0 %v829
    %911 = vmatprep.mubr.bf16.mxu0 %v707
    %912 = vmatmul.mubr.bf16.gmra.mxu0 %v706
    %v913 = vpop.f32.mrf.mxu0
    %v914 = vadd.f32 %v688, %v913
    %v915 = vpop.f32.mrf.mxu0
    %v916 = vpop.f32.mrf.mxu0
    %v917 = vadd.f32 %v691, %v916
    %v918 = vpop.f32.mrf.mxu0
    %919 = vdwg.mxu0
    %920 = vmatprep.subr.bf16.mxu0 0
    %921 = vmatpush1.bf16.msra.mxu0 %v844
    %922 = vmatprep.subr.bf16.mxu0 0
    %923 = vmatpush1.bf16.msra.mxu0 %v843
    %924 = vmatprep.subr.bf16.mxu0 0
    %925 = vmatpush1.bf16.msra.mxu0 %v842
    %926 = vmatprep.subr.bf16.mxu0 0
    %927 = vmatpush1.bf16.msra.mxu0 %v841
    %928 = vmatprep.subr.bf16.mxu0 0
    %929 = vmatpush1.bf16.msra.mxu0 %v840
    %930 = vmatprep.subr.bf16.mxu0 0
    %931 = vmatpush1.bf16.msra.mxu0 %v839
    %932 = vmatprep.subr.bf16.mxu0 0
    %933 = vmatpush1.bf16.msra.mxu0 %v838
    %934 = vmatprep.subr.bf16.mxu0 0
    %935 = vmatpush1.bf16.msra.mxu0 %v837
    %936 = vmatprep.subr.bf16.mxu0 0
    %937 = vmatpush2.bf16.msra.mxu0 0
    %938 = vmatprep.subr.bf16.mxu0 0
    %939 = vmatpush2.bf16.msra.mxu0 0
    %940 = vmatprep.subr.bf16.mxu0 0
    %941 = vmatpush2.bf16.msra.mxu0 0
    %942 = vmatprep.subr.bf16.mxu0 0
    %943 = vmatpush2.bf16.msra.mxu0 0
    %944 = vmatprep.subr.bf16.mxu0 0
    %945 = vmatpush2.bf16.msra.mxu0 0
    %946 = vmatprep.subr.bf16.mxu0 0
    %947 = vmatpush2.bf16.msra.mxu0 %v847
    %948 = vmatprep.subr.bf16.mxu0 0
    %949 = vmatpush2.bf16.msra.mxu0 %v846
    %950 = vmatprep.subr.bf16.mxu0 0
    %951 = vmatpush2.bf16.msra.mxu0 %v845
    %952 = vmatprep.mubr.bf16.mxu0 %v877
    %953 = vmatmul.mubr.bf16.gmra.mxu0 %v708
    %v954 = vpop.f32.mrf.mxu0
    %v955 = vadd.f32 %v914, %v954
    %v956 = vpop.f32.mrf.mxu0
    %v957 = vpop.f32.mrf.mxu0
    %v958 = vadd.f32 %v917, %v957
    %v959 = vpop.f32.mrf.mxu0
    %960 = vdwg.mxu0
    %v961 = vld [vmem:[%s4] sm:$0x1]
    %v963 = vlaneseq
    %v964 = vshrl.u32 %v963, 7
    %v965 = vsub.s32 0, %v964
    %v966 = vrot.slane %v961, %v965
    %v968 = vadd.f32 %v955, %v966
    %v969 = vadd.f32 %v958, %v966
    %vm970 = vcmp.gt.f32.partialorder %v968, 0.0
    %vm971 = vcmp.gt.f32.partialorder %v969, 0.0
    %v972 = vmul.f32 %v968, 0.01
    %v973 = vmul.f32 %v969, 0.01
    %v974 = vsel %vm970, %v968, %v972
    %v975 = vsel %vm971, %v969, %v973
    %v976 = vadd.f32 %v974, %v83
    %v977 = vadd.f32 %v975, %v84
    %v978 = vsel %vm178, %v976, 0.0
    %v979 = vsel %vm178, %v977, 0.0
    %v980 = vadd.f32 %v978, %v979
    %v981 = vrot.slane %v980, 4
    %v982 = vadd.f32 %v980, %v981
    %v983 = vrot.slane %v982, 2
    %v984 = vadd.f32 %v982, %v983
    %v985 = vrot.slane %v984, 1
    %v986 = vadd.f32 %v984, %v985
    %v987 = vrcp.pop 16.0
    %v988 = vmul.f32 %v986, %v987
    %v989 = vsub.f32 %v976, %v988
    %v990 = vsub.f32 %v977, %v988
    %v991 = vmul.f32 %v989, %v989
    %v992 = vmul.f32 %v990, %v990
    %v993 = vsel %vm178, %v991, 0.0
    %v994 = vsel %vm178, %v992, 0.0
    %v995 = vadd.f32 %v993, %v994
    %v996 = vrot.slane %v995, 4
    %v997 = vadd.f32 %v995, %v996
    %v998 = vrot.slane %v997, 2
    %v999 = vadd.f32 %v997, %v998
    %v1000 = vrot.slane %v999, 1
    %v1001 = vadd.f32 %v999, %v1000
    %v1002 = vmul.f32 %v1001, %v987
    %v1003 = vld [vmem:[%s5] sm:$0x1]
    %v1005 = vlaneseq
    %v1006 = vshrl.u32 %v1005, 7
    %v1007 = vsub.s32 0, %v1006
    %v1008 = vrot.slane %v1003, %v1007
    %v1010 = vmul.f32 %v1008, %v989
    %v1011 = vmul.f32 %v1008, %v990
    %v1012 = vadd.f32 %v1002, 1e-05
    %v1013 = vrsqrt.pop %v1012
    %v1014 = vmul.f32 %v1010, %v1013
    %v1015 = vmul.f32 %v1011, %v1013
    %v1016 = vld [vmem:[%s6] sm:$0x1]
    %v1018 = vlaneseq
    %v1019 = vshrl.u32 %v1018, 7
    %v1020 = vsub.s32 0, %v1019
    %v1021 = vrot.slane %v1016, %v1020
    %v1023 = vadd.f32 %v1014, %v1021
    %v1024 = vadd.f32 %v1015, %v1021
    %v1025 = vpack.c.bf16 %v1024, %v1023
    %s1026 = scalar_lea.vmem [#allocation8], 112
    %v1027 = vld [vmem:[%s1026] sm:$0xff]
    %v1028 = vld [vmem:[%s1026 + $0x8] sm:$0xff]
    %v1029 = vld [vmem:[%s1026 + $0x10] sm:$0xff]
    %v1030 = vld [vmem:[%s1026 + $0x18] sm:$0xf]
    %v1031 = vld [vmem:[%s1026 + $0x1c] sm:$0xff]
    %v1032 = vld [vmem:[%s1026 + $0x24] sm:$0xff]
    %v1033 = vld [vmem:[%s1026 + $0x2c] sm:$0xff]
    %v1034 = vld [vmem:[%s1026 + $0x34] sm:$0xf]
    %v1035 = vld [vmem:[%s1026 + $0x38] sm:$0xff]
    %v1036 = vld [vmem:[%s1026 + $0x40] sm:$0xff]
    %v1037 = vld [vmem:[%s1026 + $0x48] sm:$0xff]
    %v1038 = vld [vmem:[%s1026 + $0x50] sm:$0xf]
    %v1039 = vld [vmem:[%s1026 + $0x54] sm:$0xff]
    %v1040 = vld [vmem:[%s1026 + $0x5c] sm:$0xff]
    %v1041 = vld [vmem:[%s1026 + $0x64] sm:$0xff]
    %v1042 = vld [vmem:[%s1026 + $0x6c] sm:$0xf]
    %v1059 = vunpack.c.l.b16 %v1027
    %v1060 = vunpack.c.h.b16 %v1027
    %v1061 = vunpack.c.l.b16 %v1028
    %v1062 = vunpack.c.h.b16 %v1028
    %v1063 = vunpack.c.l.b16 %v1029
    %v1064 = vunpack.c.h.b16 %v1029
    %v1065 = vunpack.c.l.b16 %v1030
    %v1066 = vunpack.c.l.b16 %v1031
    %v1067 = vunpack.c.h.b16 %v1031
    %v1068 = vunpack.c.l.b16 %v1032
    %v1069 = vunpack.c.h.b16 %v1032
    %v1070 = vunpack.c.l.b16 %v1033
    %v1071 = vunpack.c.h.b16 %v1033
    %v1072 = vunpack.c.l.b16 %v1034
    %v1073 = vunpack.c.l.b16 %v1035
    %v1074 = vunpack.c.h.b16 %v1035
    %v1075 = vunpack.c.l.b16 %v1036
    %v1076 = vunpack.c.h.b16 %v1036
    %v1077 = vunpack.c.l.b16 %v1037
    %v1078 = vunpack.c.h.b16 %v1037
    %v1079 = vunpack.c.l.b16 %v1038
    %v1080 = vunpack.c.l.b16 %v1039
    %v1081 = vunpack.c.h.b16 %v1039
    %v1082 = vunpack.c.l.b16 %v1040
    %v1083 = vunpack.c.h.b16 %v1040
    %v1084 = vunpack.c.l.b16 %v1041
    %v1085 = vunpack.c.h.b16 %v1041
    %v1086 = vunpack.c.l.b16 %v1042
    %v1087 = vpack.c.b16 %v1066, %v1059
    %v1088 = vpack.c.b16 %v1067, %v1060
    %v1089 = vpack.c.b16 %v1068, %v1061
    %v1090 = vpack.c.b16 %v1069, %v1062
    %v1091 = vpack.c.b16 %v1070, %v1063
    %v1092 = vpack.c.b16 %v1071, %v1064
    %v1093 = vpack.c.b16 %v1072, %v1065
    %v1094 = vpack.c.b16 %v1080, %v1073
    %v1095 = vpack.c.b16 %v1081, %v1074
    %v1096 = vpack.c.b16 %v1082, %v1075
    %v1097 = vpack.c.b16 %v1083, %v1076
    %v1098 = vpack.c.b16 %v1084, %v1077
    %v1099 = vpack.c.b16 %v1085, %v1078
    %v1100 = vpack.c.b16 %v1086, %v1079
    %v1116 = vsel %vm178, %v1025, 0
    %1118 = vmatprep.subr.bf16.mxu0 0
    %1119 = vmatpush1.bf16.msra.mxu0 0
    %1120 = vmatprep.subr.bf16.mxu0 0
    %1121 = vmatpush1.bf16.msra.mxu0 0
    %1122 = vmatprep.subr.bf16.mxu0 0
    %1123 = vmatpush1.bf16.msra.mxu0 0
    %1124 = vmatprep.subr.bf16.mxu0 0
    %1125 = vmatpush1.bf16.msra.mxu0 0
    %1126 = vmatprep.subr.bf16.mxu0 0
    %1127 = vmatpush1.bf16.msra.mxu0 0
    %1128 = vmatprep.subr.bf16.mxu0 0
    %1129 = vmatpush1.bf16.msra.mxu0 0
    %1130 = vmatprep.subr.bf16.mxu0 %v1095
    %1131 = vmatpush1.bf16.msra.mxu0 %v1094
    %1132 = vmatprep.subr.bf16.mxu0 %v1088
    %1133 = vmatpush1.bf16.msra.mxu0 %v1087
    %1134 = vmatprep.subr.bf16.mxu0 0
    %1135 = vmatpush2.bf16.msra.mxu0 0
    %1136 = vmatprep.subr.bf16.mxu0 0
    %1137 = vmatpush2.bf16.msra.mxu0 0
    %1138 = vmatprep.subr.bf16.mxu0 0
    %1139 = vmatpush2.bf16.msra.mxu0 0
    %1140 = vmatprep.subr.bf16.mxu0 0
    %1141 = vmatpush2.bf16.msra.mxu0 0
    %1142 = vmatprep.subr.bf16.mxu0 0
    %1143 = vmatpush2.bf16.msra.mxu0 0
    %1144 = vmatprep.subr.bf16.mxu0 0
    %1145 = vmatpush2.bf16.msra.mxu0 0
    %1146 = vmatprep.subr.bf16.mxu0 0
    %1147 = vmatpush2.bf16.msra.mxu0 0
    %1148 = vmatprep.subr.bf16.mxu0 0
    %1149 = vmatpush2.bf16.msra.mxu0 0
    %1150 = vmatprep.mubr.bf16.mxu0 0
    %1151 = vmatmul.mubr.bf16.gmra.mxu0 %v1116
    %v1152 = vpop.f32.mrf.mxu0
    %v1153 = vadd.f32 0.0, %v1152
    %v1154 = vpop.f32.mrf.mxu0
    %v1155 = vadd.f32 0.0, %v1154
    %v1156 = vpop.f32.mrf.mxu0
    %v1157 = vadd.f32 0.0, %v1156
    %v1158 = vpop.f32.mrf.mxu0
    %v1159 = vadd.f32 0.0, %v1158
    %1160 = vdwg.mxu0
    %1161 = vmatprep.subr.bf16.mxu0 0
    %1162 = vmatpush1.bf16.msra.mxu0 0
    %1163 = vmatprep.subr.bf16.mxu0 0
    %1164 = vmatpush1.bf16.msra.mxu0 0
    %1165 = vmatprep.subr.bf16.mxu0 0
    %1166 = vmatpush1.bf16.msra.mxu0 0
    %1167 = vmatprep.subr.bf16.mxu0 0
    %1168 = vmatpush1.bf16.msra.mxu0 0
    %1169 = vmatprep.subr.bf16.mxu0 0
    %1170 = vmatpush1.bf16.msra.mxu0 0
    %1171 = vmatprep.subr.bf16.mxu0 0
    %1172 = vmatpush1.bf16.msra.mxu0 0
    %1173 = vmatprep.subr.bf16.mxu0 %v1097
    %1174 = vmatpush1.bf16.msra.mxu0 %v1096
    %1175 = vmatprep.subr.bf16.mxu0 %v1090
    %1176 = vmatpush1.bf16.msra.mxu0 %v1089
    %1177 = vmatprep.subr.bf16.mxu0 0
    %1178 = vmatpush2.bf16.msra.mxu0 0
    %1179 = vmatprep.subr.bf16.mxu0 0
    %1180 = vmatpush2.bf16.msra.mxu0 0
    %1181 = vmatprep.subr.bf16.mxu0 0
    %1182 = vmatpush2.bf16.msra.mxu0 0
    %1183 = vmatprep.subr.bf16.mxu0 0
    %1184 = vmatpush2.bf16.msra.mxu0 0
    %1185 = vmatprep.subr.bf16.mxu0 0
    %1186 = vmatpush2.bf16.msra.mxu0 0
    %1187 = vmatprep.subr.bf16.mxu0 0
    %1188 = vmatpush2.bf16.msra.mxu0 0
    %1189 = vmatprep.subr.bf16.mxu0 0
    %1190 = vmatpush2.bf16.msra.mxu0 0
    %1191 = vmatprep.subr.bf16.mxu0 0
    %1192 = vmatpush2.bf16.msra.mxu0 0
    %1193 = vmatprep.mubr.bf16.mxu0 0
    %1194 = vmatmul.mubr.bf16.gmra.mxu0 %v1116
    %v1195 = vpop.f32.mrf.mxu0
    %v1196 = vadd.f32 0.0, %v1195
    %v1197 = vpop.f32.mrf.mxu0
    %v1198 = vadd.f32 0.0, %v1197
    %v1199 = vpop.f32.mrf.mxu0
    %v1200 = vadd.f32 0.0, %v1199
    %v1201 = vpop.f32.mrf.mxu0
    %v1202 = vadd.f32 0.0, %v1201
    %1203 = vdwg.mxu0
    %1204 = vmatprep.subr.bf16.mxu0 0
    %1205 = vmatpush1.bf16.msra.mxu0 0
    %1206 = vmatprep.subr.bf16.mxu0 0
    %1207 = vmatpush1.bf16.msra.mxu0 0
    %1208 = vmatprep.subr.bf16.mxu0 0
    %1209 = vmatpush1.bf16.msra.mxu0 0
    %1210 = vmatprep.subr.bf16.mxu0 0
    %1211 = vmatpush1.bf16.msra.mxu0 0
    %1212 = vmatprep.subr.bf16.mxu0 0
    %1213 = vmatpush1.bf16.msra.mxu0 0
    %1214 = vmatprep.subr.bf16.mxu0 0
    %1215 = vmatpush1.bf16.msra.mxu0 0
    %1216 = vmatprep.subr.bf16.mxu0 %v1099
    %1217 = vmatpush1.bf16.msra.mxu0 %v1098
    %1218 = vmatprep.subr.bf16.mxu0 %v1092
    %1219 = vmatpush1.bf16.msra.mxu0 %v1091
    %1220 = vmatprep.subr.bf16.mxu0 0
    %1221 = vmatpush2.bf16.msra.mxu0 0
    %1222 = vmatprep.subr.bf16.mxu0 0
    %1223 = vmatpush2.bf16.msra.mxu0 0
    %1224 = vmatprep.subr.bf16.mxu0 0
    %1225 = vmatpush2.bf16.msra.mxu0 0
    %1226 = vmatprep.subr.bf16.mxu0 0
    %1227 = vmatpush2.bf16.msra.mxu0 0
    %1228 = vmatprep.subr.bf16.mxu0 0
    %1229 = vmatpush2.bf16.msra.mxu0 0
    %1230 = vmatprep.subr.bf16.mxu0 0
    %1231 = vmatpush2.bf16.msra.mxu0 0
    %1232 = vmatprep.subr.bf16.mxu0 0
    %1233 = vmatpush2.bf16.msra.mxu0 0
    %1234 = vmatprep.subr.bf16.mxu0 0
    %1235 = vmatpush2.bf16.msra.mxu0 0
    %1236 = vmatprep.mubr.bf16.mxu0 0
    %1237 = vmatmul.mubr.bf16.gmra.mxu0 %v1116
    %v1238 = vpop.f32.mrf.mxu0
    %v1239 = vadd.f32 0.0, %v1238
    %v1240 = vpop.f32.mrf.mxu0
    %v1241 = vadd.f32 0.0, %v1240
    %v1242 = vpop.f32.mrf.mxu0
    %v1243 = vadd.f32 0.0, %v1242
    %v1244 = vpop.f32.mrf.mxu0
    %v1245 = vadd.f32 0.0, %v1244
    %1246 = vdwg.mxu0
    %1247 = vmatprep.subr.bf16.mxu0 0
    %1248 = vmatpush1.bf16.msra.mxu0 0
    %1249 = vmatprep.subr.bf16.mxu0 0
    %1250 = vmatpush1.bf16.msra.mxu0 0
    %1251 = vmatprep.subr.bf16.mxu0 0
    %1252 = vmatpush1.bf16.msra.mxu0 0
    %1253 = vmatprep.subr.bf16.mxu0 0
    %1254 = vmatpush1.bf16.msra.mxu0 0
    %1255 = vmatprep.subr.bf16.mxu0 0
    %1256 = vmatpush1.bf16.msra.mxu0 0
    %1257 = vmatprep.subr.bf16.mxu0 0
    %1258 = vmatpush1.bf16.msra.mxu0 0
    %1259 = vmatprep.subr.bf16.mxu0 0
    %1260 = vmatpush1.bf16.msra.mxu0 %v1100
    %1261 = vmatprep.subr.bf16.mxu0 0
    %1262 = vmatpush1.bf16.msra.mxu0 %v1093
    %1263 = vmatprep.subr.bf16.mxu0 0
    %1264 = vmatpush2.bf16.msra.mxu0 0
    %1265 = vmatprep.subr.bf16.mxu0 0
    %1266 = vmatpush2.bf16.msra.mxu0 0
    %1267 = vmatprep.subr.bf16.mxu0 0
    %1268 = vmatpush2.bf16.msra.mxu0 0
    %1269 = vmatprep.subr.bf16.mxu0 0
    %1270 = vmatpush2.bf16.msra.mxu0 0
    %1271 = vmatprep.subr.bf16.mxu0 0
    %1272 = vmatpush2.bf16.msra.mxu0 0
    %1273 = vmatprep.subr.bf16.mxu0 0
    %1274 = vmatpush2.bf16.msra.mxu0 0
    %1275 = vmatprep.subr.bf16.mxu0 0
    %1276 = vmatpush2.bf16.msra.mxu0 0
    %1277 = vmatprep.subr.bf16.mxu0 0
    %1278 = vmatpush2.bf16.msra.mxu0 0
    %1279 = vmatprep.mubr.bf16.mxu0 0
    %1280 = vmatmul.mubr.bf16.gmra.mxu0 %v1116
    %v1281 = vpop.f32.mrf.mxu0
    %v1282 = vadd.f32 0.0, %v1281
    %v1283 = vpop.f32.mrf.mxu0
    %v1284 = vpop.f32.mrf.mxu0
    %v1285 = vadd.f32 0.0, %v1284
    %v1286 = vpop.f32.mrf.mxu0
    %1287 = vdwg.mxu0
    %v1288 = vpack.c.bf16 %v1157, %v1153
    %v1290 = vunpack.c.l.b16 %v1288
    %v1291 = vunpack.c.h.b16 %v1288
    %v1292 = vpack.c.b16 %v1290, %v1290
    %v1293 = vpack.c.b16 %v1291, %v1291
    %1296 = vst.msk [vmem:[#allocation2] sm:$0xf] %vm360, %v1292
    %1297 = vst.msk [vmem:[#allocation2 + $0x4] sm:$0xf] %vm360, %v1293
    %1298 = vrot.lane.b32.xlu0 %v1292, 96
    %v1299 = vpop.permute.xlu0 %1298
    %1300 = vrot.lane.b32.xlu0 %v1293, 96
    %v1301 = vpop.permute.xlu0 %1300
    %1304 = vst.msk [vmem:[#allocation2 + $0x8] sm:$0xf] %vm360, %v1299
    %1305 = vst.msk [vmem:[#allocation2 + $0xc] sm:$0xf] %vm360, %v1301
    %1306 = vrot.lane.b32.xlu0 %v1292, 64
    %v1307 = vpop.permute.xlu0 %1306
    %1308 = vrot.lane.b32.xlu0 %v1293, 64
    %v1309 = vpop.permute.xlu0 %1308
    %1312 = vst.msk [vmem:[#allocation2 + $0x10] sm:$0xf] %vm360, %v1307
    %1313 = vst.msk [vmem:[#allocation2 + $0x14] sm:$0xf] %vm360, %v1309
    %1314 = vrot.lane.b32.xlu0 %v1292, 32
    %v1315 = vpop.permute.xlu0 %1314
    %1316 = vrot.lane.b32.xlu0 %v1293, 32
    %v1317 = vpop.permute.xlu0 %1316
    %1320 = vst.msk [vmem:[#allocation2 + $0x18] sm:$0xf] %vm360, %v1315
    %1321 = vst.msk [vmem:[#allocation2 + $0x1c] sm:$0xf] %vm360, %v1317
    %v1322 = vpack.c.bf16 %v1159, %v1155
    %v1324 = vunpack.c.l.b16 %v1322
    %v1325 = vunpack.c.h.b16 %v1322
    %v1326 = vpack.c.b16 %v1324, %v1324
    %v1327 = vpack.c.b16 %v1325, %v1325
    %1330 = vst.msk [vmem:[#allocation2 + $0x20] sm:$0xf] %vm360, %v1326
    %1331 = vst.msk [vmem:[#allocation2 + $0x24] sm:$0xf] %vm360, %v1327
    %1332 = vrot.lane.b32.xlu0 %v1326, 96
    %v1333 = vpop.permute.xlu0 %1332
    %1334 = vrot.lane.b32.xlu0 %v1327, 96
    %v1335 = vpop.permute.xlu0 %1334
    %1338 = vst.msk [vmem:[#allocation2 + $0x28] sm:$0xf] %vm360, %v1333
    %1339 = vst.msk [vmem:[#allocation2 + $0x2c] sm:$0xf] %vm360, %v1335
    %1340 = vrot.lane.b32.xlu0 %v1326, 64
    %v1341 = vpop.permute.xlu0 %1340
    %1342 = vrot.lane.b32.xlu0 %v1327, 64
    %v1343 = vpop.permute.xlu0 %1342
    %1346 = vst.msk [vmem:[#allocation2 + $0x30] sm:$0xf] %vm360, %v1341
    %1347 = vst.msk [vmem:[#allocation2 + $0x34] sm:$0xf] %vm360, %v1343
    %1348 = vrot.lane.b32.xlu0 %v1326, 32
    %v1349 = vpop.permute.xlu0 %1348
    %1350 = vrot.lane.b32.xlu0 %v1327, 32
    %v1351 = vpop.permute.xlu0 %1350
    %1354 = vst.msk [vmem:[#allocation2 + $0x38] sm:$0xf] %vm360, %v1349
    %1355 = vst.msk [vmem:[#allocation2 + $0x3c] sm:$0xf] %vm360, %v1351
    %v1356 = vpack.c.bf16 %v1200, %v1196
    %v1358 = vunpack.c.l.b16 %v1356
    %v1359 = vunpack.c.h.b16 %v1356
    %v1360 = vpack.c.b16 %v1358, %v1358
    %v1361 = vpack.c.b16 %v1359, %v1359
    %1364 = vst.msk [vmem:[#allocation2 + $0x40] sm:$0xf] %vm360, %v1360
    %1365 = vst.msk [vmem:[#allocation2 + $0x44] sm:$0xf] %vm360, %v1361
    %1366 = vrot.lane.b32.xlu0 %v1360, 96
    %v1367 = vpop.permute.xlu0 %1366
    %1368 = vrot.lane.b32.xlu0 %v1361, 96
    %v1369 = vpop.permute.xlu0 %1368
    %1372 = vst.msk [vmem:[#allocation2 + $0x48] sm:$0xf] %vm360, %v1367
    %1373 = vst.msk [vmem:[#allocation2 + $0x4c] sm:$0xf] %vm360, %v1369
    %1374 = vrot.lane.b32.xlu0 %v1360, 64
    %v1375 = vpop.permute.xlu0 %1374
    %1376 = vrot.lane.b32.xlu0 %v1361, 64
    %v1377 = vpop.permute.xlu0 %1376
    %1380 = vst.msk [vmem:[#allocation2 + $0x50] sm:$0xf] %vm360, %v1375
    %1381 = vst.msk [vmem:[#allocation2 + $0x54] sm:$0xf] %vm360, %v1377
    %1382 = vrot.lane.b32.xlu0 %v1360, 32
    %v1383 = vpop.permute.xlu0 %1382
    %1384 = vrot.lane.b32.xlu0 %v1361, 32
    %v1385 = vpop.permute.xlu0 %1384
    %1388 = vst.msk [vmem:[#allocation2 + $0x58] sm:$0xf] %vm360, %v1383
    %1389 = vst.msk [vmem:[#allocation2 + $0x5c] sm:$0xf] %vm360, %v1385
    %v1390 = vpack.c.bf16 %v1202, %v1198
    %v1392 = vunpack.c.l.b16 %v1390
    %v1393 = vunpack.c.h.b16 %v1390
    %v1394 = vpack.c.b16 %v1392, %v1392
    %v1395 = vpack.c.b16 %v1393, %v1393
    %1398 = vst.msk [vmem:[#allocation2 + $0x60] sm:$0xf] %vm360, %v1394
    %1399 = vst.msk [vmem:[#allocation2 + $0x64] sm:$0xf] %vm360, %v1395
    %1400 = vrot.lane.b32.xlu0 %v1394, 96
    %v1401 = vpop.permute.xlu0 %1400
    %1402 = vrot.lane.b32.xlu0 %v1395, 96
    %v1403 = vpop.permute.xlu0 %1402
    %1406 = vst.msk [vmem:[#allocation2 + $0x68] sm:$0xf] %vm360, %v1401
    %1407 = vst.msk [vmem:[#allocation2 + $0x6c] sm:$0xf] %vm360, %v1403
    %1408 = vrot.lane.b32.xlu0 %v1394, 64
    %v1409 = vpop.permute.xlu0 %1408
    %1410 = vrot.lane.b32.xlu0 %v1395, 64
    %v1411 = vpop.permute.xlu0 %1410
    %1414 = vst.msk [vmem:[#allocation2 + $0x70] sm:$0xf] %vm360, %v1409
    %1415 = vst.msk [vmem:[#allocation2 + $0x74] sm:$0xf] %vm360, %v1411
    %1416 = vrot.lane.b32.xlu0 %v1394, 32
    %v1417 = vpop.permute.xlu0 %1416
    %1418 = vrot.lane.b32.xlu0 %v1395, 32
    %v1419 = vpop.permute.xlu0 %1418
    %1422 = vst.msk [vmem:[#allocation2 + $0x78] sm:$0xf] %vm360, %v1417
    %1423 = vst.msk [vmem:[#allocation2 + $0x7c] sm:$0xf] %vm360, %v1419
    %v1424 = vpack.c.bf16 %v1243, %v1239
    %v1426 = vunpack.c.l.b16 %v1424
    %v1427 = vunpack.c.h.b16 %v1424
    %v1428 = vpack.c.b16 %v1426, %v1426
    %v1429 = vpack.c.b16 %v1427, %v1427
    %1432 = vst.msk [vmem:[#allocation2 + $0x80] sm:$0xf] %vm360, %v1428
    %1433 = vst.msk [vmem:[#allocation2 + $0x84] sm:$0xf] %vm360, %v1429
    %1434 = vrot.lane.b32.xlu0 %v1428, 96
    %v1435 = vpop.permute.xlu0 %1434
    %1436 = vrot.lane.b32.xlu0 %v1429, 96
    %v1437 = vpop.permute.xlu0 %1436
    %1440 = vst.msk [vmem:[#allocation2 + $0x88] sm:$0xf] %vm360, %v1435
    %1441 = vst.msk [vmem:[#allocation2 + $0x8c] sm:$0xf] %vm360, %v1437
    %1442 = vrot.lane.b32.xlu0 %v1428, 64
    %v1443 = vpop.permute.xlu0 %1442
    %1444 = vrot.lane.b32.xlu0 %v1429, 64
    %v1445 = vpop.permute.xlu0 %1444
    %1448 = vst.msk [vmem:[#allocation2 + $0x90] sm:$0xf] %vm360, %v1443
    %1449 = vst.msk [vmem:[#allocation2 + $0x94] sm:$0xf] %vm360, %v1445
    %1450 = vrot.lane.b32.xlu0 %v1428, 32
    %v1451 = vpop.permute.xlu0 %1450
    %1452 = vrot.lane.b32.xlu0 %v1429, 32
    %v1453 = vpop.permute.xlu0 %1452
    %1456 = vst.msk [vmem:[#allocation2 + $0x98] sm:$0xf] %vm360, %v1451
    %1457 = vst.msk [vmem:[#allocation2 + $0x9c] sm:$0xf] %vm360, %v1453
    %v1458 = vpack.c.bf16 %v1245, %v1241
    %v1460 = vunpack.c.l.b16 %v1458
    %v1461 = vunpack.c.h.b16 %v1458
    %v1462 = vpack.c.b16 %v1460, %v1460
    %v1463 = vpack.c.b16 %v1461, %v1461
    %1466 = vst.msk [vmem:[#allocation2 + $0xa0] sm:$0xf] %vm360, %v1462
    %1467 = vst.msk [vmem:[#allocation2 + $0xa4] sm:$0xf] %vm360, %v1463
    %1468 = vrot.lane.b32.xlu0 %v1462, 96
    %v1469 = vpop.permute.xlu0 %1468
    %1470 = vrot.lane.b32.xlu0 %v1463, 96
    %v1471 = vpop.permute.xlu0 %1470
    %1474 = vst.msk [vmem:[#allocation2 + $0xa8] sm:$0xf] %vm360, %v1469
    %1475 = vst.msk [vmem:[#allocation2 + $0xac] sm:$0xf] %vm360, %v1471
    %1476 = vrot.lane.b32.xlu0 %v1462, 64
    %v1477 = vpop.permute.xlu0 %1476
    %1478 = vrot.lane.b32.xlu0 %v1463, 64
    %v1479 = vpop.permute.xlu0 %1478
    %1482 = vst.msk [vmem:[#allocation2 + $0xb0] sm:$0xf] %vm360, %v1477
    %1483 = vst.msk [vmem:[#allocation2 + $0xb4] sm:$0xf] %vm360, %v1479
    %1484 = vrot.lane.b32.xlu0 %v1462, 32
    %v1485 = vpop.permute.xlu0 %1484
    %1486 = vrot.lane.b32.xlu0 %v1463, 32
    %v1487 = vpop.permute.xlu0 %1486
    %1490 = vst.msk [vmem:[#allocation2 + $0xb8] sm:$0xf] %vm360, %v1485
    %1491 = vst.msk [vmem:[#allocation2 + $0xbc] sm:$0xf] %vm360, %v1487
    %v1492 = vpack.c.bf16 %v1285, %v1282
    %v1494 = vunpack.c.l.b16 %v1492
    %v1495 = vunpack.c.h.b16 %v1492
    %v1496 = vpack.c.b16 %v1494, %v1494
    %v1497 = vpack.c.b16 %v1495, %v1495
    %1500 = vst.msk [vmem:[#allocation2 + $0xc0] sm:$0xf] %vm360, %v1496
    %1501 = vst.msk [vmem:[#allocation2 + $0xc4] sm:$0xf] %vm360, %v1497
    %1502 = vrot.lane.b32.xlu0 %v1496, 96
    %v1503 = vpop.permute.xlu0 %1502
    %1504 = vrot.lane.b32.xlu0 %v1497, 96
    %v1505 = vpop.permute.xlu0 %1504
    %1508 = vst.msk [vmem:[#allocation2 + $0xc8] sm:$0xf] %vm360, %v1503
    %1509 = vst.msk [vmem:[#allocation2 + $0xcc] sm:$0xf] %vm360, %v1505
    %1510 = vrot.lane.b32.xlu0 %v1496, 64
    %v1511 = vpop.permute.xlu0 %1510
    %1512 = vrot.lane.b32.xlu0 %v1497, 64
    %v1513 = vpop.permute.xlu0 %1512
    %1516 = vst.msk [vmem:[#allocation2 + $0xd0] sm:$0xf] %vm360, %v1511
    %1517 = vst.msk [vmem:[#allocation2 + $0xd4] sm:$0xf] %vm360, %v1513
    %v1518 = vld [vmem:[#allocation2] sm:$0xf]
    %v1519 = vld [vmem:[#allocation2 + $0x4] sm:$0xf]
    %v1520 = vld [vmem:[#allocation2 + $0x8] sm:$0xf]
    %v1521 = vld [vmem:[#allocation2 + $0xc] sm:$0xf]
    %v1522 = vld [vmem:[#allocation2 + $0x10] sm:$0xf]
    %v1523 = vld [vmem:[#allocation2 + $0x14] sm:$0xf]
    %v1524 = vld [vmem:[#allocation2 + $0x18] sm:$0xf]
    %v1525 = vld [vmem:[#allocation2 + $0x1c] sm:$0xf]
    %v1526 = vld [vmem:[#allocation2 + $0x20] sm:$0xf]
    %v1527 = vld [vmem:[#allocation2 + $0x24] sm:$0xf]
    %v1528 = vld [vmem:[#allocation2 + $0x28] sm:$0xf]
    %v1529 = vld [vmem:[#allocation2 + $0x2c] sm:$0xf]
    %v1530 = vld [vmem:[#allocation2 + $0x30] sm:$0xf]
    %v1531 = vld [vmem:[#allocation2 + $0x34] sm:$0xf]
    %v1532 = vld [vmem:[#allocation2 + $0x38] sm:$0xf]
    %v1533 = vld [vmem:[#allocation2 + $0x3c] sm:$0xf]
    %v1534 = vld [vmem:[#allocation2 + $0x40] sm:$0xf]
    %v1535 = vld [vmem:[#allocation2 + $0x44] sm:$0xf]
    %v1536 = vld [vmem:[#allocation2 + $0x48] sm:$0xf]
    %v1537 = vld [vmem:[#allocation2 + $0x4c] sm:$0xf]
    %v1538 = vld [vmem:[#allocation2 + $0x50] sm:$0xf]
    %v1539 = vld [vmem:[#allocation2 + $0x54] sm:$0xf]
    %v1540 = vld [vmem:[#allocation2 + $0x58] sm:$0xf]
    %v1541 = vld [vmem:[#allocation2 + $0x5c] sm:$0xf]
    %v1542 = vld [vmem:[#allocation2 + $0x60] sm:$0xf]
    %v1543 = vld [vmem:[#allocation2 + $0x64] sm:$0xf]
    %v1544 = vld [vmem:[#allocation2 + $0x68] sm:$0xf]
    %v1545 = vld [vmem:[#allocation2 + $0x6c] sm:$0xf]
    %v1546 = vld [vmem:[#allocation2 + $0x70] sm:$0xf]
    %v1547 = vld [vmem:[#allocation2 + $0x74] sm:$0xf]
    %v1548 = vld [vmem:[#allocation2 + $0x78] sm:$0xf]
    %v1549 = vld [vmem:[#allocation2 + $0x7c] sm:$0xf]
    %v1550 = vld [vmem:[#allocation2 + $0x80] sm:$0xf]
    %v1551 = vld [vmem:[#allocation2 + $0x84] sm:$0xf]
    %v1552 = vld [vmem:[#allocation2 + $0x88] sm:$0xf]
    %v1553 = vld [vmem:[#allocation2 + $0x8c] sm:$0xf]
    %v1554 = vld [vmem:[#allocation2 + $0x90] sm:$0xf]
    %v1555 = vld [vmem:[#allocation2 + $0x94] sm:$0xf]
    %v1556 = vld [vmem:[#allocation2 + $0x98] sm:$0xf]
    %v1557 = vld [vmem:[#allocation2 + $0x9c] sm:$0xf]
    %v1558 = vld [vmem:[#allocation2 + $0xa0] sm:$0xf]
    %v1559 = vld [vmem:[#allocation2 + $0xa4] sm:$0xf]
    %v1560 = vld [vmem:[#allocation2 + $0xa8] sm:$0xf]
    %v1561 = vld [vmem:[#allocation2 + $0xac] sm:$0xf]
    %v1562 = vld [vmem:[#allocation2 + $0xb0] sm:$0xf]
    %v1563 = vld [vmem:[#allocation2 + $0xb4] sm:$0xf]
    %v1564 = vld [vmem:[#allocation2 + $0xb8] sm:$0xf]
    %v1565 = vld [vmem:[#allocation2 + $0xbc] sm:$0xf]
    %v1566 = vld [vmem:[#allocation2 + $0xc0] sm:$0xf]
    %v1567 = vld [vmem:[#allocation2 + $0xc4] sm:$0xf]
    %v1568 = vld [vmem:[#allocation2 + $0xc8] sm:$0xf]
    %v1569 = vld [vmem:[#allocation2 + $0xcc] sm:$0xf]
    %v1570 = vld [vmem:[#allocation2 + $0xd0] sm:$0xf]
    %v1571 = vld [vmem:[#allocation2 + $0xd4] sm:$0xf]
    %s1572 = scalar_lea.vmem [#allocation9], 16
    %v1573 = vld [vmem:[%s1572] sm:$0xf]
    %v1574 = vld [vmem:[%s1572 + $0x4] sm:$0xf]
    %v1575 = vld [vmem:[%s1572 + $0x8] sm:$0xf]
    %v1576 = vld [vmem:[%s1572 + $0xc] sm:$0xf]
    %v1581 = vunpack.c.l.b16 %v1573
    %v1582 = vunpack.c.l.b16 %v1574
    %v1583 = vunpack.c.l.b16 %v1575
    %v1584 = vunpack.c.l.b16 %v1576
    %v1585 = vpack.c.b16 %v1582, %v1581
    %v1586 = vpack.c.b16 %v1584, %v1583
    %1589 = vmatprep.subr.bf16.mxu0 0
    %1590 = vmatpush1.bf16.msra.mxu0 0
    %1591 = vmatprep.subr.bf16.mxu0 0
    %1592 = vmatpush1.bf16.msra.mxu0 0
    %1593 = vmatprep.subr.bf16.mxu0 0
    %1594 = vmatpush1.bf16.msra.mxu0 0
    %1595 = vmatprep.subr.bf16.mxu0 0
    %1596 = vmatpush1.bf16.msra.mxu0 0
    %1597 = vmatprep.subr.bf16.mxu0 0
    %1598 = vmatpush1.bf16.msra.mxu0 0
    %1599 = vmatprep.subr.bf16.mxu0 0
    %1600 = vmatpush1.bf16.msra.mxu0 0
    %1601 = vmatprep.subr.bf16.mxu0 0
    %1602 = vmatpush1.bf16.msra.mxu0 %v1586
    %1603 = vmatprep.subr.bf16.mxu0 0
    %1604 = vmatpush1.bf16.msra.mxu0 %v1585
    %1605 = vmatprep.subr.bf16.mxu0 0
    %1606 = vmatpush2.bf16.msra.mxu0 0
    %1607 = vmatprep.subr.bf16.mxu0 0
    %1608 = vmatpush2.bf16.msra.mxu0 0
    %1609 = vmatprep.subr.bf16.mxu0 0
    %1610 = vmatpush2.bf16.msra.mxu0 0
    %1611 = vmatprep.subr.bf16.mxu0 0
    %1612 = vmatpush2.bf16.msra.mxu0 0
    %1613 = vmatprep.subr.bf16.mxu0 0
    %1614 = vmatpush2.bf16.msra.mxu0 0
    %1615 = vmatprep.subr.bf16.mxu0 0
    %1616 = vmatpush2.bf16.msra.mxu0 0
    %1617 = vmatprep.subr.bf16.mxu0 0
    %1618 = vmatpush2.bf16.msra.mxu0 0
    %1619 = vmatprep.subr.bf16.mxu0 0
    %1620 = vmatpush2.bf16.msra.mxu0 0
    %1621 = vmatprep.mubr.bf16.mxu0 0
    %1622 = vmatmul.mubr.bf16.gmra.mxu0 %v1116
    %v1623 = vpop.f32.mrf.mxu0
    %v1624 = vadd.f32 0.0, %v1623
    %v1625 = vpop.f32.mrf.mxu0
    %v1626 = vpop.f32.mrf.mxu0
    %v1627 = vadd.f32 0.0, %v1626
    %v1628 = vpop.f32.mrf.mxu0
    %1629 = vdwg.mxu0
    %v1684 = vunpack.c.l.b16 %v1518
    %v1685 = vunpack.c.l.b16 %v1519
    %v1686 = vunpack.c.l.b16 %v1520
    %v1687 = vunpack.c.l.b16 %v1521
    %v1688 = vunpack.c.l.b16 %v1522
    %v1689 = vunpack.c.l.b16 %v1523
    %v1690 = vunpack.c.l.b16 %v1524
    %v1691 = vunpack.c.l.b16 %v1525
    %v1692 = vunpack.c.l.b16 %v1526
    %v1693 = vunpack.c.l.b16 %v1527
    %v1694 = vunpack.c.l.b16 %v1528
    %v1695 = vunpack.c.l.b16 %v1529
    %v1696 = vunpack.c.l.b16 %v1530
    %v1697 = vunpack.c.l.b16 %v1531
    %v1698 = vunpack.c.l.b16 %v1532
    %v1699 = vunpack.c.l.b16 %v1533
    %v1700 = vunpack.c.l.b16 %v1534
    %v1701 = vunpack.c.l.b16 %v1535
    %v1702 = vunpack.c.l.b16 %v1536
    %v1703 = vunpack.c.l.b16 %v1537
    %v1704 = vunpack.c.l.b16 %v1538
    %v1705 = vunpack.c.l.b16 %v1539
    %v1706 = vunpack.c.l.b16 %v1540
    %v1707 = vunpack.c.l.b16 %v1541
    %v1708 = vunpack.c.l.b16 %v1542
    %v1709 = vunpack.c.l.b16 %v1543
    %v1710 = vunpack.c.l.b16 %v1544
    %v1711 = vunpack.c.l.b16 %v1545
    %v1712 = vunpack.c.l.b16 %v1546
    %v1713 = vunpack.c.l.b16 %v1547
    %v1714 = vunpack.c.l.b16 %v1548
    %v1715 = vunpack.c.l.b16 %v1549
    %v1716 = vunpack.c.l.b16 %v1550
    %v1717 = vunpack.c.l.b16 %v1551
    %v1718 = vunpack.c.l.b16 %v1552
    %v1719 = vunpack.c.l.b16 %v1553
    %v1720 = vunpack.c.l.b16 %v1554
    %v1721 = vunpack.c.l.b16 %v1555
    %v1722 = vunpack.c.l.b16 %v1556
    %v1723 = vunpack.c.l.b16 %v1557
    %v1724 = vunpack.c.l.b16 %v1558
    %v1725 = vunpack.c.l.b16 %v1559
    %v1726 = vunpack.c.l.b16 %v1560
    %v1727 = vunpack.c.l.b16 %v1561
    %v1728 = vunpack.c.l.b16 %v1562
    %v1729 = vunpack.c.l.b16 %v1563
    %v1730 = vunpack.c.l.b16 %v1564
    %v1731 = vunpack.c.l.b16 %v1565
    %v1732 = vunpack.c.l.b16 %v1566
    %v1733 = vunpack.c.l.b16 %v1567
    %v1734 = vunpack.c.l.b16 %v1568
    %v1735 = vunpack.c.l.b16 %v1569
    %v1736 = vunpack.c.l.b16 %v1570
    %v1737 = vunpack.c.l.b16 %v1571
    %v1738 = vpack.c.b16 %v1685, %v1684
    %v1739 = vpack.c.b16 %v1687, %v1686
    %v1740 = vpack.c.b16 %v1689, %v1688
    %v1741 = vpack.c.b16 %v1691, %v1690
    %v1742 = vpack.c.b16 %v1693, %v1692
    %v1743 = vpack.c.b16 %v1695, %v1694
    %v1744 = vpack.c.b16 %v1697, %v1696
    %v1745 = vpack.c.b16 %v1699, %v1698
    %v1746 = vpack.c.b16 %v1701, %v1700
    %v1747 = vpack.c.b16 %v1703, %v1702
    %v1748 = vpack.c.b16 %v1705, %v1704
    %v1749 = vpack.c.b16 %v1707, %v1706
    %v1750 = vpack.c.b16 %v1709, %v1708
    %v1751 = vpack.c.b16 %v1711, %v1710
    %v1752 = vpack.c.b16 %v1713, %v1712
    %v1753 = vpack.c.b16 %v1715, %v1714
    %v1754 = vpack.c.b16 %v1717, %v1716
    %v1755 = vpack.c.b16 %v1719, %v1718
    %v1756 = vpack.c.b16 %v1721, %v1720
    %v1757 = vpack.c.b16 %v1723, %v1722
    %v1758 = vpack.c.b16 %v1725, %v1724
    %v1759 = vpack.c.b16 %v1727, %v1726
    %v1760 = vpack.c.b16 %v1729, %v1728
    %v1761 = vpack.c.b16 %v1731, %v1730
    %v1762 = vpack.c.b16 %v1733, %v1732
    %v1763 = vpack.c.b16 %v1735, %v1734
    %v1764 = vpack.c.b16 %v1737, %v1736
    %1792 = vmatprep.subr.bf16.mxu0 0
    %1793 = vmatpush1.bf16.msra.mxu0 %v1745
    %1794 = vmatprep.subr.bf16.mxu0 0
    %1795 = vmatpush1.bf16.msra.mxu0 %v1744
    %1796 = vmatprep.subr.bf16.mxu0 0
    %1797 = vmatpush1.bf16.msra.mxu0 %v1743
    %1798 = vmatprep.subr.bf16.mxu0 0
    %1799 = vmatpush1.bf16.msra.mxu0 %v1742
    %1800 = vmatprep.subr.bf16.mxu0 0
    %1801 = vmatpush1.bf16.msra.mxu0 %v1741
    %1802 = vmatprep.subr.bf16.mxu0 0
    %1803 = vmatpush1.bf16.msra.mxu0 %v1740
    %1804 = vmatprep.subr.bf16.mxu0 0
    %1805 = vmatpush1.bf16.msra.mxu0 %v1739
    %1806 = vmatprep.subr.bf16.mxu0 0
    %1807 = vmatpush1.bf16.msra.mxu0 %v1738
    %1808 = vmatprep.subr.bf16.mxu0 0
    %1809 = vmatpush2.bf16.msra.mxu0 %v1753
    %1810 = vmatprep.subr.bf16.mxu0 0
    %1811 = vmatpush2.bf16.msra.mxu0 %v1752
    %1812 = vmatprep.subr.bf16.mxu0 0
    %1813 = vmatpush2.bf16.msra.mxu0 %v1751
    %1814 = vmatprep.subr.bf16.mxu0 0
    %1815 = vmatpush2.bf16.msra.mxu0 %v1750
    %1816 = vmatprep.subr.bf16.mxu0 0
    %1817 = vmatpush2.bf16.msra.mxu0 %v1749
    %1818 = vmatprep.subr.bf16.mxu0 0
    %1819 = vmatpush2.bf16.msra.mxu0 %v1748
    %1820 = vmatprep.subr.bf16.mxu0 0
    %1821 = vmatpush2.bf16.msra.mxu0 %v1747
    %1822 = vmatprep.subr.bf16.mxu0 0
    %1823 = vmatpush2.bf16.msra.mxu0 %v1746
    %1824 = vmatprep.mubr.bf16.mxu0 %v707
    %1825 = vmatmul.mubr.bf16.gmra.mxu0 %v706
    %v1826 = vpop.f32.mrf.mxu0
    %v1827 = vadd.f32 %v1624, %v1826
    %v1828 = vpop.f32.mrf.mxu0
    %v1829 = vpop.f32.mrf.mxu0
    %v1830 = vadd.f32 %v1627, %v1829
    %v1831 = vpop.f32.mrf.mxu0
    %1832 = vdwg.mxu0
    %1833 = vmatprep.subr.bf16.mxu0 0
    %1834 = vmatpush1.bf16.msra.mxu0 %v1761
    %1835 = vmatprep.subr.bf16.mxu0 0
    %1836 = vmatpush1.bf16.msra.mxu0 %v1760
    %1837 = vmatprep.subr.bf16.mxu0 0
    %1838 = vmatpush1.bf16.msra.mxu0 %v1759
    %1839 = vmatprep.subr.bf16.mxu0 0
    %1840 = vmatpush1.bf16.msra.mxu0 %v1758
    %1841 = vmatprep.subr.bf16.mxu0 0
    %1842 = vmatpush1.bf16.msra.mxu0 %v1757
    %1843 = vmatprep.subr.bf16.mxu0 0
    %1844 = vmatpush1.bf16.msra.mxu0 %v1756
    %1845 = vmatprep.subr.bf16.mxu0 0
    %1846 = vmatpush1.bf16.msra.mxu0 %v1755
    %1847 = vmatprep.subr.bf16.mxu0 0
    %1848 = vmatpush1.bf16.msra.mxu0 %v1754
    %1849 = vmatprep.subr.bf16.mxu0 0
    %1850 = vmatpush2.bf16.msra.mxu0 0
    %1851 = vmatprep.subr.bf16.mxu0 0
    %1852 = vmatpush2.bf16.msra.mxu0 0
    %1853 = vmatprep.subr.bf16.mxu0 0
    %1854 = vmatpush2.bf16.msra.mxu0 0
    %1855 = vmatprep.subr.bf16.mxu0 0
    %1856 = vmatpush2.bf16.msra.mxu0 0
    %1857 = vmatprep.subr.bf16.mxu0 0
    %1858 = vmatpush2.bf16.msra.mxu0 0
    %1859 = vmatprep.subr.bf16.mxu0 0
    %1860 = vmatpush2.bf16.msra.mxu0 %v1764
    %1861 = vmatprep.subr.bf16.mxu0 0
    %1862 = vmatpush2.bf16.msra.mxu0 %v1763
    %1863 = vmatprep.subr.bf16.mxu0 0
    %1864 = vmatpush2.bf16.msra.mxu0 %v1762
    %1865 = vmatprep.mubr.bf16.mxu0 %v877
    %1866 = vmatmul.mubr.bf16.gmra.mxu0 %v708
    %v1867 = vpop.f32.mrf.mxu0
    %v1868 = vadd.f32 %v1827, %v1867
    %v1869 = vpop.f32.mrf.mxu0
    %v1870 = vpop.f32.mrf.mxu0
    %v1871 = vadd.f32 %v1830, %v1870
    %v1872 = vpop.f32.mrf.mxu0
    %1873 = vdwg.mxu0
    %s1874 = scalar_lea.vmem %s4, 1
    %v1875 = vld [vmem:[%s1874] sm:$0x1]
    %v1877 = vlaneseq
    %v1878 = vshrl.u32 %v1877, 7
    %v1879 = vsub.s32 0, %v1878
    %v1880 = vrot.slane %v1875, %v1879
    %v1882 = vadd.f32 %v1868, %v1880
    %v1883 = vadd.f32 %v1871, %v1880
    %vm1884 = vcmp.gt.f32.partialorder %v1882, 0.0
    %vm1885 = vcmp.gt.f32.partialorder %v1883, 0.0
    %v1886 = vmul.f32 %v1882, 0.01
    %v1887 = vmul.f32 %v1883, 0.01
    %v1888 = vsel %vm1884, %v1882, %v1886
    %v1889 = vsel %vm1885, %v1883, %v1887
    %v1890 = vadd.f32 %v1888, %v1023
    %v1891 = vadd.f32 %v1889, %v1024
    %v1892 = vsel %vm178, %v1890, 0.0
    %v1893 = vsel %vm178, %v1891, 0.0
    %v1894 = vadd.f32 %v1892, %v1893
    %v1895 = vrot.slane %v1894, 4
    %v1896 = vadd.f32 %v1894, %v1895
    %v1897 = vrot.slane %v1896, 2
    %v1898 = vadd.f32 %v1896, %v1897
    %v1899 = vrot.slane %v1898, 1
    %v1900 = vadd.f32 %v1898, %v1899
    %v1901 = vmul.f32 %v1900, %v987
    %v1902 = vsub.f32 %v1890, %v1901
    %v1903 = vsub.f32 %v1891, %v1901
    %v1904 = vmul.f32 %v1902, %v1902
    %v1905 = vmul.f32 %v1903, %v1903
    %v1906 = vsel %vm178, %v1904, 0.0
    %v1907 = vsel %vm178, %v1905, 0.0
    %v1908 = vadd.f32 %v1906, %v1907
    %v1909 = vrot.slane %v1908, 4
    %v1910 = vadd.f32 %v1908, %v1909
    %v1911 = vrot.slane %v1910, 2
    %v1912 = vadd.f32 %v1910, %v1911
    %v1913 = vrot.slane %v1912, 1
    %v1914 = vadd.f32 %v1912, %v1913
    %v1915 = vmul.f32 %v1914, %v987
    %s1916 = scalar_lea.vmem %s5, 1
    %v1917 = vld [vmem:[%s1916] sm:$0x1]
    %v1919 = vlaneseq
    %v1920 = vshrl.u32 %v1919, 7
    %v1921 = vsub.s32 0, %v1920
    %v1922 = vrot.slane %v1917, %v1921
    %v1924 = vmul.f32 %v1922, %v1902
    %v1925 = vmul.f32 %v1922, %v1903
    %v1926 = vadd.f32 %v1915, 1e-05
    %v1927 = vrsqrt.pop %v1926
    %v1928 = vmul.f32 %v1924, %v1927
    %v1929 = vmul.f32 %v1925, %v1927
    %s1930 = scalar_lea.vmem %s6, 1
    %v1931 = vld [vmem:[%s1930] sm:$0x1]
    %v1933 = vlaneseq
    %v1934 = vshrl.u32 %v1933, 7
    %v1935 = vsub.s32 0, %v1934
    %v1936 = vrot.slane %v1931, %v1935
    %v1938 = vadd.f32 %v1928, %v1936
    %v1939 = vadd.f32 %v1929, %v1936
    %v1940 = vpack.c.bf16 %v1939, %v1938
    %s1941 = scalar_lea.vmem [#allocation8], 224
    %v1942 = vld [vmem:[%s1941] sm:$0xff]
    %v1943 = vld [vmem:[%s1941 + $0x8] sm:$0xff]
    %v1944 = vld [vmem:[%s1941 + $0x10] sm:$0xff]
    %v1945 = vld [vmem:[%s1941 + $0x18] sm:$0xf]
    %v1946 = vld [vmem:[%s1941 + $0x1c] sm:$0xff]
    %v1947 = vld [vmem:[%s1941 + $0x24] sm:$0xff]
    %v1948 = vld [vmem:[%s1941 + $0x2c] sm:$0xff]
    %v1949 = vld [vmem:[%s1941 + $0x34] sm:$0xf]
    %v1950 = vld [vmem:[%s1941 + $0x38] sm:$0xff]
    %v1951 = vld [vmem:[%s1941 + $0x40] sm:$0xff]
    %v1952 = vld [vmem:[%s1941 + $0x48] sm:$0xff]
    %v1953 = vld [vmem:[%s1941 + $0x50] sm:$0xf]
    %v1954 = vld [vmem:[%s1941 + $0x54] sm:$0xff]
    %v1955 = vld [vmem:[%s1941 + $0x5c] sm:$0xff]
    %v1956 = vld [vmem:[%s1941 + $0x64] sm:$0xff]
    %v1957 = vld [vmem:[%s1941 + $0x6c] sm:$0xf]
    %v1974 = vunpack.c.l.b16 %v1942
    %v1975 = vunpack.c.h.b16 %v1942
    %v1976 = vunpack.c.l.b16 %v1943
    %v1977 = vunpack.c.h.b16 %v1943
    %v1978 = vunpack.c.l.b16 %v1944
    %v1979 = vunpack.c.h.b16 %v1944
    %v1980 = vunpack.c.l.b16 %v1945
    %v1981 = vunpack.c.l.b16 %v1946
    %v1982 = vunpack.c.h.b16 %v1946
    %v1983 = vunpack.c.l.b16 %v1947
    %v1984 = vunpack.c.h.b16 %v1947
    %v1985 = vunpack.c.l.b16 %v1948
    %v1986 = vunpack.c.h.b16 %v1948
    %v1987 = vunpack.c.l.b16 %v1949
    %v1988 = vunpack.c.l.b16 %v1950
    %v1989 = vunpack.c.h.b16 %v1950
    %v1990 = vunpack.c.l.b16 %v1951
    %v1991 = vunpack.c.h.b16 %v1951
    %v1992 = vunpack.c.l.b16 %v1952
    %v1993 = vunpack.c.h.b16 %v1952
    %v1994 = vunpack.c.l.b16 %v1953
    %v1995 = vunpack.c.l.b16 %v1954
    %v1996 = vunpack.c.h.b16 %v1954
    %v1997 = vunpack.c.l.b16 %v1955
    %v1998 = vunpack.c.h.b16 %v1955
    %v1999 = vunpack.c.l.b16 %v1956
    %v2000 = vunpack.c.h.b16 %v1956
    %v2001 = vunpack.c.l.b16 %v1957
    %v2002 = vpack.c.b16 %v1981, %v1974
    %v2003 = vpack.c.b16 %v1982, %v1975
    %v2004 = vpack.c.b16 %v1983, %v1976
    %v2005 = vpack.c.b16 %v1984, %v1977
    %v2006 = vpack.c.b16 %v1985, %v1978
    %v2007 = vpack.c.b16 %v1986, %v1979
    %v2008 = vpack.c.b16 %v1987, %v1980
    %v2009 = vpack.c.b16 %v1995, %v1988
    %v2010 = vpack.c.b16 %v1996, %v1989
    %v2011 = vpack.c.b16 %v1997, %v1990
    %v2012 = vpack.c.b16 %v1998, %v1991
    %v2013 = vpack.c.b16 %v1999, %v1992
    %v2014 = vpack.c.b16 %v2000, %v1993
    %v2015 = vpack.c.b16 %v2001, %v1994
    %v2031 = vsel %vm178, %v1940, 0
    %2033 = vmatprep.subr.bf16.mxu0 0
    %2034 = vmatpush1.bf16.msra.mxu0 0
    %2035 = vmatprep.subr.bf16.mxu0 0
    %2036 = vmatpush1.bf16.msra.mxu0 0
    %2037 = vmatprep.subr.bf16.mxu0 0
    %2038 = vmatpush1.bf16.msra.mxu0 0
    %2039 = vmatprep.subr.bf16.mxu0 0
    %2040 = vmatpush1.bf16.msra.mxu0 0
    %2041 = vmatprep.subr.bf16.mxu0 0
    %2042 = vmatpush1.bf16.msra.mxu0 0
    %2043 = vmatprep.subr.bf16.mxu0 0
    %2044 = vmatpush1.bf16.msra.mxu0 0
    %2045 = vmatprep.subr.bf16.mxu0 %v2010
    %2046 = vmatpush1.bf16.msra.mxu0 %v2009
    %2047 = vmatprep.subr.bf16.mxu0 %v2003
    %2048 = vmatpush1.bf16.msra.mxu0 %v2002
    %2049 = vmatprep.subr.bf16.mxu0 0
    %2050 = vmatpush2.bf16.msra.mxu0 0
    %2051 = vmatprep.subr.bf16.mxu0 0
    %2052 = vmatpush2.bf16.msra.mxu0 0
    %2053 = vmatprep.subr.bf16.mxu0 0
    %2054 = vmatpush2.bf16.msra.mxu0 0
    %2055 = vmatprep.subr.bf16.mxu0 0
    %2056 = vmatpush2.bf16.msra.mxu0 0
    %2057 = vmatprep.subr.bf16.mxu0 0
    %2058 = vmatpush2.bf16.msra.mxu0 0
    %2059 = vmatprep.subr.bf16.mxu0 0
    %2060 = vmatpush2.bf16.msra.mxu0 0
    %2061 = vmatprep.subr.bf16.mxu0 0
    %2062 = vmatpush2.bf16.msra.mxu0 0
    %2063 = vmatprep.subr.bf16.mxu0 0
    %2064 = vmatpush2.bf16.msra.mxu0 0
    %2065 = vmatprep.mubr.bf16.mxu0 0
    %2066 = vmatmul.mubr.bf16.gmra.mxu0 %v2031
    %v2067 = vpop.f32.mrf.mxu0
    %v2068 = vadd.f32 0.0, %v2067
    %v2069 = vpop.f32.mrf.mxu0
    %v2070 = vadd.f32 0.0, %v2069
    %v2071 = vpop.f32.mrf.mxu0
    %v2072 = vadd.f32 0.0, %v2071
    %v2073 = vpop.f32.mrf.mxu0
    %v2074 = vadd.f32 0.0, %v2073
    %2075 = vdwg.mxu0
    %2076 = vmatprep.subr.bf16.mxu0 0
    %2077 = vmatpush1.bf16.msra.mxu0 0
    %2078 = vmatprep.subr.bf16.mxu0 0
    %2079 = vmatpush1.bf16.msra.mxu0 0
    %2080 = vmatprep.subr.bf16.mxu0 0
    %2081 = vmatpush1.bf16.msra.mxu0 0
    %2082 = vmatprep.subr.bf16.mxu0 0
    %2083 = vmatpush1.bf16.msra.mxu0 0
    %2084 = vmatprep.subr.bf16.mxu0 0
    %2085 = vmatpush1.bf16.msra.mxu0 0
    %2086 = vmatprep.subr.bf16.mxu0 0
    %2087 = vmatpush1.bf16.msra.mxu0 0
    %2088 = vmatprep.subr.bf16.mxu0 %v2012
    %2089 = vmatpush1.bf16.msra.mxu0 %v2011
    %2090 = vmatprep.subr.bf16.mxu0 %v2005
    %2091 = vmatpush1.bf16.msra.mxu0 %v2004
    %2092 = vmatprep.subr.bf16.mxu0 0
    %2093 = vmatpush2.bf16.msra.mxu0 0
    %2094 = vmatprep.subr.bf16.mxu0 0
    %2095 = vmatpush2.bf16.msra.mxu0 0
    %2096 = vmatprep.subr.bf16.mxu0 0
    %2097 = vmatpush2.bf16.msra.mxu0 0
    %2098 = vmatprep.subr.bf16.mxu0 0
    %2099 = vmatpush2.bf16.msra.mxu0 0
    %2100 = vmatprep.subr.bf16.mxu0 0
    %2101 = vmatpush2.bf16.msra.mxu0 0
    %2102 = vmatprep.subr.bf16.mxu0 0
    %2103 = vmatpush2.bf16.msra.mxu0 0
    %2104 = vmatprep.subr.bf16.mxu0 0
    %2105 = vmatpush2.bf16.msra.mxu0 0
    %2106 = vmatprep.subr.bf16.mxu0 0
    %2107 = vmatpush2.bf16.msra.mxu0 0
    %2108 = vmatprep.mubr.bf16.mxu0 0
    %2109 = vmatmul.mubr.bf16.gmra.mxu0 %v2031
    %v2110 = vpop.f32.mrf.mxu0
    %v2111 = vadd.f32 0.0, %v2110
    %v2112 = vpop.f32.mrf.mxu0
    %v2113 = vadd.f32 0.0, %v2112
    %v2114 = vpop.f32.mrf.mxu0
    %v2115 = vadd.f32 0.0, %v2114
    %v2116 = vpop.f32.mrf.mxu0
    %v2117 = vadd.f32 0.0, %v2116
    %2118 = vdwg.mxu0
    %2119 = vmatprep.subr.bf16.mxu0 0
    %2120 = vmatpush1.bf16.msra.mxu0 0
    %2121 = vmatprep.subr.bf16.mxu0 0
    %2122 = vmatpush1.bf16.msra.mxu0 0
    %2123 = vmatprep.subr.bf16.mxu0 0
    %2124 = vmatpush1.bf16.msra.mxu0 0
    %2125 = vmatprep.subr.bf16.mxu0 0
    %2126 = vmatpush1.bf16.msra.mxu0 0
    %2127 = vmatprep.subr.bf16.mxu0 0
    %2128 = vmatpush1.bf16.msra.mxu0 0
    %2129 = vmatprep.subr.bf16.mxu0 0
    %2130 = vmatpush1.bf16.msra.mxu0 0
    %2131 = vmatprep.subr.bf16.mxu0 %v2014
    %2132 = vmatpush1.bf16.msra.mxu0 %v2013
    %2133 = vmatprep.subr.bf16.mxu0 %v2007
    %2134 = vmatpush1.bf16.msra.mxu0 %v2006
    %2135 = vmatprep.subr.bf16.mxu0 0
    %2136 = vmatpush2.bf16.msra.mxu0 0
    %2137 = vmatprep.subr.bf16.mxu0 0
    %2138 = vmatpush2.bf16.msra.mxu0 0
    %2139 = vmatprep.subr.bf16.mxu0 0
    %2140 = vmatpush2.bf16.msra.mxu0 0
    %2141 = vmatprep.subr.bf16.mxu0 0
    %2142 = vmatpush2.bf16.msra.mxu0 0
    %2143 = vmatprep.subr.bf16.mxu0 0
    %2144 = vmatpush2.bf16.msra.mxu0 0
    %2145 = vmatprep.subr.bf16.mxu0 0
    %2146 = vmatpush2.bf16.msra.mxu0 0
    %2147 = vmatprep.subr.bf16.mxu0 0
    %2148 = vmatpush2.bf16.msra.mxu0 0
    %2149 = vmatprep.subr.bf16.mxu0 0
    %2150 = vmatpush2.bf16.msra.mxu0 0
    %2151 = vmatprep.mubr.bf16.mxu0 0
    %2152 = vmatmul.mubr.bf16.gmra.mxu0 %v2031
    %v2153 = vpop.f32.mrf.mxu0
    %v2154 = vadd.f32 0.0, %v2153
    %v2155 = vpop.f32.mrf.mxu0
    %v2156 = vadd.f32 0.0, %v2155
    %v2157 = vpop.f32.mrf.mxu0
    %v2158 = vadd.f32 0.0, %v2157
    %v2159 = vpop.f32.mrf.mxu0
    %v2160 = vadd.f32 0.0, %v2159
    %2161 = vdwg.mxu0
    %2162 = vmatprep.subr.bf16.mxu0 0
    %2163 = vmatpush1.bf16.msra.mxu0 0
    %2164 = vmatprep.subr.bf16.mxu0 0
    %2165 = vmatpush1.bf16.msra.mxu0 0
    %2166 = vmatprep.subr.bf16.mxu0 0
    %2167 = vmatpush1.bf16.msra.mxu0 0
    %2168 = vmatprep.subr.bf16.mxu0 0
    %2169 = vmatpush1.bf16.msra.mxu0 0
    %2170 = vmatprep.subr.bf16.mxu0 0
    %2171 = vmatpush1.bf16.msra.mxu0 0
    %2172 = vmatprep.subr.bf16.mxu0 0
    %2173 = vmatpush1.bf16.msra.mxu0 0
    %2174 = vmatprep.subr.bf16.mxu0 0
    %2175 = vmatpush1.bf16.msra.mxu0 %v2015
    %2176 = vmatprep.subr.bf16.mxu0 0
    %2177 = vmatpush1.bf16.msra.mxu0 %v2008
    %2178 = vmatprep.subr.bf16.mxu0 0
    %2179 = vmatpush2.bf16.msra.mxu0 0
    %2180 = vmatprep.subr.bf16.mxu0 0
    %2181 = vmatpush2.bf16.msra.mxu0 0
    %2182 = vmatprep.subr.bf16.mxu0 0
    %2183 = vmatpush2.bf16.msra.mxu0 0
    %2184 = vmatprep.subr.bf16.mxu0 0
    %2185 = vmatpush2.bf16.msra.mxu0 0
    %2186 = vmatprep.subr.bf16.mxu0 0
    %2187 = vmatpush2.bf16.msra.mxu0 0
    %2188 = vmatprep.subr.bf16.mxu0 0
    %2189 = vmatpush2.bf16.msra.mxu0 0
    %2190 = vmatprep.subr.bf16.mxu0 0
    %2191 = vmatpush2.bf16.msra.mxu0 0
    %2192 = vmatprep.subr.bf16.mxu0 0
    %2193 = vmatpush2.bf16.msra.mxu0 0
    %2194 = vmatprep.mubr.bf16.mxu0 0
    %2195 = vmatmul.mubr.bf16.gmra.mxu0 %v2031
    %v2196 = vpop.f32.mrf.mxu0
    %v2197 = vadd.f32 0.0, %v2196
    %v2198 = vpop.f32.mrf.mxu0
    %v2199 = vpop.f32.mrf.mxu0
    %v2200 = vadd.f32 0.0, %v2199
    %v2201 = vpop.f32.mrf.mxu0
    %2202 = vdwg.mxu0
    %v2203 = vpack.c.bf16 %v2072, %v2068
    %v2205 = vunpack.c.l.b16 %v2203
    %v2206 = vunpack.c.h.b16 %v2203
    %v2207 = vpack.c.b16 %v2205, %v2205
    %v2208 = vpack.c.b16 %v2206, %v2206
    %2211 = vst.msk [vmem:[#allocation2] sm:$0xf] %vm360, %v2207
    %2212 = vst.msk [vmem:[#allocation2 + $0x4] sm:$0xf] %vm360, %v2208
    %2213 = vrot.lane.b32.xlu0 %v2207, 96
    %v2214 = vpop.permute.xlu0 %2213
    %2215 = vrot.lane.b32.xlu0 %v2208, 96
    %v2216 = vpop.permute.xlu0 %2215
    %2219 = vst.msk [vmem:[#allocation2 + $0x8] sm:$0xf] %vm360, %v2214
    %2220 = vst.msk [vmem:[#allocation2 + $0xc] sm:$0xf] %vm360, %v2216
    %2221 = vrot.lane.b32.xlu0 %v2207, 64
    %v2222 = vpop.permute.xlu0 %2221
    %2223 = vrot.lane.b32.xlu0 %v2208, 64
    %v2224 = vpop.permute.xlu0 %2223
    %2227 = vst.msk [vmem:[#allocation2 + $0x10] sm:$0xf] %vm360, %v2222
    %2228 = vst.msk [vmem:[#allocation2 + $0x14] sm:$0xf] %vm360, %v2224
    %2229 = vrot.lane.b32.xlu0 %v2207, 32
    %v2230 = vpop.permute.xlu0 %2229
    %2231 = vrot.lane.b32.xlu0 %v2208, 32
    %v2232 = vpop.permute.xlu0 %2231
    %2235 = vst.msk [vmem:[#allocation2 + $0x18] sm:$0xf] %vm360, %v2230
    %2236 = vst.msk [vmem:[#allocation2 + $0x1c] sm:$0xf] %vm360, %v2232
    %v2237 = vpack.c.bf16 %v2074, %v2070
    %v2239 = vunpack.c.l.b16 %v2237
    %v2240 = vunpack.c.h.b16 %v2237
    %v2241 = vpack.c.b16 %v2239, %v2239
    %v2242 = vpack.c.b16 %v2240, %v2240
    %2245 = vst.msk [vmem:[#allocation2 + $0x20] sm:$0xf] %vm360, %v2241
    %2246 = vst.msk [vmem:[#allocation2 + $0x24] sm:$0xf] %vm360, %v2242
    %2247 = vrot.lane.b32.xlu0 %v2241, 96
    %v2248 = vpop.permute.xlu0 %2247
    %2249 = vrot.lane.b32.xlu0 %v2242, 96
    %v2250 = vpop.permute.xlu0 %2249
    %2253 = vst.msk [vmem:[#allocation2 + $0x28] sm:$0xf] %vm360, %v2248
    %2254 = vst.msk [vmem:[#allocation2 + $0x2c] sm:$0xf] %vm360, %v2250
    %2255 = vrot.lane.b32.xlu0 %v2241, 64
    %v2256 = vpop.permute.xlu0 %2255
    %2257 = vrot.lane.b32.xlu0 %v2242, 64
    %v2258 = vpop.permute.xlu0 %2257
    %2261 = vst.msk [vmem:[#allocation2 + $0x30] sm:$0xf] %vm360, %v2256
    %2262 = vst.msk [vmem:[#allocation2 + $0x34] sm:$0xf] %vm360, %v2258
    %2263 = vrot.lane.b32.xlu0 %v2241, 32
    %v2264 = vpop.permute.xlu0 %2263
    %2265 = vrot.lane.b32.xlu0 %v2242, 32
    %v2266 = vpop.permute.xlu0 %2265
    %2269 = vst.msk [vmem:[#allocation2 + $0x38] sm:$0xf] %vm360, %v2264
    %2270 = vst.msk [vmem:[#allocation2 + $0x3c] sm:$0xf] %vm360, %v2266
    %v2271 = vpack.c.bf16 %v2115, %v2111
    %v2273 = vunpack.c.l.b16 %v2271
    %v2274 = vunpack.c.h.b16 %v2271
    %v2275 = vpack.c.b16 %v2273, %v2273
    %v2276 = vpack.c.b16 %v2274, %v2274
    %2279 = vst.msk [vmem:[#allocation2 + $0x40] sm:$0xf] %vm360, %v2275
    %2280 = vst.msk [vmem:[#allocation2 + $0x44] sm:$0xf] %vm360, %v2276
    %2281 = vrot.lane.b32.xlu0 %v2275, 96
    %v2282 = vpop.permute.xlu0 %2281
    %2283 = vrot.lane.b32.xlu0 %v2276, 96
    %v2284 = vpop.permute.xlu0 %2283
    %2287 = vst.msk [vmem:[#allocation2 + $0x48] sm:$0xf] %vm360, %v2282
    %2288 = vst.msk [vmem:[#allocation2 + $0x4c] sm:$0xf] %vm360, %v2284
    %2289 = vrot.lane.b32.xlu0 %v2275, 64
    %v2290 = vpop.permute.xlu0 %2289
    %2291 = vrot.lane.b32.xlu0 %v2276, 64
    %v2292 = vpop.permute.xlu0 %2291
    %2295 = vst.msk [vmem:[#allocation2 + $0x50] sm:$0xf] %vm360, %v2290
    %2296 = vst.msk [vmem:[#allocation2 + $0x54] sm:$0xf] %vm360, %v2292
    %2297 = vrot.lane.b32.xlu0 %v2275, 32
    %v2298 = vpop.permute.xlu0 %2297
    %2299 = vrot.lane.b32.xlu0 %v2276, 32
    %v2300 = vpop.permute.xlu0 %2299
    %2303 = vst.msk [vmem:[#allocation2 + $0x58] sm:$0xf] %vm360, %v2298
    %2304 = vst.msk [vmem:[#allocation2 + $0x5c] sm:$0xf] %vm360, %v2300
    %v2305 = vpack.c.bf16 %v2117, %v2113
    %v2307 = vunpack.c.l.b16 %v2305
    %v2308 = vunpack.c.h.b16 %v2305
    %v2309 = vpack.c.b16 %v2307, %v2307
    %v2310 = vpack.c.b16 %v2308, %v2308
    %2313 = vst.msk [vmem:[#allocation2 + $0x60] sm:$0xf] %vm360, %v2309
    %2314 = vst.msk [vmem:[#allocation2 + $0x64] sm:$0xf] %vm360, %v2310
    %2315 = vrot.lane.b32.xlu0 %v2309, 96
    %v2316 = vpop.permute.xlu0 %2315
    %2317 = vrot.lane.b32.xlu0 %v2310, 96
    %v2318 = vpop.permute.xlu0 %2317
    %2321 = vst.msk [vmem:[#allocation2 + $0x68] sm:$0xf] %vm360, %v2316
    %2322 = vst.msk [vmem:[#allocation2 + $0x6c] sm:$0xf] %vm360, %v2318
    %2323 = vrot.lane.b32.xlu0 %v2309, 64
    %v2324 = vpop.permute.xlu0 %2323
    %2325 = vrot.lane.b32.xlu0 %v2310, 64
    %v2326 = vpop.permute.xlu0 %2325
    %2329 = vst.msk [vmem:[#allocation2 + $0x70] sm:$0xf] %vm360, %v2324
    %2330 = vst.msk [vmem:[#allocation2 + $0x74] sm:$0xf] %vm360, %v2326
    %2331 = vrot.lane.b32.xlu0 %v2309, 32
    %v2332 = vpop.permute.xlu0 %2331
    %2333 = vrot.lane.b32.xlu0 %v2310, 32
    %v2334 = vpop.permute.xlu0 %2333
    %2337 = vst.msk [vmem:[#allocation2 + $0x78] sm:$0xf] %vm360, %v2332
    %2338 = vst.msk [vmem:[#allocation2 + $0x7c] sm:$0xf] %vm360, %v2334
    %v2339 = vpack.c.bf16 %v2158, %v2154
    %v2341 = vunpack.c.l.b16 %v2339
    %v2342 = vunpack.c.h.b16 %v2339
    %v2343 = vpack.c.b16 %v2341, %v2341
    %v2344 = vpack.c.b16 %v2342, %v2342
    %2347 = vst.msk [vmem:[#allocation2 + $0x80] sm:$0xf] %vm360, %v2343
    %2348 = vst.msk [vmem:[#allocation2 + $0x84] sm:$0xf] %vm360, %v2344
    %2349 = vrot.lane.b32.xlu0 %v2343, 96
    %v2350 = vpop.permute.xlu0 %2349
    %2351 = vrot.lane.b32.xlu0 %v2344, 96
    %v2352 = vpop.permute.xlu0 %2351
    %2355 = vst.msk [vmem:[#allocation2 + $0x88] sm:$0xf] %vm360, %v2350
    %2356 = vst.msk [vmem:[#allocation2 + $0x8c] sm:$0xf] %vm360, %v2352
    %2357 = vrot.lane.b32.xlu0 %v2343, 64
    %v2358 = vpop.permute.xlu0 %2357
    %2359 = vrot.lane.b32.xlu0 %v2344, 64
    %v2360 = vpop.permute.xlu0 %2359
    %2363 = vst.msk [vmem:[#allocation2 + $0x90] sm:$0xf] %vm360, %v2358
    %2364 = vst.msk [vmem:[#allocation2 + $0x94] sm:$0xf] %vm360, %v2360
    %2365 = vrot.lane.b32.xlu0 %v2343, 32
    %v2366 = vpop.permute.xlu0 %2365
    %2367 = vrot.lane.b32.xlu0 %v2344, 32
    %v2368 = vpop.permute.xlu0 %2367
    %2371 = vst.msk [vmem:[#allocation2 + $0x98] sm:$0xf] %vm360, %v2366
    %2372 = vst.msk [vmem:[#allocation2 + $0x9c] sm:$0xf] %vm360, %v2368
    %v2373 = vpack.c.bf16 %v2160, %v2156
    %v2375 = vunpack.c.l.b16 %v2373
    %v2376 = vunpack.c.h.b16 %v2373
    %v2377 = vpack.c.b16 %v2375, %v2375
    %v2378 = vpack.c.b16 %v2376, %v2376
    %2381 = vst.msk [vmem:[#allocation2 + $0xa0] sm:$0xf] %vm360, %v2377
    %2382 = vst.msk [vmem:[#allocation2 + $0xa4] sm:$0xf] %vm360, %v2378
    %2383 = vrot.lane.b32.xlu0 %v2377, 96
    %v2384 = vpop.permute.xlu0 %2383
    %2385 = vrot.lane.b32.xlu0 %v2378, 96
    %v2386 = vpop.permute.xlu0 %2385
    %2389 = vst.msk [vmem:[#allocation2 + $0xa8] sm:$0xf] %vm360, %v2384
    %2390 = vst.msk [vmem:[#allocation2 + $0xac] sm:$0xf] %vm360, %v2386
    %2391 = vrot.lane.b32.xlu0 %v2377, 64
    %v2392 = vpop.permute.xlu0 %2391
    %2393 = vrot.lane.b32.xlu0 %v2378, 64
    %v2394 = vpop.permute.xlu0 %2393
    %2397 = vst.msk [vmem:[#allocation2 + $0xb0] sm:$0xf] %vm360, %v2392
    %2398 = vst.msk [vmem:[#allocation2 + $0xb4] sm:$0xf] %vm360, %v2394
    %2399 = vrot.lane.b32.xlu0 %v2377, 32
    %v2400 = vpop.permute.xlu0 %2399
    %2401 = vrot.lane.b32.xlu0 %v2378, 32
    %v2402 = vpop.permute.xlu0 %2401
    %2405 = vst.msk [vmem:[#allocation2 + $0xb8] sm:$0xf] %vm360, %v2400
    %2406 = vst.msk [vmem:[#allocation2 + $0xbc] sm:$0xf] %vm360, %v2402
    %v2407 = vpack.c.bf16 %v2200, %v2197
    %v2409 = vunpack.c.l.b16 %v2407
    %v2410 = vunpack.c.h.b16 %v2407
    %v2411 = vpack.c.b16 %v2409, %v2409
    %v2412 = vpack.c.b16 %v2410, %v2410
    %2415 = vst.msk [vmem:[#allocation2 + $0xc0] sm:$0xf] %vm360, %v2411
    %2416 = vst.msk [vmem:[#allocation2 + $0xc4] sm:$0xf] %vm360, %v2412
    %2417 = vrot.lane.b32.xlu0 %v2411, 96
    %v2418 = vpop.permute.xlu0 %2417
    %2419 = vrot.lane.b32.xlu0 %v2412, 96
    %v2420 = vpop.permute.xlu0 %2419
    %2423 = vst.msk [vmem:[#allocation2 + $0xc8] sm:$0xf] %vm360, %v2418
    %2424 = vst.msk [vmem:[#allocation2 + $0xcc] sm:$0xf] %vm360, %v2420
    %2425 = vrot.lane.b32.xlu0 %v2411, 64
    %v2426 = vpop.permute.xlu0 %2425
    %2427 = vrot.lane.b32.xlu0 %v2412, 64
    %v2428 = vpop.permute.xlu0 %2427
    %2431 = vst.msk [vmem:[#allocation2 + $0xd0] sm:$0xf] %vm360, %v2426
    %2432 = vst.msk [vmem:[#allocation2 + $0xd4] sm:$0xf] %vm360, %v2428
    %v2433 = vld [vmem:[#allocation2] sm:$0xf]
    %v2434 = vld [vmem:[#allocation2 + $0x4] sm:$0xf]
    %v2435 = vld [vmem:[#allocation2 + $0x8] sm:$0xf]
    %v2436 = vld [vmem:[#allocation2 + $0xc] sm:$0xf]
    %v2437 = vld [vmem:[#allocation2 + $0x10] sm:$0xf]
    %v2438 = vld [vmem:[#allocation2 + $0x14] sm:$0xf]
    %v2439 = vld [vmem:[#allocation2 + $0x18] sm:$0xf]
    %v2440 = vld [vmem:[#allocation2 + $0x1c] sm:$0xf]
    %v2441 = vld [vmem:[#allocation2 + $0x20] sm:$0xf]
    %v2442 = vld [vmem:[#allocation2 + $0x24] sm:$0xf]
    %v2443 = vld [vmem:[#allocation2 + $0x28] sm:$0xf]
    %v2444 = vld [vmem:[#allocation2 + $0x2c] sm:$0xf]
    %v2445 = vld [vmem:[#allocation2 + $0x30] sm:$0xf]
    %v2446 = vld [vmem:[#allocation2 + $0x34] sm:$0xf]
    %v2447 = vld [vmem:[#allocation2 + $0x38] sm:$0xf]
    %v2448 = vld [vmem:[#allocation2 + $0x3c] sm:$0xf]
    %v2449 = vld [vmem:[#allocation2 + $0x40] sm:$0xf]
    %v2450 = vld [vmem:[#allocation2 + $0x44] sm:$0xf]
    %v2451 = vld [vmem:[#allocation2 + $0x48] sm:$0xf]
    %v2452 = vld [vmem:[#allocation2 + $0x4c] sm:$0xf]
    %v2453 = vld [vmem:[#allocation2 + $0x50] sm:$0xf]
    %v2454 = vld [vmem:[#allocation2 + $0x54] sm:$0xf]
    %v2455 = vld [vmem:[#allocation2 + $0x58] sm:$0xf]
    %v2456 = vld [vmem:[#allocation2 + $0x5c] sm:$0xf]
    %v2457 = vld [vmem:[#allocation2 + $0x60] sm:$0xf]
    %v2458 = vld [vmem:[#allocation2 + $0x64] sm:$0xf]
    %v2459 = vld [vmem:[#allocation2 + $0x68] sm:$0xf]
    %v2460 = vld [vmem:[#allocation2 + $0x6c] sm:$0xf]
    %v2461 = vld [vmem:[#allocation2 + $0x70] sm:$0xf]
    %v2462 = vld [vmem:[#allocation2 + $0x74] sm:$0xf]
    %v2463 = vld [vmem:[#allocation2 + $0x78] sm:$0xf]
    %v2464 = vld [vmem:[#allocation2 + $0x7c] sm:$0xf]
    %v2465 = vld [vmem:[#allocation2 + $0x80] sm:$0xf]
    %v2466 = vld [vmem:[#allocation2 + $0x84] sm:$0xf]
    %v2467 = vld [vmem:[#allocation2 + $0x88] sm:$0xf]
    %v2468 = vld [vmem:[#allocation2 + $0x8c] sm:$0xf]
    %v2469 = vld [vmem:[#allocation2 + $0x90] sm:$0xf]
    %v2470 = vld [vmem:[#allocation2 + $0x94] sm:$0xf]
    %v2471 = vld [vmem:[#allocation2 + $0x98] sm:$0xf]
    %v2472 = vld [vmem:[#allocation2 + $0x9c] sm:$0xf]
    %v2473 = vld [vmem:[#allocation2 + $0xa0] sm:$0xf]
    %v2474 = vld [vmem:[#allocation2 + $0xa4] sm:$0xf]
    %v2475 = vld [vmem:[#allocation2 + $0xa8] sm:$0xf]
    %v2476 = vld [vmem:[#allocation2 + $0xac] sm:$0xf]
    %v2477 = vld [vmem:[#allocation2 + $0xb0] sm:$0xf]
    %v2478 = vld [vmem:[#allocation2 + $0xb4] sm:$0xf]
    %v2479 = vld [vmem:[#allocation2 + $0xb8] sm:$0xf]
    %v2480 = vld [vmem:[#allocation2 + $0xbc] sm:$0xf]
    %v2481 = vld [vmem:[#allocation2 + $0xc0] sm:$0xf]
    %v2482 = vld [vmem:[#allocation2 + $0xc4] sm:$0xf]
    %v2483 = vld [vmem:[#allocation2 + $0xc8] sm:$0xf]
    %v2484 = vld [vmem:[#allocation2 + $0xcc] sm:$0xf]
    %v2485 = vld [vmem:[#allocation2 + $0xd0] sm:$0xf]
    %v2486 = vld [vmem:[#allocation2 + $0xd4] sm:$0xf]
    %s2487 = scalar_lea.vmem [#allocation9], 32
    %v2488 = vld [vmem:[%s2487] sm:$0xf]
    %v2489 = vld [vmem:[%s2487 + $0x4] sm:$0xf]
    %v2490 = vld [vmem:[%s2487 + $0x8] sm:$0xf]
    %v2491 = vld [vmem:[%s2487 + $0xc] sm:$0xf]
    %v2496 = vunpack.c.l.b16 %v2488
    %v2497 = vunpack.c.l.b16 %v2489
    %v2498 = vunpack.c.l.b16 %v2490
    %v2499 = vunpack.c.l.b16 %v2491
    %v2500 = vpack.c.b16 %v2497, %v2496
    %v2501 = vpack.c.b16 %v2499, %v2498
    %2504 = vmatprep.subr.bf16.mxu0 0
    %2505 = vmatpush1.bf16.msra.mxu0 0
    %2506 = vmatprep.subr.bf16.mxu0 0
    %2507 = vmatpush1.bf16.msra.mxu0 0
    %2508 = vmatprep.subr.bf16.mxu0 0
    %2509 = vmatpush1.bf16.msra.mxu0 0
    %2510 = vmatprep.subr.bf16.mxu0 0
    %2511 = vmatpush1.bf16.msra.mxu0 0
    %2512 = vmatprep.subr.bf16.mxu0 0
    %2513 = vmatpush1.bf16.msra.mxu0 0
    %2514 = vmatprep.subr.bf16.mxu0 0
    %2515 = vmatpush1.bf16.msra.mxu0 0
    %2516 = vmatprep.subr.bf16.mxu0 0
    %2517 = vmatpush1.bf16.msra.mxu0 %v2501
    %2518 = vmatprep.subr.bf16.mxu0 0
    %2519 = vmatpush1.bf16.msra.mxu0 %v2500
    %2520 = vmatprep.subr.bf16.mxu0 0
    %2521 = vmatpush2.bf16.msra.mxu0 0
    %2522 = vmatprep.subr.bf16.mxu0 0
    %2523 = vmatpush2.bf16.msra.mxu0 0
    %2524 = vmatprep.subr.bf16.mxu0 0
    %2525 = vmatpush2.bf16.msra.mxu0 0
    %2526 = vmatprep.subr.bf16.mxu0 0
    %2527 = vmatpush2.bf16.msra.mxu0 0
    %2528 = vmatprep.subr.bf16.mxu0 0
    %2529 = vmatpush2.bf16.msra.mxu0 0
    %2530 = vmatprep.subr.bf16.mxu0 0
    %2531 = vmatpush2.bf16.msra.mxu0 0
    %2532 = vmatprep.subr.bf16.mxu0 0
    %2533 = vmatpush2.bf16.msra.mxu0 0
    %2534 = vmatprep.subr.bf16.mxu0 0
    %2535 = vmatpush2.bf16.msra.mxu0 0
    %2536 = vmatprep.mubr.bf16.mxu0 0
    %2537 = vmatmul.mubr.bf16.gmra.mxu0 %v2031
    %v2538 = vpop.f32.mrf.mxu0
    %v2539 = vadd.f32 0.0, %v2538
    %v2540 = vpop.f32.mrf.mxu0
    %v2541 = vpop.f32.mrf.mxu0
    %v2542 = vadd.f32 0.0, %v2541
    %v2543 = vpop.f32.mrf.mxu0
    %2544 = vdwg.mxu0
    %v2599 = vunpack.c.l.b16 %v2433
    %v2600 = vunpack.c.l.b16 %v2434
    %v2601 = vunpack.c.l.b16 %v2435
    %v2602 = vunpack.c.l.b16 %v2436
    %v2603 = vunpack.c.l.b16 %v2437
    %v2604 = vunpack.c.l.b16 %v2438
    %v2605 = vunpack.c.l.b16 %v2439
    %v2606 = vunpack.c.l.b16 %v2440
    %v2607 = vunpack.c.l.b16 %v2441
    %v2608 = vunpack.c.l.b16 %v2442
    %v2609 = vunpack.c.l.b16 %v2443
    %v2610 = vunpack.c.l.b16 %v2444
    %v2611 = vunpack.c.l.b16 %v2445
    %v2612 = vunpack.c.l.b16 %v2446
    %v2613 = vunpack.c.l.b16 %v2447
    %v2614 = vunpack.c.l.b16 %v2448
    %v2615 = vunpack.c.l.b16 %v2449
    %v2616 = vunpack.c.l.b16 %v2450
    %v2617 = vunpack.c.l.b16 %v2451
    %v2618 = vunpack.c.l.b16 %v2452
    %v2619 = vunpack.c.l.b16 %v2453
    %v2620 = vunpack.c.l.b16 %v2454
    %v2621 = vunpack.c.l.b16 %v2455
    %v2622 = vunpack.c.l.b16 %v2456
    %v2623 = vunpack.c.l.b16 %v2457
    %v2624 = vunpack.c.l.b16 %v2458
    %v2625 = vunpack.c.l.b16 %v2459
    %v2626 = vunpack.c.l.b16 %v2460
    %v2627 = vunpack.c.l.b16 %v2461
    %v2628 = vunpack.c.l.b16 %v2462
    %v2629 = vunpack.c.l.b16 %v2463
    %v2630 = vunpack.c.l.b16 %v2464
    %v2631 = vunpack.c.l.b16 %v2465
    %v2632 = vunpack.c.l.b16 %v2466
    %v2633 = vunpack.c.l.b16 %v2467
    %v2634 = vunpack.c.l.b16 %v2468
    %v2635 = vunpack.c.l.b16 %v2469
    %v2636 = vunpack.c.l.b16 %v2470
    %v2637 = vunpack.c.l.b16 %v2471
    %v2638 = vunpack.c.l.b16 %v2472
    %v2639 = vunpack.c.l.b16 %v2473
    %v2640 = vunpack.c.l.b16 %v2474
    %v2641 = vunpack.c.l.b16 %v2475
    %v2642 = vunpack.c.l.b16 %v2476
    %v2643 = vunpack.c.l.b16 %v2477
    %v2644 = vunpack.c.l.b16 %v2478
    %v2645 = vunpack.c.l.b16 %v2479
    %v2646 = vunpack.c.l.b16 %v2480
    %v2647 = vunpack.c.l.b16 %v2481
    %v2648 = vunpack.c.l.b16 %v2482
    %v2649 = vunpack.c.l.b16 %v2483
    %v2650 = vunpack.c.l.b16 %v2484
    %v2651 = vunpack.c.l.b16 %v2485
    %v2652 = vunpack.c.l.b16 %v2486
    %v2653 = vpack.c.b16 %v2600, %v2599
    %v2654 = vpack.c.b16 %v2602, %v2601
    %v2655 = vpack.c.b16 %v2604, %v2603
    %v2656 = vpack.c.b16 %v2606, %v2605
    %v2657 = vpack.c.b16 %v2608, %v2607
    %v2658 = vpack.c.b16 %v2610, %v2609
    %v2659 = vpack.c.b16 %v2612, %v2611
    %v2660 = vpack.c.b16 %v2614, %v2613
    %v2661 = vpack.c.b16 %v2616, %v2615
    %v2662 = vpack.c.b16 %v2618, %v2617
    %v2663 = vpack.c.b16 %v2620, %v2619
    %v2664 = vpack.c.b16 %v2622, %v2621
    %v2665 = vpack.c.b16 %v2624, %v2623
    %v2666 = vpack.c.b16 %v2626, %v2625
    %v2667 = vpack.c.b16 %v2628, %v2627
    %v2668 = vpack.c.b16 %v2630, %v2629
    %v2669 = vpack.c.b16 %v2632, %v2631
    %v2670 = vpack.c.b16 %v2634, %v2633
    %v2671 = vpack.c.b16 %v2636, %v2635
    %v2672 = vpack.c.b16 %v2638, %v2637
    %v2673 = vpack.c.b16 %v2640, %v2639
    %v2674 = vpack.c.b16 %v2642, %v2641
    %v2675 = vpack.c.b16 %v2644, %v2643
    %v2676 = vpack.c.b16 %v2646, %v2645
    %v2677 = vpack.c.b16 %v2648, %v2647
    %v2678 = vpack.c.b16 %v2650, %v2649
    %v2679 = vpack.c.b16 %v2652, %v2651
    %2707 = vmatprep.subr.bf16.mxu0 0
    %2708 = vmatpush1.bf16.msra.mxu0 %v2660
    %2709 = vmatprep.subr.bf16.mxu0 0
    %2710 = vmatpush1.bf16.msra.mxu0 %v2659
    %2711 = vmatprep.subr.bf16.mxu0 0
    %2712 = vmatpush1.bf16.msra.mxu0 %v2658
    %2713 = vmatprep.subr.bf16.mxu0 0
    %2714 = vmatpush1.bf16.msra.mxu0 %v2657
    %2715 = vmatprep.subr.bf16.mxu0 0
    %2716 = vmatpush1.bf16.msra.mxu0 %v2656
    %2717 = vmatprep.subr.bf16.mxu0 0
    %2718 = vmatpush1.bf16.msra.mxu0 %v2655
    %2719 = vmatprep.subr.bf16.mxu0 0
    %2720 = vmatpush1.bf16.msra.mxu0 %v2654
    %2721 = vmatprep.subr.bf16.mxu0 0
    %2722 = vmatpush1.bf16.msra.mxu0 %v2653
    %2723 = vmatprep.subr.bf16.mxu0 0
    %2724 = vmatpush2.bf16.msra.mxu0 %v2668
    %2725 = vmatprep.subr.bf16.mxu0 0
    %2726 = vmatpush2.bf16.msra.mxu0 %v2667
    %2727 = vmatprep.subr.bf16.mxu0 0
    %2728 = vmatpush2.bf16.msra.mxu0 %v2666
    %2729 = vmatprep.subr.bf16.mxu0 0
    %2730 = vmatpush2.bf16.msra.mxu0 %v2665
    %2731 = vmatprep.subr.bf16.mxu0 0
    %2732 = vmatpush2.bf16.msra.mxu0 %v2664
    %2733 = vmatprep.subr.bf16.mxu0 0
    %2734 = vmatpush2.bf16.msra.mxu0 %v2663
    %2735 = vmatprep.subr.bf16.mxu0 0
    %2736 = vmatpush2.bf16.msra.mxu0 %v2662
    %2737 = vmatprep.subr.bf16.mxu0 0
    %2738 = vmatpush2.bf16.msra.mxu0 %v2661
    %2739 = vmatprep.mubr.bf16.mxu0 %v707
    %2740 = vmatmul.mubr.bf16.gmra.mxu0 %v706
    %v2741 = vpop.f32.mrf.mxu0
    %v2742 = vadd.f32 %v2539, %v2741
    %v2743 = vpop.f32.mrf.mxu0
    %v2744 = vpop.f32.mrf.mxu0
    %v2745 = vadd.f32 %v2542, %v2744
    %v2746 = vpop.f32.mrf.mxu0
    %2747 = vdwg.mxu0
    %2748 = vmatprep.subr.bf16.mxu0 0
    %2749 = vmatpush1.bf16.msra.mxu0 %v2676
    %2750 = vmatprep.subr.bf16.mxu0 0
    %2751 = vmatpush1.bf16.msra.mxu0 %v2675
    %2752 = vmatprep.subr.bf16.mxu0 0
    %2753 = vmatpush1.bf16.msra.mxu0 %v2674
    %2754 = vmatprep.subr.bf16.mxu0 0
    %2755 = vmatpush1.bf16.msra.mxu0 %v2673
    %2756 = vmatprep.subr.bf16.mxu0 0
    %2757 = vmatpush1.bf16.msra.mxu0 %v2672
    %2758 = vmatprep.subr.bf16.mxu0 0
    %2759 = vmatpush1.bf16.msra.mxu0 %v2671
    %2760 = vmatprep.subr.bf16.mxu0 0
    %2761 = vmatpush1.bf16.msra.mxu0 %v2670
    %2762 = vmatprep.subr.bf16.mxu0 0
    %2763 = vmatpush1.bf16.msra.mxu0 %v2669
    %2764 = vmatprep.subr.bf16.mxu0 0
    %2765 = vmatpush2.bf16.msra.mxu0 0
    %2766 = vmatprep.subr.bf16.mxu0 0
    %2767 = vmatpush2.bf16.msra.mxu0 0
    %2768 = vmatprep.subr.bf16.mxu0 0
    %2769 = vmatpush2.bf16.msra.mxu0 0
    %2770 = vmatprep.subr.bf16.mxu0 0
    %2771 = vmatpush2.bf16.msra.mxu0 0
    %2772 = vmatprep.subr.bf16.mxu0 0
    %2773 = vmatpush2.bf16.msra.mxu0 0
    %2774 = vmatprep.subr.bf16.mxu0 0
    %2775 = vmatpush2.bf16.msra.mxu0 %v2679
    %2776 = vmatprep.subr.bf16.mxu0 0
    %2777 = vmatpush2.bf16.msra.mxu0 %v2678
    %2778 = vmatprep.subr.bf16.mxu0 0
    %2779 = vmatpush2.bf16.msra.mxu0 %v2677
    %2780 = vmatprep.mubr.bf16.mxu0 %v877
    %2781 = vmatmul.mubr.bf16.gmra.mxu0 %v708
    %v2782 = vpop.f32.mrf.mxu0
    %v2783 = vadd.f32 %v2742, %v2782
    %v2784 = vpop.f32.mrf.mxu0
    %v2785 = vpop.f32.mrf.mxu0
    %v2786 = vadd.f32 %v2745, %v2785
    %v2787 = vpop.f32.mrf.mxu0
    %2788 = vdwg.mxu0
    %s2789 = scalar_lea.vmem %s4, 2
    %v2790 = vld [vmem:[%s2789] sm:$0x1]
    %v2792 = vlaneseq
    %v2793 = vshrl.u32 %v2792, 7
    %v2794 = vsub.s32 0, %v2793
    %v2795 = vrot.slane %v2790, %v2794
    %v2797 = vadd.f32 %v2783, %v2795
    %v2798 = vadd.f32 %v2786, %v2795
    %v2799 = vadd.f32 %v2797, %v1938
    %v2800 = vadd.f32 %v2798, %v1939
    %v2801 = vsel %vm178, %v2799, 0.0
    %v2802 = vsel %vm178, %v2800, 0.0
    %v2803 = vadd.f32 %v2801, %v2802
    %v2804 = vrot.slane %v2803, 4
    %v2805 = vadd.f32 %v2803, %v2804
    %v2806 = vrot.slane %v2805, 2
    %v2807 = vadd.f32 %v2805, %v2806
    %v2808 = vrot.slane %v2807, 1
    %v2809 = vadd.f32 %v2807, %v2808
    %v2810 = vmul.f32 %v2809, %v987
    %v2811 = vsub.f32 %v2799, %v2810
    %v2812 = vsub.f32 %v2800, %v2810
    %v2813 = vmul.f32 %v2811, %v2811
    %v2814 = vmul.f32 %v2812, %v2812
    %v2815 = vsel %vm178, %v2813, 0.0
    %v2816 = vsel %vm178, %v2814, 0.0
    %v2817 = vadd.f32 %v2815, %v2816
    %v2818 = vrot.slane %v2817, 4
    %v2819 = vadd.f32 %v2817, %v2818
    %v2820 = vrot.slane %v2819, 2
    %v2821 = vadd.f32 %v2819, %v2820
    %v2822 = vrot.slane %v2821, 1
    %v2823 = vadd.f32 %v2821, %v2822
    %v2824 = vmul.f32 %v2823, %v987
    %s2825 = scalar_lea.vmem %s5, 2
    %v2826 = vld [vmem:[%s2825] sm:$0x1]
    %v2828 = vlaneseq
    %v2829 = vshrl.u32 %v2828, 7
    %v2830 = vsub.s32 0, %v2829
    %v2831 = vrot.slane %v2826, %v2830
    %v2833 = vmul.f32 %v2831, %v2811
    %v2834 = vmul.f32 %v2831, %v2812
    %v2835 = vadd.f32 %v2824, 1e-05
    %v2836 = vrsqrt.pop %v2835
    %v2837 = vmul.f32 %v2833, %v2836
    %v2838 = vmul.f32 %v2834, %v2836
    %s2839 = scalar_lea.vmem %s6, 2
    %v2840 = vld [vmem:[%s2839] sm:$0x1]
    %v2842 = vlaneseq
    %v2843 = vshrl.u32 %v2842, 7
    %v2844 = vsub.s32 0, %v2843
    %v2845 = vrot.slane %v2840, %v2844
    %v2847 = vadd.f32 %v2837, %v2845
    %v2848 = vadd.f32 %v2838, %v2845
    %2849 = vst.msk [vmem:[#allocation11] sm:$0xff] %vm178, %v2847
    %2850 = vst.msk [vmem:[#allocation11 + $0x8] sm:$0xff] %vm178, %v2848
    // Predicated region
    $region46: #{tpu_custom_call.1} parent=1 // pred_check
      _
    $region47: #{tpu_custom_call.1} parent=1 // pred_check_branch
      %2852 = sbr.rel (0) target = $region49
    $region48: #{tpu_custom_call.1} parent=1 // pred_region
      %s2854 = ssub.s32 256, 256
      %2855 = vsyncadd [#allocation5], %s2854
      %s2856 = sshll.u32 [#allocation11], 4
      %s2857 = int_to_ptr.vmem [resolvable:$true] %s2856
      %2862 = dma.vmem_to_hbm [thread:$0]  %s2857, 256, %s7, [#allocation5], 128, 128, 8
    $region49: #{tpu_custom_call.1} parent=1 // pred_fallthru
      _
    // Predicated region
    $region50: #{tpu_custom_call.1} parent=1 // pred_check
      _
    $region51: #{tpu_custom_call.1} parent=1 // pred_check_branch
      %2864 = sbr.rel (0) target = $region53
    $region52: #{tpu_custom_call.1} parent=1 // pred_region
      %2865 = dma.done [#allocation5], 256
    $region53: #{tpu_custom_call.1} parent=1 // pred_fallthru
      _
    %2866 = vsyncpa [#allocation4], 1
    %2867 = vsyncpa [#allocation7], 1
    %2868 = vsyncpa [#allocation10], 1
    %2869 = vsyncpa [#allocation5], 1

</llo_original>
